<compile_context>
chip_gen: v5e
topology: v5e:2x2
jax: 0.10.0
libtpu: 0.0.40
codegen_flags: <defaults>
</compile_context>

<pallas_src>
import functools

import jax
import jax.numpy as jnp
from jax.experimental import pallas as pl
from jax.experimental.pallas import tpu as pltpu


def _fused_kernel(x_ref, w_ref, gamma_ref, beta_ref, o_ref, acc_ref, *, eps):
    # x_ref:      [1, kc, M]   bf16  (Cin chunk k of X)
    # w_ref:      [1, cb, kc]  bf16  (Cin chunk k of this Cout block's weights)
    # gamma/beta: [cb, 1]      f32
    # o_ref:      [cb, M]      f32
    # acc_ref:    [cb, M]      f32 VMEM accumulator, resident across the Cin axis
    k = pl.program_id(1)

    @pl.when(k == 0)
    def _():
        acc_ref[...] = jnp.zeros_like(acc_ref)

    # ReLU on the input chunk (relu99) -- sign-select, cheap in any dtype.
    x = jnp.maximum(x_ref[0], 0)
    # 1x1 conv == MXU matmul (conv2d99, bias=False): bf16 operands, f32 accumulation.
    acc_ref[...] += jnp.dot(w_ref[0], x, preferred_element_type=jnp.float32)

    @pl.when(k == pl.num_programs(1) - 1)
    def _():
        # BatchNorm2d training-mode forward: batch stats over N*H*W (lane axis),
        # one-pass mean/var, fused per-channel scale/shift, then final ReLU
        # (relu100). Entire epilogue stays in f32.
        y = acc_ref[...]
        m = jnp.float32(y.shape[1])
        s1 = jnp.sum(y, axis=1, keepdims=True)           # [cb, 1]
        s2 = jnp.sum(y * y, axis=1, keepdims=True)       # [cb, 1]
        mean = s1 / m
        var = s2 / m - mean * mean                       # biased variance
        scale = gamma_ref[...] * jax.lax.rsqrt(var + eps)
        shift = beta_ref[...] - mean * scale
        o_ref[...] = jnp.maximum(y * scale + shift, 0.0).astype(o_ref.dtype)


def _num_cout_blocks(cout):
    """2 Cout blocks on multi-TensorCore chips (v7x), else 1."""
    try:
        kind = jax.devices()[0].device_kind.lower()
    except Exception:
        return 1
    if "v7" in kind and cout % 2 == 0 and (cout // 2) % 16 == 0:
        return 2
    return 1


def _num_cin_chunks(cin):
    """Small Cin chunk count for pipeline overlap; chunk must be a multiple of 16
    (bf16 sublane packing). Falls back to a single chunk."""
    for nk in (4, 3, 2):
        if cin % nk == 0 and (cin // nk) % 16 == 0:
            return nk
    return 1


def fused_relu_conv1x1_bn_relu(x_nchw, w_oihw, gamma, beta, eps=1e-5):
    """x_nchw: [N, Cin, H, W] f32, w_oihw: [Cout, Cin, 1, 1] f32."""
    N, Cin, H, W = x_nchw.shape
    Cout = w_oihw.shape[0]
    M = N * H * W

    nblk = _num_cout_blocks(Cout)
    cb = Cout // nblk
    nk = _num_cin_chunks(Cin)
    kc = Cin // nk

    # X[Cin, M] -> bf16 -> [nk, kc, M]. For N=1 the reshape is free; the bf16 cast
    # halves the kernel's dominant input DMA (in a real network the producer would
    # already emit bf16 / the cast fuses upstream).
    if N == 1:
        xT = x_nchw.reshape(Cin, M)
    else:
        xT = jnp.transpose(x_nchw, (1, 0, 2, 3)).reshape(Cin, M)
    x3 = xT.astype(jnp.bfloat16).reshape(nk, kc, M)

    # W relaid out as [nk, Cout, kc] bf16 so each (cb, kc) block's last dim equals
    # the array's last dim (lane-alignment-legal BlockSpec). One-time relayout;
    # constant-foldable for fixed weights.
    w3 = jnp.transpose(w_oihw.reshape(Cout, nk, kc).astype(jnp.bfloat16), (1, 0, 2))

    gamma2d = gamma.reshape(Cout, 1).astype(jnp.float32)
    beta2d = beta.reshape(Cout, 1).astype(jnp.float32)

    cost = pl.CostEstimate(
        flops=2 * M * Cin * Cout + 8 * M * Cout,
        transcendentals=Cout,  # rsqrt per channel
        bytes_accessed=(2 * (nblk * Cin * M + Cout * Cin)   # bf16 X (per Cout block) + bf16 W
                        + 4 * (2 * Cout + Cout * M)),        # f32 gamma/beta + output
    )

    outT = pl.pallas_call(
        functools.partial(_fused_kernel, eps=eps),
        out_shape=jax.ShapeDtypeStruct((Cout, M), jnp.float32),
        grid=(nblk, nk),
        in_specs=[
            pl.BlockSpec((1, kc, M), lambda j, k: (k, 0, 0)),    # X chunk
            pl.BlockSpec((1, cb, kc), lambda j, k: (k, j, 0)),   # W chunk
            pl.BlockSpec((cb, 1), lambda j, k: (j, 0)),          # gamma
            pl.BlockSpec((cb, 1), lambda j, k: (j, 0)),          # beta
        ],
        out_specs=pl.BlockSpec((cb, M), lambda j, k: (j, 0)),
        scratch_shapes=[pltpu.VMEM((cb, M), jnp.float32)],
        compiler_params=pltpu.CompilerParams(
            dimension_semantics=("parallel", "arbitrary")),
        cost_estimate=cost,
    )(x3, w3, gamma2d, beta2d)

    # [Cout, M] -> NCHW. Free reshape for N=1.
    if N == 1:
        return outT.reshape(1, Cout, H, W)
    return jnp.transpose(outT.reshape(Cout, N, H, W), (1, 0, 2, 3))


if __name__ == "__main__":
    key = jax.random.PRNGKey(0)
    k_x, k_w = jax.random.split(key)

    N, Cin, H, W = 1, 1824, 14, 14   # shapes implied by the module
    Cout = 192

    x = jax.random.normal(k_x, (N, Cin, H, W), dtype=jnp.float32)
    w = jax.random.normal(k_w, (Cout, Cin, 1, 1), dtype=jnp.float32) * (1.0 / jnp.sqrt(Cin))
    gamma = jnp.ones((Cout,), dtype=jnp.float32)
    beta = jnp.zeros((Cout,), dtype=jnp.float32)

    out = fused_relu_conv1x1_bn_relu(x, w, gamma, beta)
    jax.block_until_ready(out)
    assert out.shape == (N, Cout, H, W)

    def bn_relu_ref(y):
        mean = jnp.mean(y, axis=(0, 2, 3), keepdims=True)
        var = jnp.mean((y - mean) ** 2, axis=(0, 2, 3), keepdims=True)
        yn = (y - mean) * jax.lax.rsqrt(var + 1e-5)
        return jnp.maximum(
            yn * gamma.reshape(1, Cout, 1, 1) + beta.reshape(1, Cout, 1, 1), 0.0)

    # Reference 1: same bf16 operand rounding as the kernel (checks fused
    # matmul + BN + ReLU logic; both accumulate in f32).
    xb = x.astype(jnp.bfloat16).astype(jnp.float32)
    wb = w.reshape(Cout, Cin).astype(jnp.bfloat16).astype(jnp.float32)
    y_b = jnp.einsum("nchw,oc->nohw", jnp.maximum(xb, 0.0), wb, precision="highest")
    ref_b = bn_relu_ref(y_b)
    assert jnp.allclose(out, ref_b, atol=2e-3, rtol=2e-3)

    # Reference 2: true f32 module semantics (looser tolerance: bf16 MXU operands
    # vs. the f32 torch reference with K=1824 reduction).
    y_f = jnp.einsum("nchw,oc->nohw", jnp.maximum(x, 0.0), w.reshape(Cout, Cin),
                     precision="highest")
    ref_f = bn_relu_ref(y_f)
    assert jnp.allclose(out, ref_f, atol=3e-2, rtol=3e-2)

    print("KERNEL_OK")
</pallas_src>

<mosaic_0001>
module attributes {stable_mosaic.version = 11 : i64} {
  func.func @_fused_kernel(%arg0: i32, %arg1: i32, %arg2: memref<1x608x196xbf16, #tpu.memory_space<vmem>>, %arg3: memref<1x192x608xbf16, #tpu.memory_space<vmem>>, %arg4: memref<192x1xf32, #tpu.memory_space<vmem>>, %arg5: memref<192x1xf32, #tpu.memory_space<vmem>>, %arg6: memref<192x196xf32, #tpu.memory_space<vmem>>, %arg7: memref<192x196xf32, #tpu.memory_space<vmem>>) attributes {dimension_semantics = [#tpu.dimension_semantics<parallel>, #tpu.dimension_semantics<arbitrary>], iteration_bounds = array<i64: 1, 3>, scalar_prefetch = 0 : i64, scratch_operands = 1 : i64, tpu.core_type = #tpu.core_type<tc>, window_params = [{transform_indices = @transform_0, window_bounds = array<i64: 1, 608, 196>}, {transform_indices = @transform_1, window_bounds = array<i64: 1, 192, 608>}, {transform_indices = @transform_2, window_bounds = array<i64: 192, 1>}, {transform_indices = @transform_3, window_bounds = array<i64: 192, 1>}, {transform_indices = @transform_4, window_bounds = array<i64: 192, 196>}]} {
    %c0_i32 = arith.constant 0 : i32
    %0 = arith.cmpi eq, %arg1, %c0_i32 : i32
    %1 = arith.extui %0 : i1 to i32
    %c0_i32_0 = arith.constant 0 : i32
    %2 = arith.cmpi ne, %1, %c0_i32_0 : i32
    scf.if %2 {
      %cst_12 = arith.constant 0.000000e+00 : f32
      %16 = vector.broadcast %cst_12 : f32 to vector<192x196xf32>
      %c0_13 = arith.constant 0 : index
      %c0_14 = arith.constant 0 : index
      %17 = vector.load %arg7[%c0_13, %c0_14] : memref<192x196xf32, #tpu.memory_space<vmem>>, vector<192x196xf32>
      tpu.vector_store %arg7[%c0_13, %c0_14], %16 {strides = array<i32>} : memref<192x196xf32, #tpu.memory_space<vmem>>, vector<192x196xf32>,
    } else {
    }
    %c0 = arith.constant 0 : index
    %c0_1 = arith.constant 0 : index
    %c0_2 = arith.constant 0 : index
    %3 = vector.load %arg2[%c0, %c0_1, %c0_2] : memref<1x608x196xbf16, #tpu.memory_space<vmem>>, vector<1x608x196xbf16>
    %4 = vector.shape_cast %3 : vector<1x608x196xbf16> to vector<608x196xbf16>
    %cst = arith.constant 0.000000e+00 : bf16
    %5 = vector.broadcast %cst : bf16 to vector<608x196xbf16>
    %6 = arith.maximumf %4, %5 : vector<608x196xbf16>
    %c0_3 = arith.constant 0 : index
    %c0_4 = arith.constant 0 : index
    %7 = vector.load %arg7[%c0_3, %c0_4] : memref<192x196xf32, #tpu.memory_space<vmem>>, vector<192x196xf32>
    %c0_5 = arith.constant 0 : index
    %c0_6 = arith.constant 0 : index
    %c0_7 = arith.constant 0 : index
    %8 = vector.load %arg3[%c0_5, %c0_6, %c0_7] : memref<1x192x608xbf16, #tpu.memory_space<vmem>>, vector<1x192x608xbf16>
    %9 = vector.shape_cast %8 : vector<1x192x608xbf16> to vector<192x608xbf16>
    %cst_8 = arith.constant dense<0.000000e+00> : vector<192x196xf32>
    %10 = tpu.matmul %9, %6, %cst_8 {dimension_numbers = #tpu.dot_dimension_numbers<[1], [0], [0], [1], [0, 0, 1, 1], [], []>} : vector<192x608xbf16>, vector<608x196xbf16>, vector<192x196xf32> -> vector<192x196xf32>
    %11 = arith.addf %7, %10 : vector<192x196xf32>
    %c0_9 = arith.constant 0 : index
    %c0_10 = arith.constant 0 : index
    %12 = vector.load %arg7[%c0_9, %c0_10] : memref<192x196xf32, #tpu.memory_space<vmem>>, vector<192x196xf32>
    tpu.vector_store %arg7[%c0_9, %c0_10], %11 {strides = array<i32>} : memref<192x196xf32, #tpu.memory_space<vmem>>, vector<192x196xf32>,
    %c2_i32 = arith.constant 2 : i32
    %13 = arith.cmpi eq, %arg1, %c2_i32 : i32
    %14 = arith.extui %13 : i1 to i32
    %c0_i32_11 = arith.constant 0 : i32
    %15 = arith.cmpi ne, %14, %c0_i32_11 : i32
    scf.if %15 {
      %c0_12 = arith.constant 0 : index
      %c0_13 = arith.constant 0 : index
      %16 = vector.load %arg7[%c0_12, %c0_13] : memref<192x196xf32, #tpu.memory_space<vmem>>, vector<192x196xf32>
      %cst_14 = arith.constant dense<0.000000e+00> : vector<192xf32>
      %17 = vector.multi_reduction <add>, %16, %cst_14 [1] : vector<192x196xf32> to vector<192xf32>
      %18 = vector.shape_cast %17 : vector<192xf32> to vector<192x1xf32>
      %19 = arith.mulf %16, %16 : vector<192x196xf32>
      %cst_15 = arith.constant dense<0.000000e+00> : vector<192xf32>
      %20 = vector.multi_reduction <add>, %19, %cst_15 [1] : vector<192x196xf32> to vector<192xf32>
      %21 = vector.shape_cast %20 : vector<192xf32> to vector<192x1xf32>
      %cst_16 = arith.constant 1.960000e+02 : f32
      %22 = vector.broadcast %cst_16 : f32 to vector<192x1xf32>
      %23 = arith.divf %18, %22 : vector<192x1xf32>
      %cst_17 = arith.constant 1.960000e+02 : f32
      %24 = vector.broadcast %cst_17 : f32 to vector<192x1xf32>
      %25 = arith.divf %21, %24 : vector<192x1xf32>
      %26 = arith.mulf %23, %23 : vector<192x1xf32>
      %27 = arith.subf %25, %26 : vector<192x1xf32>
      %c0_18 = arith.constant 0 : index
      %c0_19 = arith.constant 0 : index
      %28 = vector.load %arg4[%c0_18, %c0_19] : memref<192x1xf32, #tpu.memory_space<vmem>>, vector<192x1xf32>
      %cst_20 = arith.constant 9.99999974E-6 : f32
      %29 = vector.broadcast %cst_20 : f32 to vector<192x1xf32>
      %30 = arith.addf %27, %29 : vector<192x1xf32>
      %31 = math.rsqrt %30 : vector<192x1xf32>
      %32 = arith.mulf %28, %31 : vector<192x1xf32>
      %c0_21 = arith.constant 0 : index
      %c0_22 = arith.constant 0 : index
      %33 = vector.load %arg5[%c0_21, %c0_22] : memref<192x1xf32, #tpu.memory_space<vmem>>, vector<192x1xf32>
      %34 = arith.mulf %23, %32 : vector<192x1xf32>
      %35 = arith.subf %33, %34 : vector<192x1xf32>
      %36 = vector.broadcast %32 : vector<192x1xf32> to vector<192x196xf32>
      %37 = arith.mulf %16, %36 : vector<192x196xf32>
      %38 = vector.broadcast %35 : vector<192x1xf32> to vector<192x196xf32>
      %39 = arith.addf %37, %38 : vector<192x196xf32>
      %cst_23 = arith.constant 0.000000e+00 : f32
      %40 = vector.broadcast %cst_23 : f32 to vector<192x196xf32>
      %41 = arith.maximumf %39, %40 : vector<192x196xf32>
      %c0_24 = arith.constant 0 : index
      %c0_25 = arith.constant 0 : index
      %42 = vector.load %arg6[%c0_24, %c0_25] : memref<192x196xf32, #tpu.memory_space<vmem>>, vector<192x196xf32>
      tpu.vector_store %arg6[%c0_24, %c0_25], %41 {strides = array<i32>} : memref<192x196xf32, #tpu.memory_space<vmem>>, vector<192x196xf32>,
    } else {
    }
    return
  }
  func.func @transform_0(%arg0: i32, %arg1: i32) -> (i32, i32, i32) {
    %c0_i32 = arith.constant 0 : i32
    %c0_i32_0 = arith.constant 0 : i32
    %c0_i32_1 = arith.constant 0 : i32
    return %arg1, %c0_i32, %c0_i32_0 : i32, i32, i32
  }
  func.func @transform_1(%arg0: i32, %arg1: i32) -> (i32, i32, i32) {
    %c0_i32 = arith.constant 0 : i32
    %c0_i32_0 = arith.constant 0 : i32
    return %arg1, %arg0, %c0_i32 : i32, i32, i32
  }
  func.func @transform_2(%arg0: i32, %arg1: i32) -> (i32, i32) {
    %c0_i32 = arith.constant 0 : i32
    %c0_i32_0 = arith.constant 0 : i32
    return %arg0, %c0_i32 : i32, i32
  }
  func.func @transform_3(%arg0: i32, %arg1: i32) -> (i32, i32) {
    %c0_i32 = arith.constant 0 : i32
    %c0_i32_0 = arith.constant 0 : i32
    return %arg0, %c0_i32 : i32, i32
  }
  func.func @transform_4(%arg0: i32, %arg1: i32) -> (i32, i32) {
    %c0_i32 = arith.constant 0 : i32
    %c0_i32_0 = arith.constant 0 : i32
    return %arg0, %c0_i32 : i32, i32
  }
}

</mosaic_0001>

<llo_original>
// kernel: tpu_custom_call.1
$region0: #{tpu_custom_call.1}
  #allocation0 [shape = 'u32[]', space=smem, size = 0x4, offset = 0x4, fixed_abs, tag = 'smem constant byte address 0x4 - core index']
  #allocation1 [shape = 'u32[72,128]{1,0:T(1,128)}', space=vmem, size = 0x9000, scoped, tag = 'internal scratch']
  #allocation2 [shape = 'f32[192,196]{1,0:T(8,128)}', space=vmem, size = 0x30000, scoped, tag = 'scratch operand']
  %s0 = inlined_call_operand.vmem [shape: bf16[3,608,196], index: 0, kind: input, shape index: {}]
  %s1 = inlined_call_operand.vmem [shape: bf16[3,192,608], index: 1, kind: input, shape index: {}]
  %s2 = inlined_call_operand.vmem [shape: f32[192,1], index: 2, kind: input, shape index: {}]
  %s3 = inlined_call_operand.vmem [shape: f32[192,1], index: 3, kind: input, shape index: {}]
  %s4 = inlined_call_operand.hbm [shape: f32[192,196], index: 4, kind: output, shape index: {}]
  %s5 = sld [smem:[#allocation0]]
  $region57: #{tpu_custom_call.1} parent=0
    _
  %s7 = ssub.s32 1, %s5
  %s8 = scalar_select 0, %s7, %s5
  $region1: #{tpu_custom_call.1} parent=0
    #allocation3 [shape = 'u8[196608]{0}', space=vmem, size = 0x30000, scoped, tag = 'output window, operand 0, single buffered']
    #allocation4 [shape = 's32[2]{0}', space=sflag, size = 0x8, scoped, tag = 'scoped memory for tpu_custom_call.1']
    %9 = vsyncpa [#allocation4], 0
    loop: start=0, step=1, limit=5
    $region2: #{tpu_custom_call.1} parent=1 // loop_pre_header
      _
    $region3: #{tpu_custom_call.1} parent=1 // loop_header
      %s11 = sphi 0, %s15
      %p12 = scmp.ge.s32.totalorder %s11, 5
      %s18 = sphi 0, %s30
      %s19 = sphi 0, %s26
      %s20 = sphi 0, %s18
      %s21 = sphi 0, %s19
      %s22 = sphi 0, %s20
      %s23 = sphi 0, %s21
      %s33 = sphi 0, %s35
      %s36 = sphi 0, %s33
      %s37 = sphi 0, %s36
      %s53 = sphi 0, %s37
      %s61 = sphi 0, %s63
      %s64 = sphi 0, %s61
      %s65 = sphi 0, %s64
      %s81 = sphi 0, %s65
      %s87 = sphi 0, %s89
      %s90 = sphi 0, %s87
      %s91 = sphi 0, %s90
      %s107 = sphi 0, %s91
      %s113 = sphi 0, %s115
      %s116 = sphi 0, %s113
      %s117 = sphi 0, %s116
      %s133 = sphi 0, %s117
      %s139 = sphi 0, %s141
      %s142 = sphi 0, %s139
      %s143 = sphi 0, %s142
      %s159 = sphi 0, %s143
    $region4: #{tpu_custom_call.1} parent=1 // loop_header_branch
      %14 = sbr.rel (%p12) target = $region8
    $region5: #{tpu_custom_call.1} parent=1 // loop_body
      %s16 = ssub.s32 %s11, 1
      %s17 = ssub.s32 %s11, 2
      %s24 = sadd.s32 1, %s19
      %p25 = scmp.ge.s32.totalorder %s24, 3
      %s26 = scalar_select %p25, 0, %s24
      %s27 = sadd.s32 1, %s18
      %s28 = scalar_select %p25, %s27, %s18
      %p29 = scmp.ge.s32.totalorder %s28, 1
      %s30 = scalar_select %p29, 0, %s28
      %s31 = ssub.s32 %s19, %s26
      %p32 = scmp.eq.s32.totalorder %s31, 0
      %s34 = sadd.s32 %s33, 1
      %s35 = scalar_select %p32, %s33, %s34
      %p38 = pneg %p32
      %p39 = scmp.eq.s32.totalorder %s11, 2
      %p40 = por %p38, %p39
      %p41 = scmp.ne.s32.totalorder %s33, %s36
      %p42 = scmp.eq.s32.totalorder %s11, 0
      %p43 = por %p41, %p42
      %p44 = scmp.ne.s32.totalorder %s33, %s36
      %p45 = scmp.eq.s32.totalorder %s16, 2
      %p46 = por %p44, %p45
      %p47 = scmp.ne.s32.totalorder %s36, %s37
      %p48 = scmp.eq.s32.totalorder %s16, 0
      %p49 = por %p47, %p48
      %p50 = scmp.ne.s32.totalorder %s36, %s37
      %p51 = scmp.eq.s32.totalorder %s17, 2
      %p52 = por %p50, %p51
      %p54 = scmp.ne.s32.totalorder %s37, %s53
      %p55 = scmp.eq.s32.totalorder %s17, 0
      %p56 = por %p54, %p55
      %s57 = ssub.s32 %s19, %s26
      %s58 = ssub.s32 %s18, %s30
      %s59 = sor.u32 %s57, %s58
      %p60 = scmp.eq.s32.totalorder %s59, 0
      %s62 = sadd.s32 %s61, 1
      %s63 = scalar_select %p60, %s61, %s62
      %p66 = pneg %p60
      %p67 = scmp.eq.s32.totalorder %s11, 2
      %p68 = por %p66, %p67
      %p69 = scmp.ne.s32.totalorder %s61, %s64
      %p70 = scmp.eq.s32.totalorder %s11, 0
      %p71 = por %p69, %p70
      %p72 = scmp.ne.s32.totalorder %s61, %s64
      %p73 = scmp.eq.s32.totalorder %s16, 2
      %p74 = por %p72, %p73
      %p75 = scmp.ne.s32.totalorder %s64, %s65
      %p76 = scmp.eq.s32.totalorder %s16, 0
      %p77 = por %p75, %p76
      %p78 = scmp.ne.s32.totalorder %s64, %s65
      %p79 = scmp.eq.s32.totalorder %s17, 2
      %p80 = por %p78, %p79
      %p82 = scmp.ne.s32.totalorder %s65, %s81
      %p83 = scmp.eq.s32.totalorder %s17, 0
      %p84 = por %p82, %p83
      %s85 = ssub.s32 %s18, %s30
      %p86 = scmp.eq.s32.totalorder %s85, 0
      %s88 = sadd.s32 %s87, 1
      %s89 = scalar_select %p86, %s87, %s88
      %p92 = pneg %p86
      %p93 = scmp.eq.s32.totalorder %s11, 2
      %p94 = por %p92, %p93
      %p95 = scmp.ne.s32.totalorder %s87, %s90
      %p96 = scmp.eq.s32.totalorder %s11, 0
      %p97 = por %p95, %p96
      %p98 = scmp.ne.s32.totalorder %s87, %s90
      %p99 = scmp.eq.s32.totalorder %s16, 2
      %p100 = por %p98, %p99
      %p101 = scmp.ne.s32.totalorder %s90, %s91
      %p102 = scmp.eq.s32.totalorder %s16, 0
      %p103 = por %p101, %p102
      %p104 = scmp.ne.s32.totalorder %s90, %s91
      %p105 = scmp.eq.s32.totalorder %s17, 2
      %p106 = por %p104, %p105
      %p108 = scmp.ne.s32.totalorder %s91, %s107
      %p109 = scmp.eq.s32.totalorder %s17, 0
      %p110 = por %p108, %p109
      %s111 = ssub.s32 %s18, %s30
      %p112 = scmp.eq.s32.totalorder %s111, 0
      %s114 = sadd.s32 %s113, 1
      %s115 = scalar_select %p112, %s113, %s114
      %p118 = pneg %p112
      %p119 = scmp.eq.s32.totalorder %s11, 2
      %p120 = por %p118, %p119
      %p121 = scmp.ne.s32.totalorder %s113, %s116
      %p122 = scmp.eq.s32.totalorder %s11, 0
      %p123 = por %p121, %p122
      %p124 = scmp.ne.s32.totalorder %s113, %s116
      %p125 = scmp.eq.s32.totalorder %s16, 2
      %p126 = por %p124, %p125
      %p127 = scmp.ne.s32.totalorder %s116, %s117
      %p128 = scmp.eq.s32.totalorder %s16, 0
      %p129 = por %p127, %p128
      %p130 = scmp.ne.s32.totalorder %s116, %s117
      %p131 = scmp.eq.s32.totalorder %s17, 2
      %p132 = por %p130, %p131
      %p134 = scmp.ne.s32.totalorder %s117, %s133
      %p135 = scmp.eq.s32.totalorder %s17, 0
      %p136 = por %p134, %p135
      %s137 = ssub.s32 %s18, %s30
      %p138 = scmp.eq.s32.totalorder %s137, 0
      %s140 = sadd.s32 %s139, 1
      %s141 = scalar_select %p138, %s139, %s140
      %p144 = pneg %p138
      %p145 = scmp.eq.s32.totalorder %s11, 2
      %p146 = por %p144, %p145
      %p147 = scmp.ne.s32.totalorder %s139, %s142
      %p148 = scmp.eq.s32.totalorder %s11, 0
      %p149 = por %p147, %p148
      %p150 = scmp.ne.s32.totalorder %s139, %s142
      %p151 = scmp.eq.s32.totalorder %s16, 2
      %p152 = por %p150, %p151
      %p153 = scmp.ne.s32.totalorder %s142, %s143
      %p154 = scmp.eq.s32.totalorder %s16, 0
      %p155 = por %p153, %p154
      %p156 = scmp.ne.s32.totalorder %s142, %s143
      %p157 = scmp.eq.s32.totalorder %s17, 2
      %p158 = por %p156, %p157
      %p160 = scmp.ne.s32.totalorder %s143, %s159
      %p161 = scmp.eq.s32.totalorder %s17, 0
      %p162 = por %p160, %p161
      %p163 = scmp.le.s32.totalorder 1, %s11
      %p164 = scmp.lt.s32.totalorder %s11, 4
      %p165 = pnand %p163, %p164
      %p166 = pneg %p165
      // Predicated region
      $region9: #{tpu_custom_call.1} parent=5 // pred_check
        _
      $region10: #{tpu_custom_call.1} parent=5 // pred_check_branch
        %168 = sbr.rel (%p165) target = $region12
      $region11: #{tpu_custom_call.1} parent=5 // pred_region
        %s169 = ssub.s32 %s11, 1
        // Predicated region
        $region13: #{tpu_custom_call.1} parent=11 // pred_check
          %p170 = pneg %p103
        $region14: #{tpu_custom_call.1} parent=11 // pred_check_branch
          %172 = sbr.rel (%p170) target = $region16
        $region15: #{tpu_custom_call.1} parent=11 // pred_region
          %s173 = smul.u32 24, %s20
          %p174 = scmp.lt.s32.totalorder %s173, 23
          %s175 = scalar_select %p174, %s173, 23
          %s176 = smul.addr %s175, 8
          %s177 = scalar_lea.vmem %s2, %s176
          %s178 = smul.u32 24, %s20
        $region16: #{tpu_custom_call.1} parent=11 // pred_fallthru
          _
        // Predicated region
        $region17: #{tpu_custom_call.1} parent=11 // pred_check
          %p179 = pneg %p129
        $region18: #{tpu_custom_call.1} parent=11 // pred_check_branch
          %181 = sbr.rel (%p179) target = $region20
        $region19: #{tpu_custom_call.1} parent=11 // pred_region
          %s182 = smul.u32 24, %s20
          %p183 = scmp.lt.s32.totalorder %s182, 23
          %s184 = scalar_select %p183, %s182, 23
          %s185 = smul.addr %s184, 8
          %s186 = scalar_lea.vmem %s3, %s185
          %s187 = smul.u32 24, %s20
        $region20: #{tpu_custom_call.1} parent=11 // pred_fallthru
          _
      $region12: #{tpu_custom_call.1} parent=5 // pred_fallthru
        _
      %p188 = scmp.lt.s32.totalorder %s11, 3
      // Predicated region
      $region21: #{tpu_custom_call.1} parent=5 // pred_check
        %p189 = pneg %p188
      $region22: #{tpu_custom_call.1} parent=5 // pred_check_branch
        %191 = sbr.rel (%p189) target = $region24
      $region23: #{tpu_custom_call.1} parent=5 // pred_region
        // Predicated region
        $region25: #{tpu_custom_call.1} parent=23 // pred_check
          %p192 = pneg %p43
        $region26: #{tpu_custom_call.1} parent=23 // pred_check_branch
          %194 = sbr.rel (%p192) target = $region28
        $region27: #{tpu_custom_call.1} parent=23 // pred_region
          %p195 = scmp.lt.s32.totalorder %s19, 2
          %s196 = scalar_select %p195, %s19, 2
          %s197 = smul.addr %s196, 152
          %s198 = smul.addr %s197, 4
          %s199 = scalar_lea.vmem %s0, %s198
        $region28: #{tpu_custom_call.1} parent=23 // pred_fallthru
          _
        // Predicated region
        $region29: #{tpu_custom_call.1} parent=23 // pred_check
          %p200 = pneg %p71
        $region30: #{tpu_custom_call.1} parent=23 // pred_check_branch
          %202 = sbr.rel (%p200) target = $region32
        $region31: #{tpu_custom_call.1} parent=23 // pred_region
          %s203 = smul.u32 24, %s18
          %p204 = scmp.lt.s32.totalorder %s19, 2
          %s205 = scalar_select %p204, %s19, 2
          %p206 = scmp.lt.s32.totalorder %s203, 23
          %s207 = scalar_select %p206, %s203, 23
          %s208 = smul.addr %s207, 5
          %s209 = smul.addr %s205, 120
          %s210 = sadd.s32 %s208, %s209
          %s211 = smul.addr %s210, 4
          %s212 = scalar_lea.vmem %s1, %s211
          %s213 = smul.u32 24, %s18
        $region32: #{tpu_custom_call.1} parent=23 // pred_fallthru
          _
      $region24: #{tpu_custom_call.1} parent=5 // pred_fallthru
        _
      %p214 = scmp.le.s32.totalorder 1, %s11
      %p215 = scmp.lt.s32.totalorder %s11, 4
      %p216 = pnand %p214, %p215
      %p217 = pneg %p216
      // Predicated region
      $region33: #{tpu_custom_call.1} parent=5 // pred_check
        _
      $region34: #{tpu_custom_call.1} parent=5 // pred_check_branch
        %219 = sbr.rel (%p216) target = $region36
      $region35: #{tpu_custom_call.1} parent=5 // pred_region
        %s220 = ssub.s32 %s11, 1
        %p221 = scmp.lt.s32.totalorder %s21, 2
        %s222 = scalar_select %p221, %s21, 2
        %s223 = smul.addr %s222, 152
        %s224 = smul.addr %s223, 4
        %s225 = scalar_lea.vmem %s0, %s224
        %p226 = pneg %p49
        %p227 = pneg %p46
        %s228 = smul.u32 24, %s20
        %p229 = scmp.lt.s32.totalorder %s21, 2
        %s230 = scalar_select %p229, %s21, 2
        %p231 = scmp.lt.s32.totalorder %s228, 23
        %s232 = scalar_select %p231, %s228, 23
        %s233 = smul.addr %s232, 5
        %s234 = smul.addr %s230, 120
        %s235 = sadd.s32 %s233, %s234
        %s236 = smul.addr %s235, 4
        %s237 = scalar_lea.vmem %s1, %s236
        %p238 = pneg %p77
        %p239 = pneg %p74
        %s240 = smul.u32 24, %s20
        %p241 = scmp.lt.s32.totalorder %s240, 23
        %s242 = scalar_select %p241, %s240, 23
        %s243 = smul.addr %s242, 8
        %s244 = scalar_lea.vmem %s2, %s243
        %p245 = pneg %p103
        %p246 = pneg %p100
        %s247 = smul.u32 24, %s20
        %p248 = scmp.lt.s32.totalorder %s247, 23
        %s249 = scalar_select %p248, %s247, 23
        %s250 = smul.addr %s249, 8
        %s251 = scalar_lea.vmem %s3, %s250
        %p252 = pneg %p129
        %p253 = pneg %p126
        %p254 = pneg %p155
        %p255 = pneg %p152
        %p256 = scmp.lt.s32.totalorder %s21, 2
        %s257 = scalar_select %p256, %s21, 2
        %s258 = smul.addr %s257, 152
        %s259 = smul.addr %s258, 4
        %s260 = scalar_lea.vmem %s0, %s259
        %s261 = smul.u32 24, %s20
        %p262 = scmp.lt.s32.totalorder %s21, 2
        %s263 = scalar_select %p262, %s21, 2
        %p264 = scmp.lt.s32.totalorder %s261, 23
        %s265 = scalar_select %p264, %s261, 23
        %s266 = smul.addr %s265, 5
        %s267 = smul.addr %s263, 120
        %s268 = sadd.s32 %s266, %s267
        %s269 = smul.addr %s268, 4
        %s270 = scalar_lea.vmem %s1, %s269
        %s271 = smul.u32 24, %s20
        %s272 = smul.u32 24, %s20
        %p273 = scmp.lt.s32.totalorder %s272, 23
        %s274 = scalar_select %p273, %s272, 23
        %s275 = smul.addr %s274, 8
        %s276 = scalar_lea.vmem %s2, %s275
        %s277 = smul.u32 24, %s20
        %s278 = smul.u32 24, %s20
        %p279 = scmp.lt.s32.totalorder %s278, 23
        %s280 = scalar_select %p279, %s278, 23
        %s281 = smul.addr %s280, 8
        %s282 = scalar_lea.vmem %s3, %s281
        %s283 = smul.u32 24, %s20
        %s284 = smul.u32 24, %s20
        %p286 = scmp.eq.s32.totalorder %s21, 0
        // Predicated region
        $region37: #{tpu_custom_call.1} parent=35 // pred_check
          %p287 = pneg %p286
        $region38: #{tpu_custom_call.1} parent=35 // pred_check_branch
          %289 = sbr.rel (%p287) target = $region40
        $region39: #{tpu_custom_call.1} parent=35 // pred_region
          %290 = vst [vmem:[#allocation2] sm:$0xff] 0.0
          %vm291 = vcmask 556032
          %292 = vst.msk [vmem:[#allocation2 + $0x8] sm:$0xff] %vm291, 0.0
          %293 = vst [vmem:[#allocation2 + $0x10] sm:$0xff] 0.0
          %294 = vst.msk [vmem:[#allocation2 + $0x18] sm:$0xff] %vm291, 0.0
          %295 = vst [vmem:[#allocation2 + $0x20] sm:$0xff] 0.0
          %296 = vst.msk [vmem:[#allocation2 + $0x28] sm:$0xff] %vm291, 0.0
          %297 = vst [vmem:[#allocation2 + $0x30] sm:$0xff] 0.0
          %298 = vst.msk [vmem:[#allocation2 + $0x38] sm:$0xff] %vm291, 0.0
          %299 = vst [vmem:[#allocation2 + $0x40] sm:$0xff] 0.0
          %300 = vst.msk [vmem:[#allocation2 + $0x48] sm:$0xff] %vm291, 0.0
          %301 = vst [vmem:[#allocation2 + $0x50] sm:$0xff] 0.0
          %302 = vst.msk [vmem:[#allocation2 + $0x58] sm:$0xff] %vm291, 0.0
          %303 = vst [vmem:[#allocation2 + $0x60] sm:$0xff] 0.0
          %304 = vst.msk [vmem:[#allocation2 + $0x68] sm:$0xff] %vm291, 0.0
          %305 = vst [vmem:[#allocation2 + $0x70] sm:$0xff] 0.0
          %306 = vst.msk [vmem:[#allocation2 + $0x78] sm:$0xff] %vm291, 0.0
          %307 = vst [vmem:[#allocation2 + $0x80] sm:$0xff] 0.0
          %308 = vst.msk [vmem:[#allocation2 + $0x88] sm:$0xff] %vm291, 0.0
          %309 = vst [vmem:[#allocation2 + $0x90] sm:$0xff] 0.0
          %310 = vst.msk [vmem:[#allocation2 + $0x98] sm:$0xff] %vm291, 0.0
          %311 = vst [vmem:[#allocation2 + $0xa0] sm:$0xff] 0.0
          %312 = vst.msk [vmem:[#allocation2 + $0xa8] sm:$0xff] %vm291, 0.0
          %313 = vst [vmem:[#allocation2 + $0xb0] sm:$0xff] 0.0
          %314 = vst.msk [vmem:[#allocation2 + $0xb8] sm:$0xff] %vm291, 0.0
          %315 = vst [vmem:[#allocation2 + $0xc0] sm:$0xff] 0.0
          %316 = vst.msk [vmem:[#allocation2 + $0xc8] sm:$0xff] %vm291, 0.0
          %317 = vst [vmem:[#allocation2 + $0xd0] sm:$0xff] 0.0
          %318 = vst.msk [vmem:[#allocation2 + $0xd8] sm:$0xff] %vm291, 0.0
          %319 = vst [vmem:[#allocation2 + $0xe0] sm:$0xff] 0.0
          %320 = vst.msk [vmem:[#allocation2 + $0xe8] sm:$0xff] %vm291, 0.0
          %321 = vst [vmem:[#allocation2 + $0xf0] sm:$0xff] 0.0
          %322 = vst.msk [vmem:[#allocation2 + $0xf8] sm:$0xff] %vm291, 0.0
          %323 = vst [vmem:[#allocation2 + $0x100] sm:$0xff] 0.0
          %324 = vst.msk [vmem:[#allocation2 + $0x108] sm:$0xff] %vm291, 0.0
          %325 = vst [vmem:[#allocation2 + $0x110] sm:$0xff] 0.0
          %326 = vst.msk [vmem:[#allocation2 + $0x118] sm:$0xff] %vm291, 0.0
          %327 = vst [vmem:[#allocation2 + $0x120] sm:$0xff] 0.0
          %328 = vst.msk [vmem:[#allocation2 + $0x128] sm:$0xff] %vm291, 0.0
          %329 = vst [vmem:[#allocation2 + $0x130] sm:$0xff] 0.0
          %330 = vst.msk [vmem:[#allocation2 + $0x138] sm:$0xff] %vm291, 0.0
          %331 = vst [vmem:[#allocation2 + $0x140] sm:$0xff] 0.0
          %332 = vst.msk [vmem:[#allocation2 + $0x148] sm:$0xff] %vm291, 0.0
          %333 = vst [vmem:[#allocation2 + $0x150] sm:$0xff] 0.0
          %334 = vst.msk [vmem:[#allocation2 + $0x158] sm:$0xff] %vm291, 0.0
          %335 = vst [vmem:[#allocation2 + $0x160] sm:$0xff] 0.0
          %336 = vst.msk [vmem:[#allocation2 + $0x168] sm:$0xff] %vm291, 0.0
          %337 = vst [vmem:[#allocation2 + $0x170] sm:$0xff] 0.0
          %338 = vst.msk [vmem:[#allocation2 + $0x178] sm:$0xff] %vm291, 0.0
        $region40: #{tpu_custom_call.1} parent=35 // pred_fallthru
          _
        %v339 = vld [vmem:[%s260] sm:$0xff]
        %v340 = vld [vmem:[%s260 + $0x8] sm:$0xff]
        %v341 = vld [vmem:[%s260 + $0x10] sm:$0xff]
        %v342 = vld [vmem:[%s260 + $0x18] sm:$0xff]
        %v343 = vld [vmem:[%s260 + $0x20] sm:$0xff]
        %v344 = vld [vmem:[%s260 + $0x28] sm:$0xff]
        %v345 = vld [vmem:[%s260 + $0x30] sm:$0xff]
        %v346 = vld [vmem:[%s260 + $0x38] sm:$0xff]
        %v347 = vld [vmem:[%s260 + $0x40] sm:$0xff]
        %v348 = vld [vmem:[%s260 + $0x48] sm:$0xff]
        %v349 = vld [vmem:[%s260 + $0x50] sm:$0xff]
        %v350 = vld [vmem:[%s260 + $0x58] sm:$0xff]
        %v351 = vld [vmem:[%s260 + $0x60] sm:$0xff]
        %v352 = vld [vmem:[%s260 + $0x68] sm:$0xff]
        %v353 = vld [vmem:[%s260 + $0x70] sm:$0xff]
        %v354 = vld [vmem:[%s260 + $0x78] sm:$0xff]
        %v355 = vld [vmem:[%s260 + $0x80] sm:$0xff]
        %v356 = vld [vmem:[%s260 + $0x88] sm:$0xff]
        %v357 = vld [vmem:[%s260 + $0x90] sm:$0xff]
        %v358 = vld [vmem:[%s260 + $0x98] sm:$0xff]
        %v359 = vld [vmem:[%s260 + $0xa0] sm:$0xff]
        %v360 = vld [vmem:[%s260 + $0xa8] sm:$0xff]
        %v361 = vld [vmem:[%s260 + $0xb0] sm:$0xff]
        %v362 = vld [vmem:[%s260 + $0xb8] sm:$0xff]
        %v363 = vld [vmem:[%s260 + $0xc0] sm:$0xff]
        %v364 = vld [vmem:[%s260 + $0xc8] sm:$0xff]
        %v365 = vld [vmem:[%s260 + $0xd0] sm:$0xff]
        %v366 = vld [vmem:[%s260 + $0xd8] sm:$0xff]
        %v367 = vld [vmem:[%s260 + $0xe0] sm:$0xff]
        %v368 = vld [vmem:[%s260 + $0xe8] sm:$0xff]
        %v369 = vld [vmem:[%s260 + $0xf0] sm:$0xff]
        %v370 = vld [vmem:[%s260 + $0xf8] sm:$0xff]
        %v371 = vld [vmem:[%s260 + $0x100] sm:$0xff]
        %v372 = vld [vmem:[%s260 + $0x108] sm:$0xff]
        %v373 = vld [vmem:[%s260 + $0x110] sm:$0xff]
        %v374 = vld [vmem:[%s260 + $0x118] sm:$0xff]
        %v375 = vld [vmem:[%s260 + $0x120] sm:$0xff]
        %v376 = vld [vmem:[%s260 + $0x128] sm:$0xff]
        %v377 = vld [vmem:[%s260 + $0x130] sm:$0xff]
        %v378 = vld [vmem:[%s260 + $0x138] sm:$0xff]
        %v379 = vld [vmem:[%s260 + $0x140] sm:$0xff]
        %v380 = vld [vmem:[%s260 + $0x148] sm:$0xff]
        %v381 = vld [vmem:[%s260 + $0x150] sm:$0xff]
        %v382 = vld [vmem:[%s260 + $0x158] sm:$0xff]
        %v383 = vld [vmem:[%s260 + $0x160] sm:$0xff]
        %v384 = vld [vmem:[%s260 + $0x168] sm:$0xff]
        %v385 = vld [vmem:[%s260 + $0x170] sm:$0xff]
        %v386 = vld [vmem:[%s260 + $0x178] sm:$0xff]
        %v387 = vld [vmem:[%s260 + $0x180] sm:$0xff]
        %v388 = vld [vmem:[%s260 + $0x188] sm:$0xff]
        %v389 = vld [vmem:[%s260 + $0x190] sm:$0xff]
        %v390 = vld [vmem:[%s260 + $0x198] sm:$0xff]
        %v391 = vld [vmem:[%s260 + $0x1a0] sm:$0xff]
        %v392 = vld [vmem:[%s260 + $0x1a8] sm:$0xff]
        %v393 = vld [vmem:[%s260 + $0x1b0] sm:$0xff]
        %v394 = vld [vmem:[%s260 + $0x1b8] sm:$0xff]
        %v395 = vld [vmem:[%s260 + $0x1c0] sm:$0xff]
        %v396 = vld [vmem:[%s260 + $0x1c8] sm:$0xff]
        %v397 = vld [vmem:[%s260 + $0x1d0] sm:$0xff]
        %v398 = vld [vmem:[%s260 + $0x1d8] sm:$0xff]
        %v399 = vld [vmem:[%s260 + $0x1e0] sm:$0xff]
        %v400 = vld [vmem:[%s260 + $0x1e8] sm:$0xff]
        %v401 = vld [vmem:[%s260 + $0x1f0] sm:$0xff]
        %v402 = vld [vmem:[%s260 + $0x1f8] sm:$0xff]
        %v403 = vld [vmem:[%s260 + $0x200] sm:$0xff]
        %v404 = vld [vmem:[%s260 + $0x208] sm:$0xff]
        %v405 = vld [vmem:[%s260 + $0x210] sm:$0xff]
        %v406 = vld [vmem:[%s260 + $0x218] sm:$0xff]
        %v407 = vld [vmem:[%s260 + $0x220] sm:$0xff]
        %v408 = vld [vmem:[%s260 + $0x228] sm:$0xff]
        %v409 = vld [vmem:[%s260 + $0x230] sm:$0xff]
        %v410 = vld [vmem:[%s260 + $0x238] sm:$0xff]
        %v411 = vld [vmem:[%s260 + $0x240] sm:$0xff]
        %v412 = vld [vmem:[%s260 + $0x248] sm:$0xff]
        %v413 = vld [vmem:[%s260 + $0x250] sm:$0xff]
        %v414 = vld [vmem:[%s260 + $0x258] sm:$0xff]
        %v415 = vunpack.c.l.bf16 %v339
        %v416 = vunpack.c.h.bf16 %v339
        %v417 = vunpack.c.l.bf16 %v340
        %v418 = vunpack.c.h.bf16 %v340
        %v419 = vunpack.c.l.bf16 %v341
        %v420 = vunpack.c.h.bf16 %v341
        %v421 = vunpack.c.l.bf16 %v342
        %v422 = vunpack.c.h.bf16 %v342
        %v423 = vunpack.c.l.bf16 %v343
        %v424 = vunpack.c.h.bf16 %v343
        %v425 = vunpack.c.l.bf16 %v344
        %v426 = vunpack.c.h.bf16 %v344
        %v427 = vunpack.c.l.bf16 %v345
        %v428 = vunpack.c.h.bf16 %v345
        %v429 = vunpack.c.l.bf16 %v346
        %v430 = vunpack.c.h.bf16 %v346
        %v431 = vunpack.c.l.bf16 %v347
        %v432 = vunpack.c.h.bf16 %v347
        %v433 = vunpack.c.l.bf16 %v348
        %v434 = vunpack.c.h.bf16 %v348
        %v435 = vunpack.c.l.bf16 %v349
        %v436 = vunpack.c.h.bf16 %v349
        %v437 = vunpack.c.l.bf16 %v350
        %v438 = vunpack.c.h.bf16 %v350
        %v439 = vunpack.c.l.bf16 %v351
        %v440 = vunpack.c.h.bf16 %v351
        %v441 = vunpack.c.l.bf16 %v352
        %v442 = vunpack.c.h.bf16 %v352
        %v443 = vunpack.c.l.bf16 %v353
        %v444 = vunpack.c.h.bf16 %v353
        %v445 = vunpack.c.l.bf16 %v354
        %v446 = vunpack.c.h.bf16 %v354
        %v447 = vunpack.c.l.bf16 %v355
        %v448 = vunpack.c.h.bf16 %v355
        %v449 = vunpack.c.l.bf16 %v356
        %v450 = vunpack.c.h.bf16 %v356
        %v451 = vunpack.c.l.bf16 %v357
        %v452 = vunpack.c.h.bf16 %v357
        %v453 = vunpack.c.l.bf16 %v358
        %v454 = vunpack.c.h.bf16 %v358
        %v455 = vunpack.c.l.bf16 %v359
        %v456 = vunpack.c.h.bf16 %v359
        %v457 = vunpack.c.l.bf16 %v360
        %v458 = vunpack.c.h.bf16 %v360
        %v459 = vunpack.c.l.bf16 %v361
        %v460 = vunpack.c.h.bf16 %v361
        %v461 = vunpack.c.l.bf16 %v362
        %v462 = vunpack.c.h.bf16 %v362
        %v463 = vunpack.c.l.bf16 %v363
        %v464 = vunpack.c.h.bf16 %v363
        %v465 = vunpack.c.l.bf16 %v364
        %v466 = vunpack.c.h.bf16 %v364
        %v467 = vunpack.c.l.bf16 %v365
        %v468 = vunpack.c.h.bf16 %v365
        %v469 = vunpack.c.l.bf16 %v366
        %v470 = vunpack.c.h.bf16 %v366
        %v471 = vunpack.c.l.bf16 %v367
        %v472 = vunpack.c.h.bf16 %v367
        %v473 = vunpack.c.l.bf16 %v368
        %v474 = vunpack.c.h.bf16 %v368
        %v475 = vunpack.c.l.bf16 %v369
        %v476 = vunpack.c.h.bf16 %v369
        %v477 = vunpack.c.l.bf16 %v370
        %v478 = vunpack.c.h.bf16 %v370
        %v479 = vunpack.c.l.bf16 %v371
        %v480 = vunpack.c.h.bf16 %v371
        %v481 = vunpack.c.l.bf16 %v372
        %v482 = vunpack.c.h.bf16 %v372
        %v483 = vunpack.c.l.bf16 %v373
        %v484 = vunpack.c.h.bf16 %v373
        %v485 = vunpack.c.l.bf16 %v374
        %v486 = vunpack.c.h.bf16 %v374
        %v487 = vunpack.c.l.bf16 %v375
        %v488 = vunpack.c.h.bf16 %v375
        %v489 = vunpack.c.l.bf16 %v376
        %v490 = vunpack.c.h.bf16 %v376
        %v491 = vunpack.c.l.bf16 %v377
        %v492 = vunpack.c.h.bf16 %v377
        %v493 = vunpack.c.l.bf16 %v378
        %v494 = vunpack.c.h.bf16 %v378
        %v495 = vunpack.c.l.bf16 %v379
        %v496 = vunpack.c.h.bf16 %v379
        %v497 = vunpack.c.l.bf16 %v380
        %v498 = vunpack.c.h.bf16 %v380
        %v499 = vunpack.c.l.bf16 %v381
        %v500 = vunpack.c.h.bf16 %v381
        %v501 = vunpack.c.l.bf16 %v382
        %v502 = vunpack.c.h.bf16 %v382
        %v503 = vunpack.c.l.bf16 %v383
        %v504 = vunpack.c.h.bf16 %v383
        %v505 = vunpack.c.l.bf16 %v384
        %v506 = vunpack.c.h.bf16 %v384
        %v507 = vunpack.c.l.bf16 %v385
        %v508 = vunpack.c.h.bf16 %v385
        %v509 = vunpack.c.l.bf16 %v386
        %v510 = vunpack.c.h.bf16 %v386
        %v511 = vunpack.c.l.bf16 %v387
        %v512 = vunpack.c.h.bf16 %v387
        %v513 = vunpack.c.l.bf16 %v388
        %v514 = vunpack.c.h.bf16 %v388
        %v515 = vunpack.c.l.bf16 %v389
        %v516 = vunpack.c.h.bf16 %v389
        %v517 = vunpack.c.l.bf16 %v390
        %v518 = vunpack.c.h.bf16 %v390
        %v519 = vunpack.c.l.bf16 %v391
        %v520 = vunpack.c.h.bf16 %v391
        %v521 = vunpack.c.l.bf16 %v392
        %v522 = vunpack.c.h.bf16 %v392
        %v523 = vunpack.c.l.bf16 %v393
        %v524 = vunpack.c.h.bf16 %v393
        %v525 = vunpack.c.l.bf16 %v394
        %v526 = vunpack.c.h.bf16 %v394
        %v527 = vunpack.c.l.bf16 %v395
        %v528 = vunpack.c.h.bf16 %v395
        %v529 = vunpack.c.l.bf16 %v396
        %v530 = vunpack.c.h.bf16 %v396
        %v531 = vunpack.c.l.bf16 %v397
        %v532 = vunpack.c.h.bf16 %v397
        %v533 = vunpack.c.l.bf16 %v398
        %v534 = vunpack.c.h.bf16 %v398
        %v535 = vunpack.c.l.bf16 %v399
        %v536 = vunpack.c.h.bf16 %v399
        %v537 = vunpack.c.l.bf16 %v400
        %v538 = vunpack.c.h.bf16 %v400
        %v539 = vunpack.c.l.bf16 %v401
        %v540 = vunpack.c.h.bf16 %v401
        %v541 = vunpack.c.l.bf16 %v402
        %v542 = vunpack.c.h.bf16 %v402
        %v543 = vunpack.c.l.bf16 %v403
        %v544 = vunpack.c.h.bf16 %v403
        %v545 = vunpack.c.l.bf16 %v404
        %v546 = vunpack.c.h.bf16 %v404
        %v547 = vunpack.c.l.bf16 %v405
        %v548 = vunpack.c.h.bf16 %v405
        %v549 = vunpack.c.l.bf16 %v406
        %v550 = vunpack.c.h.bf16 %v406
        %v551 = vunpack.c.l.bf16 %v407
        %v552 = vunpack.c.h.bf16 %v407
        %v553 = vunpack.c.l.bf16 %v408
        %v554 = vunpack.c.h.bf16 %v408
        %v555 = vunpack.c.l.bf16 %v409
        %v556 = vunpack.c.h.bf16 %v409
        %v557 = vunpack.c.l.bf16 %v410
        %v558 = vunpack.c.h.bf16 %v410
        %v559 = vunpack.c.l.bf16 %v411
        %v560 = vunpack.c.h.bf16 %v411
        %v561 = vunpack.c.l.bf16 %v412
        %v562 = vunpack.c.h.bf16 %v412
        %v563 = vunpack.c.l.bf16 %v413
        %v564 = vunpack.c.h.bf16 %v413
        %v565 = vunpack.c.l.bf16 %v414
        %v566 = vunpack.c.h.bf16 %v414
        %v567 = vmax.f32 %v415, 0.0
        %v568 = vmax.f32 %v416, 0.0
        %v569 = vmax.f32 %v417, 0.0
        %v570 = vmax.f32 %v418, 0.0
        %v571 = vmax.f32 %v419, 0.0
        %v572 = vmax.f32 %v420, 0.0
        %v573 = vmax.f32 %v421, 0.0
        %v574 = vmax.f32 %v422, 0.0
        %v575 = vmax.f32 %v423, 0.0
        %v576 = vmax.f32 %v424, 0.0
        %v577 = vmax.f32 %v425, 0.0
        %v578 = vmax.f32 %v426, 0.0
        %v579 = vmax.f32 %v427, 0.0
        %v580 = vmax.f32 %v428, 0.0
        %v581 = vmax.f32 %v429, 0.0
        %v582 = vmax.f32 %v430, 0.0
        %v583 = vmax.f32 %v431, 0.0
        %v584 = vmax.f32 %v432, 0.0
        %v585 = vmax.f32 %v433, 0.0
        %v586 = vmax.f32 %v434, 0.0
        %v587 = vmax.f32 %v435, 0.0
        %v588 = vmax.f32 %v436, 0.0
        %v589 = vmax.f32 %v437, 0.0
        %v590 = vmax.f32 %v438, 0.0
        %v591 = vmax.f32 %v439, 0.0
        %v592 = vmax.f32 %v440, 0.0
        %v593 = vmax.f32 %v441, 0.0
        %v594 = vmax.f32 %v442, 0.0
        %v595 = vmax.f32 %v443, 0.0
        %v596 = vmax.f32 %v444, 0.0
        %v597 = vmax.f32 %v445, 0.0
        %v598 = vmax.f32 %v446, 0.0
        %v599 = vmax.f32 %v447, 0.0
        %v600 = vmax.f32 %v448, 0.0
        %v601 = vmax.f32 %v449, 0.0
        %v602 = vmax.f32 %v450, 0.0
        %v603 = vmax.f32 %v451, 0.0
        %v604 = vmax.f32 %v452, 0.0
        %v605 = vmax.f32 %v453, 0.0
        %v606 = vmax.f32 %v454, 0.0
        %v607 = vmax.f32 %v455, 0.0
        %v608 = vmax.f32 %v456, 0.0
        %v609 = vmax.f32 %v457, 0.0
        %v610 = vmax.f32 %v458, 0.0
        %v611 = vmax.f32 %v459, 0.0
        %v612 = vmax.f32 %v460, 0.0
        %v613 = vmax.f32 %v461, 0.0
        %v614 = vmax.f32 %v462, 0.0
        %v615 = vmax.f32 %v463, 0.0
        %v616 = vmax.f32 %v464, 0.0
        %v617 = vmax.f32 %v465, 0.0
        %v618 = vmax.f32 %v466, 0.0
        %v619 = vmax.f32 %v467, 0.0
        %v620 = vmax.f32 %v468, 0.0
        %v621 = vmax.f32 %v469, 0.0
        %v622 = vmax.f32 %v470, 0.0
        %v623 = vmax.f32 %v471, 0.0
        %v624 = vmax.f32 %v472, 0.0
        %v625 = vmax.f32 %v473, 0.0
        %v626 = vmax.f32 %v474, 0.0
        %v627 = vmax.f32 %v475, 0.0
        %v628 = vmax.f32 %v476, 0.0
        %v629 = vmax.f32 %v477, 0.0
        %v630 = vmax.f32 %v478, 0.0
        %v631 = vmax.f32 %v479, 0.0
        %v632 = vmax.f32 %v480, 0.0
        %v633 = vmax.f32 %v481, 0.0
        %v634 = vmax.f32 %v482, 0.0
        %v635 = vmax.f32 %v483, 0.0
        %v636 = vmax.f32 %v484, 0.0
        %v637 = vmax.f32 %v485, 0.0
        %v638 = vmax.f32 %v486, 0.0
        %v639 = vmax.f32 %v487, 0.0
        %v640 = vmax.f32 %v488, 0.0
        %v641 = vmax.f32 %v489, 0.0
        %v642 = vmax.f32 %v490, 0.0
        %v643 = vmax.f32 %v491, 0.0
        %v644 = vmax.f32 %v492, 0.0
        %v645 = vmax.f32 %v493, 0.0
        %v646 = vmax.f32 %v494, 0.0
        %v647 = vmax.f32 %v495, 0.0
        %v648 = vmax.f32 %v496, 0.0
        %v649 = vmax.f32 %v497, 0.0
        %v650 = vmax.f32 %v498, 0.0
        %v651 = vmax.f32 %v499, 0.0
        %v652 = vmax.f32 %v500, 0.0
        %v653 = vmax.f32 %v501, 0.0
        %v654 = vmax.f32 %v502, 0.0
        %v655 = vmax.f32 %v503, 0.0
        %v656 = vmax.f32 %v504, 0.0
        %v657 = vmax.f32 %v505, 0.0
        %v658 = vmax.f32 %v506, 0.0
        %v659 = vmax.f32 %v507, 0.0
        %v660 = vmax.f32 %v508, 0.0
        %v661 = vmax.f32 %v509, 0.0
        %v662 = vmax.f32 %v510, 0.0
        %v663 = vmax.f32 %v511, 0.0
        %v664 = vmax.f32 %v512, 0.0
        %v665 = vmax.f32 %v513, 0.0
        %v666 = vmax.f32 %v514, 0.0
        %v667 = vmax.f32 %v515, 0.0
        %v668 = vmax.f32 %v516, 0.0
        %v669 = vmax.f32 %v517, 0.0
        %v670 = vmax.f32 %v518, 0.0
        %v671 = vmax.f32 %v519, 0.0
        %v672 = vmax.f32 %v520, 0.0
        %v673 = vmax.f32 %v521, 0.0
        %v674 = vmax.f32 %v522, 0.0
        %v675 = vmax.f32 %v523, 0.0
        %v676 = vmax.f32 %v524, 0.0
        %v677 = vmax.f32 %v525, 0.0
        %v678 = vmax.f32 %v526, 0.0
        %v679 = vmax.f32 %v527, 0.0
        %v680 = vmax.f32 %v528, 0.0
        %v681 = vmax.f32 %v529, 0.0
        %v682 = vmax.f32 %v530, 0.0
        %v683 = vmax.f32 %v531, 0.0
        %v684 = vmax.f32 %v532, 0.0
        %v685 = vmax.f32 %v533, 0.0
        %v686 = vmax.f32 %v534, 0.0
        %v687 = vmax.f32 %v535, 0.0
        %v688 = vmax.f32 %v536, 0.0
        %v689 = vmax.f32 %v537, 0.0
        %v690 = vmax.f32 %v538, 0.0
        %v691 = vmax.f32 %v539, 0.0
        %v692 = vmax.f32 %v540, 0.0
        %v693 = vmax.f32 %v541, 0.0
        %v694 = vmax.f32 %v542, 0.0
        %v695 = vmax.f32 %v543, 0.0
        %v696 = vmax.f32 %v544, 0.0
        %v697 = vmax.f32 %v545, 0.0
        %v698 = vmax.f32 %v546, 0.0
        %v699 = vmax.f32 %v547, 0.0
        %v700 = vmax.f32 %v548, 0.0
        %v701 = vmax.f32 %v549, 0.0
        %v702 = vmax.f32 %v550, 0.0
        %v703 = vmax.f32 %v551, 0.0
        %v704 = vmax.f32 %v552, 0.0
        %v705 = vmax.f32 %v553, 0.0
        %v706 = vmax.f32 %v554, 0.0
        %v707 = vmax.f32 %v555, 0.0
        %v708 = vmax.f32 %v556, 0.0
        %v709 = vmax.f32 %v557, 0.0
        %v710 = vmax.f32 %v558, 0.0
        %v711 = vmax.f32 %v559, 0.0
        %v712 = vmax.f32 %v560, 0.0
        %v713 = vmax.f32 %v561, 0.0
        %v714 = vmax.f32 %v562, 0.0
        %v715 = vmax.f32 %v563, 0.0
        %v716 = vmax.f32 %v564, 0.0
        %v717 = vmax.f32 %v565, 0.0
        %v718 = vmax.f32 %v566, 0.0
        %v719 = vpack.c.bf16 %v569, %v567
        %v720 = vpack.c.bf16 %v570, %v568
        %v721 = vpack.c.bf16 %v573, %v571
        %v722 = vpack.c.bf16 %v574, %v572
        %v723 = vpack.c.bf16 %v577, %v575
        %v724 = vpack.c.bf16 %v578, %v576
        %v725 = vpack.c.bf16 %v581, %v579
        %v726 = vpack.c.bf16 %v582, %v580
        %v727 = vpack.c.bf16 %v585, %v583
        %v728 = vpack.c.bf16 %v586, %v584
        %v729 = vpack.c.bf16 %v589, %v587
        %v730 = vpack.c.bf16 %v590, %v588
        %v731 = vpack.c.bf16 %v593, %v591
        %v732 = vpack.c.bf16 %v594, %v592
        %v733 = vpack.c.bf16 %v597, %v595
        %v734 = vpack.c.bf16 %v598, %v596
        %v735 = vpack.c.bf16 %v601, %v599
        %v736 = vpack.c.bf16 %v602, %v600
        %v737 = vpack.c.bf16 %v605, %v603
        %v738 = vpack.c.bf16 %v606, %v604
        %v739 = vpack.c.bf16 %v609, %v607
        %v740 = vpack.c.bf16 %v610, %v608
        %v741 = vpack.c.bf16 %v613, %v611
        %v742 = vpack.c.bf16 %v614, %v612
        %v743 = vpack.c.bf16 %v617, %v615
        %v744 = vpack.c.bf16 %v618, %v616
        %v745 = vpack.c.bf16 %v621, %v619
        %v746 = vpack.c.bf16 %v622, %v620
        %v747 = vpack.c.bf16 %v625, %v623
        %v748 = vpack.c.bf16 %v626, %v624
        %v749 = vpack.c.bf16 %v629, %v627
        %v750 = vpack.c.bf16 %v630, %v628
        %v751 = vpack.c.bf16 %v633, %v631
        %v752 = vpack.c.bf16 %v634, %v632
        %v753 = vpack.c.bf16 %v637, %v635
        %v754 = vpack.c.bf16 %v638, %v636
        %v755 = vpack.c.bf16 %v641, %v639
        %v756 = vpack.c.bf16 %v642, %v640
        %v757 = vpack.c.bf16 %v645, %v643
        %v758 = vpack.c.bf16 %v646, %v644
        %v759 = vpack.c.bf16 %v649, %v647
        %v760 = vpack.c.bf16 %v650, %v648
        %v761 = vpack.c.bf16 %v653, %v651
        %v762 = vpack.c.bf16 %v654, %v652
        %v763 = vpack.c.bf16 %v657, %v655
        %v764 = vpack.c.bf16 %v658, %v656
        %v765 = vpack.c.bf16 %v661, %v659
        %v766 = vpack.c.bf16 %v662, %v660
        %v767 = vpack.c.bf16 %v665, %v663
        %v768 = vpack.c.bf16 %v666, %v664
        %v769 = vpack.c.bf16 %v669, %v667
        %v770 = vpack.c.bf16 %v670, %v668
        %v771 = vpack.c.bf16 %v673, %v671
        %v772 = vpack.c.bf16 %v674, %v672
        %v773 = vpack.c.bf16 %v677, %v675
        %v774 = vpack.c.bf16 %v678, %v676
        %v775 = vpack.c.bf16 %v681, %v679
        %v776 = vpack.c.bf16 %v682, %v680
        %v777 = vpack.c.bf16 %v685, %v683
        %v778 = vpack.c.bf16 %v686, %v684
        %v779 = vpack.c.bf16 %v689, %v687
        %v780 = vpack.c.bf16 %v690, %v688
        %v781 = vpack.c.bf16 %v693, %v691
        %v782 = vpack.c.bf16 %v694, %v692
        %v783 = vpack.c.bf16 %v697, %v695
        %v784 = vpack.c.bf16 %v698, %v696
        %v785 = vpack.c.bf16 %v701, %v699
        %v786 = vpack.c.bf16 %v702, %v700
        %v787 = vpack.c.bf16 %v705, %v703
        %v788 = vpack.c.bf16 %v706, %v704
        %v789 = vpack.c.bf16 %v709, %v707
        %v790 = vpack.c.bf16 %v710, %v708
        %v791 = vpack.c.bf16 %v713, %v711
        %v792 = vpack.c.bf16 %v714, %v712
        %v793 = vpack.c.bf16 %v717, %v715
        %v794 = vpack.c.bf16 %v718, %v716
        %v795 = vld [vmem:[#allocation2] sm:$0xff]
        %v796 = vld [vmem:[#allocation2 + $0x8] sm:$0xff]
        %v797 = vld [vmem:[#allocation2 + $0x10] sm:$0xff]
        %v798 = vld [vmem:[#allocation2 + $0x18] sm:$0xff]
        %v799 = vld [vmem:[#allocation2 + $0x20] sm:$0xff]
        %v800 = vld [vmem:[#allocation2 + $0x28] sm:$0xff]
        %v801 = vld [vmem:[#allocation2 + $0x30] sm:$0xff]
        %v802 = vld [vmem:[#allocation2 + $0x38] sm:$0xff]
        %v803 = vld [vmem:[#allocation2 + $0x40] sm:$0xff]
        %v804 = vld [vmem:[#allocation2 + $0x48] sm:$0xff]
        %v805 = vld [vmem:[#allocation2 + $0x50] sm:$0xff]
        %v806 = vld [vmem:[#allocation2 + $0x58] sm:$0xff]
        %v807 = vld [vmem:[#allocation2 + $0x60] sm:$0xff]
        %v808 = vld [vmem:[#allocation2 + $0x68] sm:$0xff]
        %v809 = vld [vmem:[#allocation2 + $0x70] sm:$0xff]
        %v810 = vld [vmem:[#allocation2 + $0x78] sm:$0xff]
        %v811 = vld [vmem:[#allocation2 + $0x80] sm:$0xff]
        %v812 = vld [vmem:[#allocation2 + $0x88] sm:$0xff]
        %v813 = vld [vmem:[#allocation2 + $0x90] sm:$0xff]
        %v814 = vld [vmem:[#allocation2 + $0x98] sm:$0xff]
        %v815 = vld [vmem:[#allocation2 + $0xa0] sm:$0xff]
        %v816 = vld [vmem:[#allocation2 + $0xa8] sm:$0xff]
        %v817 = vld [vmem:[#allocation2 + $0xb0] sm:$0xff]
        %v818 = vld [vmem:[#allocation2 + $0xb8] sm:$0xff]
        %v819 = vld [vmem:[#allocation2 + $0xc0] sm:$0xff]
        %v820 = vld [vmem:[#allocation2 + $0xc8] sm:$0xff]
        %v821 = vld [vmem:[#allocation2 + $0xd0] sm:$0xff]
        %v822 = vld [vmem:[#allocation2 + $0xd8] sm:$0xff]
        %v823 = vld [vmem:[#allocation2 + $0xe0] sm:$0xff]
        %v824 = vld [vmem:[#allocation2 + $0xe8] sm:$0xff]
        %v825 = vld [vmem:[#allocation2 + $0xf0] sm:$0xff]
        %v826 = vld [vmem:[#allocation2 + $0xf8] sm:$0xff]
        %v827 = vld [vmem:[#allocation2 + $0x100] sm:$0xff]
        %v828 = vld [vmem:[#allocation2 + $0x108] sm:$0xff]
        %v829 = vld [vmem:[#allocation2 + $0x110] sm:$0xff]
        %v830 = vld [vmem:[#allocation2 + $0x118] sm:$0xff]
        %v831 = vld [vmem:[#allocation2 + $0x120] sm:$0xff]
        %v832 = vld [vmem:[#allocation2 + $0x128] sm:$0xff]
        %v833 = vld [vmem:[#allocation2 + $0x130] sm:$0xff]
        %v834 = vld [vmem:[#allocation2 + $0x138] sm:$0xff]
        %v835 = vld [vmem:[#allocation2 + $0x140] sm:$0xff]
        %v836 = vld [vmem:[#allocation2 + $0x148] sm:$0xff]
        %v837 = vld [vmem:[#allocation2 + $0x150] sm:$0xff]
        %v838 = vld [vmem:[#allocation2 + $0x158] sm:$0xff]
        %v839 = vld [vmem:[#allocation2 + $0x160] sm:$0xff]
        %v840 = vld [vmem:[#allocation2 + $0x168] sm:$0xff]
        %v841 = vld [vmem:[#allocation2 + $0x170] sm:$0xff]
        %v842 = vld [vmem:[#allocation2 + $0x178] sm:$0xff]
        %v843 = vld [vmem:[%s270] sm:$0xff]
        %v844 = vld [vmem:[%s270 + $0x8] sm:$0xff]
        %v845 = vld [vmem:[%s270 + $0x10] sm:$0xf]
        %v846 = vld [vmem:[%s270 + $0x14] sm:$0xff]
        %v847 = vld [vmem:[%s270 + $0x1c] sm:$0xff]
        %v848 = vld [vmem:[%s270 + $0x24] sm:$0xf]
        %v849 = vld [vmem:[%s270 + $0x28] sm:$0xff]
        %v850 = vld [vmem:[%s270 + $0x30] sm:$0xff]
        %v851 = vld [vmem:[%s270 + $0x38] sm:$0xf]
        %v852 = vld [vmem:[%s270 + $0x3c] sm:$0xff]
        %v853 = vld [vmem:[%s270 + $0x44] sm:$0xff]
        %v854 = vld [vmem:[%s270 + $0x4c] sm:$0xf]
        %v855 = vld [vmem:[%s270 + $0x50] sm:$0xff]
        %v856 = vld [vmem:[%s270 + $0x58] sm:$0xff]
        %v857 = vld [vmem:[%s270 + $0x60] sm:$0xf]
        %v858 = vld [vmem:[%s270 + $0x64] sm:$0xff]
        %v859 = vld [vmem:[%s270 + $0x6c] sm:$0xff]
        %v860 = vld [vmem:[%s270 + $0x74] sm:$0xf]
        %v861 = vld [vmem:[%s270 + $0x78] sm:$0xff]
        %v862 = vld [vmem:[%s270 + $0x80] sm:$0xff]
        %v863 = vld [vmem:[%s270 + $0x88] sm:$0xf]
        %v864 = vld [vmem:[%s270 + $0x8c] sm:$0xff]
        %v865 = vld [vmem:[%s270 + $0x94] sm:$0xff]
        %v866 = vld [vmem:[%s270 + $0x9c] sm:$0xf]
        %v867 = vld [vmem:[%s270 + $0xa0] sm:$0xff]
        %v868 = vld [vmem:[%s270 + $0xa8] sm:$0xff]
        %v869 = vld [vmem:[%s270 + $0xb0] sm:$0xf]
        %v870 = vld [vmem:[%s270 + $0xb4] sm:$0xff]
        %v871 = vld [vmem:[%s270 + $0xbc] sm:$0xff]
        %v872 = vld [vmem:[%s270 + $0xc4] sm:$0xf]
        %v873 = vld [vmem:[%s270 + $0xc8] sm:$0xff]
        %v874 = vld [vmem:[%s270 + $0xd0] sm:$0xff]
        %v875 = vld [vmem:[%s270 + $0xd8] sm:$0xf]
        %v876 = vld [vmem:[%s270 + $0xdc] sm:$0xff]
        %v877 = vld [vmem:[%s270 + $0xe4] sm:$0xff]
        %v878 = vld [vmem:[%s270 + $0xec] sm:$0xf]
        %v879 = vld [vmem:[%s270 + $0xf0] sm:$0xff]
        %v880 = vld [vmem:[%s270 + $0xf8] sm:$0xff]
        %v881 = vld [vmem:[%s270 + $0x100] sm:$0xf]
        %v882 = vld [vmem:[%s270 + $0x104] sm:$0xff]
        %v883 = vld [vmem:[%s270 + $0x10c] sm:$0xff]
        %v884 = vld [vmem:[%s270 + $0x114] sm:$0xf]
        %v885 = vld [vmem:[%s270 + $0x118] sm:$0xff]
        %v886 = vld [vmem:[%s270 + $0x120] sm:$0xff]
        %v887 = vld [vmem:[%s270 + $0x128] sm:$0xf]
        %v888 = vld [vmem:[%s270 + $0x12c] sm:$0xff]
        %v889 = vld [vmem:[%s270 + $0x134] sm:$0xff]
        %v890 = vld [vmem:[%s270 + $0x13c] sm:$0xf]
        %v891 = vld [vmem:[%s270 + $0x140] sm:$0xff]
        %v892 = vld [vmem:[%s270 + $0x148] sm:$0xff]
        %v893 = vld [vmem:[%s270 + $0x150] sm:$0xf]
        %v894 = vld [vmem:[%s270 + $0x154] sm:$0xff]
        %v895 = vld [vmem:[%s270 + $0x15c] sm:$0xff]
        %v896 = vld [vmem:[%s270 + $0x164] sm:$0xf]
        %v897 = vld [vmem:[%s270 + $0x168] sm:$0xff]
        %v898 = vld [vmem:[%s270 + $0x170] sm:$0xff]
        %v899 = vld [vmem:[%s270 + $0x178] sm:$0xf]
        %v900 = vld [vmem:[%s270 + $0x17c] sm:$0xff]
        %v901 = vld [vmem:[%s270 + $0x184] sm:$0xff]
        %v902 = vld [vmem:[%s270 + $0x18c] sm:$0xf]
        %v903 = vld [vmem:[%s270 + $0x190] sm:$0xff]
        %v904 = vld [vmem:[%s270 + $0x198] sm:$0xff]
        %v905 = vld [vmem:[%s270 + $0x1a0] sm:$0xf]
        %v906 = vld [vmem:[%s270 + $0x1a4] sm:$0xff]
        %v907 = vld [vmem:[%s270 + $0x1ac] sm:$0xff]
        %v908 = vld [vmem:[%s270 + $0x1b4] sm:$0xf]
        %v909 = vld [vmem:[%s270 + $0x1b8] sm:$0xff]
        %v910 = vld [vmem:[%s270 + $0x1c0] sm:$0xff]
        %v911 = vld [vmem:[%s270 + $0x1c8] sm:$0xf]
        %v912 = vld [vmem:[%s270 + $0x1cc] sm:$0xff]
        %v913 = vld [vmem:[%s270 + $0x1d4] sm:$0xff]
        %v914 = vld [vmem:[%s270 + $0x1dc] sm:$0xf]
        %v987 = vunpack.c.l.b16 %v843
        %v988 = vunpack.c.h.b16 %v843
        %v989 = vunpack.c.l.b16 %v844
        %v990 = vunpack.c.h.b16 %v844
        %v991 = vunpack.c.l.b16 %v845
        %v992 = vunpack.c.l.b16 %v846
        %v993 = vunpack.c.h.b16 %v846
        %v994 = vunpack.c.l.b16 %v847
        %v995 = vunpack.c.h.b16 %v847
        %v996 = vunpack.c.l.b16 %v848
        %v997 = vunpack.c.l.b16 %v849
        %v998 = vunpack.c.h.b16 %v849
        %v999 = vunpack.c.l.b16 %v850
        %v1000 = vunpack.c.h.b16 %v850
        %v1001 = vunpack.c.l.b16 %v851
        %v1002 = vunpack.c.l.b16 %v852
        %v1003 = vunpack.c.h.b16 %v852
        %v1004 = vunpack.c.l.b16 %v853
        %v1005 = vunpack.c.h.b16 %v853
        %v1006 = vunpack.c.l.b16 %v854
        %v1007 = vunpack.c.l.b16 %v855
        %v1008 = vunpack.c.h.b16 %v855
        %v1009 = vunpack.c.l.b16 %v856
        %v1010 = vunpack.c.h.b16 %v856
        %v1011 = vunpack.c.l.b16 %v857
        %v1012 = vunpack.c.l.b16 %v858
        %v1013 = vunpack.c.h.b16 %v858
        %v1014 = vunpack.c.l.b16 %v859
        %v1015 = vunpack.c.h.b16 %v859
        %v1016 = vunpack.c.l.b16 %v860
        %v1017 = vunpack.c.l.b16 %v861
        %v1018 = vunpack.c.h.b16 %v861
        %v1019 = vunpack.c.l.b16 %v862
        %v1020 = vunpack.c.h.b16 %v862
        %v1021 = vunpack.c.l.b16 %v863
        %v1022 = vunpack.c.l.b16 %v864
        %v1023 = vunpack.c.h.b16 %v864
        %v1024 = vunpack.c.l.b16 %v865
        %v1025 = vunpack.c.h.b16 %v865
        %v1026 = vunpack.c.l.b16 %v866
        %v1027 = vunpack.c.l.b16 %v867
        %v1028 = vunpack.c.h.b16 %v867
        %v1029 = vunpack.c.l.b16 %v868
        %v1030 = vunpack.c.h.b16 %v868
        %v1031 = vunpack.c.l.b16 %v869
        %v1032 = vunpack.c.l.b16 %v870
        %v1033 = vunpack.c.h.b16 %v870
        %v1034 = vunpack.c.l.b16 %v871
        %v1035 = vunpack.c.h.b16 %v871
        %v1036 = vunpack.c.l.b16 %v872
        %v1037 = vunpack.c.l.b16 %v873
        %v1038 = vunpack.c.h.b16 %v873
        %v1039 = vunpack.c.l.b16 %v874
        %v1040 = vunpack.c.h.b16 %v874
        %v1041 = vunpack.c.l.b16 %v875
        %v1042 = vunpack.c.l.b16 %v876
        %v1043 = vunpack.c.h.b16 %v876
        %v1044 = vunpack.c.l.b16 %v877
        %v1045 = vunpack.c.h.b16 %v877
        %v1046 = vunpack.c.l.b16 %v878
        %v1047 = vunpack.c.l.b16 %v879
        %v1048 = vunpack.c.h.b16 %v879
        %v1049 = vunpack.c.l.b16 %v880
        %v1050 = vunpack.c.h.b16 %v880
        %v1051 = vunpack.c.l.b16 %v881
        %v1052 = vunpack.c.l.b16 %v882
        %v1053 = vunpack.c.h.b16 %v882
        %v1054 = vunpack.c.l.b16 %v883
        %v1055 = vunpack.c.h.b16 %v883
        %v1056 = vunpack.c.l.b16 %v884
        %v1057 = vunpack.c.l.b16 %v885
        %v1058 = vunpack.c.h.b16 %v885
        %v1059 = vunpack.c.l.b16 %v886
        %v1060 = vunpack.c.h.b16 %v886
        %v1061 = vunpack.c.l.b16 %v887
        %v1062 = vunpack.c.l.b16 %v888
        %v1063 = vunpack.c.h.b16 %v888
        %v1064 = vunpack.c.l.b16 %v889
        %v1065 = vunpack.c.h.b16 %v889
        %v1066 = vunpack.c.l.b16 %v890
        %v1067 = vunpack.c.l.b16 %v891
        %v1068 = vunpack.c.h.b16 %v891
        %v1069 = vunpack.c.l.b16 %v892
        %v1070 = vunpack.c.h.b16 %v892
        %v1071 = vunpack.c.l.b16 %v893
        %v1072 = vunpack.c.l.b16 %v894
        %v1073 = vunpack.c.h.b16 %v894
        %v1074 = vunpack.c.l.b16 %v895
        %v1075 = vunpack.c.h.b16 %v895
        %v1076 = vunpack.c.l.b16 %v896
        %v1077 = vunpack.c.l.b16 %v897
        %v1078 = vunpack.c.h.b16 %v897
        %v1079 = vunpack.c.l.b16 %v898
        %v1080 = vunpack.c.h.b16 %v898
        %v1081 = vunpack.c.l.b16 %v899
        %v1082 = vunpack.c.l.b16 %v900
        %v1083 = vunpack.c.h.b16 %v900
        %v1084 = vunpack.c.l.b16 %v901
        %v1085 = vunpack.c.h.b16 %v901
        %v1086 = vunpack.c.l.b16 %v902
        %v1087 = vunpack.c.l.b16 %v903
        %v1088 = vunpack.c.h.b16 %v903
        %v1089 = vunpack.c.l.b16 %v904
        %v1090 = vunpack.c.h.b16 %v904
        %v1091 = vunpack.c.l.b16 %v905
        %v1092 = vunpack.c.l.b16 %v906
        %v1093 = vunpack.c.h.b16 %v906
        %v1094 = vunpack.c.l.b16 %v907
        %v1095 = vunpack.c.h.b16 %v907
        %v1096 = vunpack.c.l.b16 %v908
        %v1097 = vunpack.c.l.b16 %v909
        %v1098 = vunpack.c.h.b16 %v909
        %v1099 = vunpack.c.l.b16 %v910
        %v1100 = vunpack.c.h.b16 %v910
        %v1101 = vunpack.c.l.b16 %v911
        %v1102 = vunpack.c.l.b16 %v912
        %v1103 = vunpack.c.h.b16 %v912
        %v1104 = vunpack.c.l.b16 %v913
        %v1105 = vunpack.c.h.b16 %v913
        %v1106 = vunpack.c.l.b16 %v914
        %v1107 = vpack.c.b16 %v992, %v987
        %v1108 = vpack.c.b16 %v993, %v988
        %v1109 = vpack.c.b16 %v994, %v989
        %v1110 = vpack.c.b16 %v995, %v990
        %v1111 = vpack.c.b16 %v996, %v991
        %v1112 = vpack.c.b16 %v1002, %v997
        %v1113 = vpack.c.b16 %v1003, %v998
        %v1114 = vpack.c.b16 %v1004, %v999
        %v1115 = vpack.c.b16 %v1005, %v1000
        %v1116 = vpack.c.b16 %v1006, %v1001
        %v1117 = vpack.c.b16 %v1012, %v1007
        %v1118 = vpack.c.b16 %v1013, %v1008
        %v1119 = vpack.c.b16 %v1014, %v1009
        %v1120 = vpack.c.b16 %v1015, %v1010
        %v1121 = vpack.c.b16 %v1016, %v1011
        %v1122 = vpack.c.b16 %v1022, %v1017
        %v1123 = vpack.c.b16 %v1023, %v1018
        %v1124 = vpack.c.b16 %v1024, %v1019
        %v1125 = vpack.c.b16 %v1025, %v1020
        %v1126 = vpack.c.b16 %v1026, %v1021
        %v1127 = vpack.c.b16 %v1032, %v1027
        %v1128 = vpack.c.b16 %v1033, %v1028
        %v1129 = vpack.c.b16 %v1034, %v1029
        %v1130 = vpack.c.b16 %v1035, %v1030
        %v1131 = vpack.c.b16 %v1036, %v1031
        %v1132 = vpack.c.b16 %v1042, %v1037
        %v1133 = vpack.c.b16 %v1043, %v1038
        %v1134 = vpack.c.b16 %v1044, %v1039
        %v1135 = vpack.c.b16 %v1045, %v1040
        %v1136 = vpack.c.b16 %v1046, %v1041
        %v1137 = vpack.c.b16 %v1052, %v1047
        %v1138 = vpack.c.b16 %v1053, %v1048
        %v1139 = vpack.c.b16 %v1054, %v1049
        %v1140 = vpack.c.b16 %v1055, %v1050
        %v1141 = vpack.c.b16 %v1056, %v1051
        %v1142 = vpack.c.b16 %v1062, %v1057
        %v1143 = vpack.c.b16 %v1063, %v1058
        %v1144 = vpack.c.b16 %v1064, %v1059
        %v1145 = vpack.c.b16 %v1065, %v1060
        %v1146 = vpack.c.b16 %v1066, %v1061
        %v1147 = vpack.c.b16 %v1072, %v1067
        %v1148 = vpack.c.b16 %v1073, %v1068
        %v1149 = vpack.c.b16 %v1074, %v1069
        %v1150 = vpack.c.b16 %v1075, %v1070
        %v1151 = vpack.c.b16 %v1076, %v1071
        %v1152 = vpack.c.b16 %v1082, %v1077
        %v1153 = vpack.c.b16 %v1083, %v1078
        %v1154 = vpack.c.b16 %v1084, %v1079
        %v1155 = vpack.c.b16 %v1085, %v1080
        %v1156 = vpack.c.b16 %v1086, %v1081
        %v1157 = vpack.c.b16 %v1092, %v1087
        %v1158 = vpack.c.b16 %v1093, %v1088
        %v1159 = vpack.c.b16 %v1094, %v1089
        %v1160 = vpack.c.b16 %v1095, %v1090
        %v1161 = vpack.c.b16 %v1096, %v1091
        %v1162 = vpack.c.b16 %v1102, %v1097
        %v1163 = vpack.c.b16 %v1103, %v1098
        %v1164 = vpack.c.b16 %v1104, %v1099
        %v1165 = vpack.c.b16 %v1105, %v1100
        %v1166 = vpack.c.b16 %v1106, %v1101
        %vm1215 = vcmask 785408
        %v1217 = vsel %vm1215, %v1111, 0
        %v1220 = vsel %vm1215, %v1116, 0
        %v1223 = vsel %vm1215, %v1121, 0
        %v1226 = vsel %vm1215, %v1126, 0
        %v1229 = vsel %vm1215, %v1131, 0
        %v1232 = vsel %vm1215, %v1136, 0
        %v1235 = vsel %vm1215, %v1141, 0
        %v1238 = vsel %vm1215, %v1146, 0
        %v1241 = vsel %vm1215, %v1151, 0
        %v1244 = vsel %vm1215, %v1156, 0
        %v1247 = vsel %vm1215, %v1161, 0
        %v1250 = vsel %vm1215, %v1166, 0
        %1252 = vmatpush.bf16.msra.mxu0 %v733
        %1253 = vmatpush.bf16.msra.mxu0 %v731
        %1254 = vmatpush.bf16.msra.mxu0 %v729
        %1255 = vmatpush.bf16.msra.mxu0 %v727
        %1256 = vmatpush.bf16.msra.mxu0 %v725
        %1257 = vmatpush.bf16.msra.mxu0 %v723
        %1258 = vmatpush.bf16.msra.mxu0 %v721
        %1259 = vmatpush.bf16.msra.mxu0 %v719
        %1260 = vmatmul.bf16.gmra.mxu0 %v1107
        %v1261 = vpop.f32.mrf.mxu0
        %v1262 = vadd.f32 0.0, %v1261
        %v1263 = vpop.f32.mrf.mxu0
        %v1264 = vadd.f32 0.0, %v1263
        %1265 = vmatmul.bf16.gmra.mxu0 %v1112
        %v1266 = vpop.f32.mrf.mxu0
        %v1267 = vadd.f32 0.0, %v1266
        %v1268 = vpop.f32.mrf.mxu0
        %v1269 = vadd.f32 0.0, %v1268
        %1270 = vmatmul.bf16.gmra.mxu0 %v1117
        %v1271 = vpop.f32.mrf.mxu0
        %v1272 = vadd.f32 0.0, %v1271
        %v1273 = vpop.f32.mrf.mxu0
        %v1274 = vadd.f32 0.0, %v1273
        %1275 = vmatmul.bf16.gmra.mxu0 %v1122
        %v1276 = vpop.f32.mrf.mxu0
        %v1277 = vadd.f32 0.0, %v1276
        %v1278 = vpop.f32.mrf.mxu0
        %v1279 = vadd.f32 0.0, %v1278
        %1280 = vmatmul.bf16.gmra.mxu0 %v1127
        %v1281 = vpop.f32.mrf.mxu0
        %v1282 = vadd.f32 0.0, %v1281
        %v1283 = vpop.f32.mrf.mxu0
        %v1284 = vadd.f32 0.0, %v1283
        %1285 = vmatmul.bf16.gmra.mxu0 %v1132
        %v1286 = vpop.f32.mrf.mxu0
        %v1287 = vadd.f32 0.0, %v1286
        %v1288 = vpop.f32.mrf.mxu0
        %v1289 = vadd.f32 0.0, %v1288
        %1290 = vmatmul.bf16.gmra.mxu0 %v1137
        %v1291 = vpop.f32.mrf.mxu0
        %v1292 = vadd.f32 0.0, %v1291
        %v1293 = vpop.f32.mrf.mxu0
        %v1294 = vadd.f32 0.0, %v1293
        %1295 = vmatmul.bf16.gmra.mxu0 %v1142
        %v1296 = vpop.f32.mrf.mxu0
        %v1297 = vadd.f32 0.0, %v1296
        %v1298 = vpop.f32.mrf.mxu0
        %v1299 = vadd.f32 0.0, %v1298
        %1300 = vmatmul.bf16.gmra.mxu0 %v1147
        %v1301 = vpop.f32.mrf.mxu0
        %v1302 = vadd.f32 0.0, %v1301
        %v1303 = vpop.f32.mrf.mxu0
        %v1304 = vadd.f32 0.0, %v1303
        %1305 = vmatmul.bf16.gmra.mxu0 %v1152
        %v1306 = vpop.f32.mrf.mxu0
        %v1307 = vadd.f32 0.0, %v1306
        %v1308 = vpop.f32.mrf.mxu0
        %v1309 = vadd.f32 0.0, %v1308
        %1310 = vmatmul.bf16.gmra.mxu0 %v1157
        %v1311 = vpop.f32.mrf.mxu0
        %v1312 = vadd.f32 0.0, %v1311
        %v1313 = vpop.f32.mrf.mxu0
        %v1314 = vadd.f32 0.0, %v1313
        %1315 = vmatmul.bf16.gmra.mxu0 %v1162
        %v1316 = vpop.f32.mrf.mxu0
        %v1317 = vadd.f32 0.0, %v1316
        %v1318 = vpop.f32.mrf.mxu0
        %v1319 = vadd.f32 0.0, %v1318
        %1320 = vdwg.mxu0
        %1321 = vmatpush.bf16.msra.mxu0 %v749
        %1322 = vmatpush.bf16.msra.mxu0 %v747
        %1323 = vmatpush.bf16.msra.mxu0 %v745
        %1324 = vmatpush.bf16.msra.mxu0 %v743
        %1325 = vmatpush.bf16.msra.mxu0 %v741
        %1326 = vmatpush.bf16.msra.mxu0 %v739
        %1327 = vmatpush.bf16.msra.mxu0 %v737
        %1328 = vmatpush.bf16.msra.mxu0 %v735
        %1329 = vmatmul.bf16.gmra.mxu0 %v1108
        %v1330 = vpop.f32.mrf.mxu0
        %v1331 = vadd.f32 %v1262, %v1330
        %v1332 = vpop.f32.mrf.mxu0
        %v1333 = vadd.f32 %v1264, %v1332
        %1334 = vmatmul.bf16.gmra.mxu0 %v1113
        %v1335 = vpop.f32.mrf.mxu0
        %v1336 = vadd.f32 %v1267, %v1335
        %v1337 = vpop.f32.mrf.mxu0
        %v1338 = vadd.f32 %v1269, %v1337
        %1339 = vmatmul.bf16.gmra.mxu0 %v1118
        %v1340 = vpop.f32.mrf.mxu0
        %v1341 = vadd.f32 %v1272, %v1340
        %v1342 = vpop.f32.mrf.mxu0
        %v1343 = vadd.f32 %v1274, %v1342
        %1344 = vmatmul.bf16.gmra.mxu0 %v1123
        %v1345 = vpop.f32.mrf.mxu0
        %v1346 = vadd.f32 %v1277, %v1345
        %v1347 = vpop.f32.mrf.mxu0
        %v1348 = vadd.f32 %v1279, %v1347
        %1349 = vmatmul.bf16.gmra.mxu0 %v1128
        %v1350 = vpop.f32.mrf.mxu0
        %v1351 = vadd.f32 %v1282, %v1350
        %v1352 = vpop.f32.mrf.mxu0
        %v1353 = vadd.f32 %v1284, %v1352
        %1354 = vmatmul.bf16.gmra.mxu0 %v1133
        %v1355 = vpop.f32.mrf.mxu0
        %v1356 = vadd.f32 %v1287, %v1355
        %v1357 = vpop.f32.mrf.mxu0
        %v1358 = vadd.f32 %v1289, %v1357
        %1359 = vmatmul.bf16.gmra.mxu0 %v1138
        %v1360 = vpop.f32.mrf.mxu0
        %v1361 = vadd.f32 %v1292, %v1360
        %v1362 = vpop.f32.mrf.mxu0
        %v1363 = vadd.f32 %v1294, %v1362
        %1364 = vmatmul.bf16.gmra.mxu0 %v1143
        %v1365 = vpop.f32.mrf.mxu0
        %v1366 = vadd.f32 %v1297, %v1365
        %v1367 = vpop.f32.mrf.mxu0
        %v1368 = vadd.f32 %v1299, %v1367
        %1369 = vmatmul.bf16.gmra.mxu0 %v1148
        %v1370 = vpop.f32.mrf.mxu0
        %v1371 = vadd.f32 %v1302, %v1370
        %v1372 = vpop.f32.mrf.mxu0
        %v1373 = vadd.f32 %v1304, %v1372
        %1374 = vmatmul.bf16.gmra.mxu0 %v1153
        %v1375 = vpop.f32.mrf.mxu0
        %v1376 = vadd.f32 %v1307, %v1375
        %v1377 = vpop.f32.mrf.mxu0
        %v1378 = vadd.f32 %v1309, %v1377
        %1379 = vmatmul.bf16.gmra.mxu0 %v1158
        %v1380 = vpop.f32.mrf.mxu0
        %v1381 = vadd.f32 %v1312, %v1380
        %v1382 = vpop.f32.mrf.mxu0
        %v1383 = vadd.f32 %v1314, %v1382
        %1384 = vmatmul.bf16.gmra.mxu0 %v1163
        %v1385 = vpop.f32.mrf.mxu0
        %v1386 = vadd.f32 %v1317, %v1385
        %v1387 = vpop.f32.mrf.mxu0
        %v1388 = vadd.f32 %v1319, %v1387
        %1389 = vdwg.mxu0
        %1390 = vmatpush.bf16.msra.mxu0 %v765
        %1391 = vmatpush.bf16.msra.mxu0 %v763
        %1392 = vmatpush.bf16.msra.mxu0 %v761
        %1393 = vmatpush.bf16.msra.mxu0 %v759
        %1394 = vmatpush.bf16.msra.mxu0 %v757
        %1395 = vmatpush.bf16.msra.mxu0 %v755
        %1396 = vmatpush.bf16.msra.mxu0 %v753
        %1397 = vmatpush.bf16.msra.mxu0 %v751
        %1398 = vmatmul.bf16.gmra.mxu0 %v1109
        %v1399 = vpop.f32.mrf.mxu0
        %v1400 = vadd.f32 %v1331, %v1399
        %v1401 = vpop.f32.mrf.mxu0
        %v1402 = vadd.f32 %v1333, %v1401
        %1403 = vmatmul.bf16.gmra.mxu0 %v1114
        %v1404 = vpop.f32.mrf.mxu0
        %v1405 = vadd.f32 %v1336, %v1404
        %v1406 = vpop.f32.mrf.mxu0
        %v1407 = vadd.f32 %v1338, %v1406
        %1408 = vmatmul.bf16.gmra.mxu0 %v1119
        %v1409 = vpop.f32.mrf.mxu0
        %v1410 = vadd.f32 %v1341, %v1409
        %v1411 = vpop.f32.mrf.mxu0
        %v1412 = vadd.f32 %v1343, %v1411
        %1413 = vmatmul.bf16.gmra.mxu0 %v1124
        %v1414 = vpop.f32.mrf.mxu0
        %v1415 = vadd.f32 %v1346, %v1414
        %v1416 = vpop.f32.mrf.mxu0
        %v1417 = vadd.f32 %v1348, %v1416
        %1418 = vmatmul.bf16.gmra.mxu0 %v1129
        %v1419 = vpop.f32.mrf.mxu0
        %v1420 = vadd.f32 %v1351, %v1419
        %v1421 = vpop.f32.mrf.mxu0
        %v1422 = vadd.f32 %v1353, %v1421
        %1423 = vmatmul.bf16.gmra.mxu0 %v1134
        %v1424 = vpop.f32.mrf.mxu0
        %v1425 = vadd.f32 %v1356, %v1424
        %v1426 = vpop.f32.mrf.mxu0
        %v1427 = vadd.f32 %v1358, %v1426
        %1428 = vmatmul.bf16.gmra.mxu0 %v1139
        %v1429 = vpop.f32.mrf.mxu0
        %v1430 = vadd.f32 %v1361, %v1429
        %v1431 = vpop.f32.mrf.mxu0
        %v1432 = vadd.f32 %v1363, %v1431
        %1433 = vmatmul.bf16.gmra.mxu0 %v1144
        %v1434 = vpop.f32.mrf.mxu0
        %v1435 = vadd.f32 %v1366, %v1434
        %v1436 = vpop.f32.mrf.mxu0
        %v1437 = vadd.f32 %v1368, %v1436
        %1438 = vmatmul.bf16.gmra.mxu0 %v1149
        %v1439 = vpop.f32.mrf.mxu0
        %v1440 = vadd.f32 %v1371, %v1439
        %v1441 = vpop.f32.mrf.mxu0
        %v1442 = vadd.f32 %v1373, %v1441
        %1443 = vmatmul.bf16.gmra.mxu0 %v1154
        %v1444 = vpop.f32.mrf.mxu0
        %v1445 = vadd.f32 %v1376, %v1444
        %v1446 = vpop.f32.mrf.mxu0
        %v1447 = vadd.f32 %v1378, %v1446
        %1448 = vmatmul.bf16.gmra.mxu0 %v1159
        %v1449 = vpop.f32.mrf.mxu0
        %v1450 = vadd.f32 %v1381, %v1449
        %v1451 = vpop.f32.mrf.mxu0
        %v1452 = vadd.f32 %v1383, %v1451
        %1453 = vmatmul.bf16.gmra.mxu0 %v1164
        %v1454 = vpop.f32.mrf.mxu0
        %v1455 = vadd.f32 %v1386, %v1454
        %v1456 = vpop.f32.mrf.mxu0
        %v1457 = vadd.f32 %v1388, %v1456
        %1458 = vdwg.mxu0
        %1459 = vmatpush.bf16.msra.mxu0 %v781
        %1460 = vmatpush.bf16.msra.mxu0 %v779
        %1461 = vmatpush.bf16.msra.mxu0 %v777
        %1462 = vmatpush.bf16.msra.mxu0 %v775
        %1463 = vmatpush.bf16.msra.mxu0 %v773
        %1464 = vmatpush.bf16.msra.mxu0 %v771
        %1465 = vmatpush.bf16.msra.mxu0 %v769
        %1466 = vmatpush.bf16.msra.mxu0 %v767
        %1467 = vmatmul.bf16.gmra.mxu0 %v1110
        %v1468 = vpop.f32.mrf.mxu0
        %v1469 = vadd.f32 %v1400, %v1468
        %v1470 = vpop.f32.mrf.mxu0
        %v1471 = vadd.f32 %v1402, %v1470
        %1472 = vmatmul.bf16.gmra.mxu0 %v1115
        %v1473 = vpop.f32.mrf.mxu0
        %v1474 = vadd.f32 %v1405, %v1473
        %v1475 = vpop.f32.mrf.mxu0
        %v1476 = vadd.f32 %v1407, %v1475
        %1477 = vmatmul.bf16.gmra.mxu0 %v1120
        %v1478 = vpop.f32.mrf.mxu0
        %v1479 = vadd.f32 %v1410, %v1478
        %v1480 = vpop.f32.mrf.mxu0
        %v1481 = vadd.f32 %v1412, %v1480
        %1482 = vmatmul.bf16.gmra.mxu0 %v1125
        %v1483 = vpop.f32.mrf.mxu0
        %v1484 = vadd.f32 %v1415, %v1483
        %v1485 = vpop.f32.mrf.mxu0
        %v1486 = vadd.f32 %v1417, %v1485
        %1487 = vmatmul.bf16.gmra.mxu0 %v1130
        %v1488 = vpop.f32.mrf.mxu0
        %v1489 = vadd.f32 %v1420, %v1488
        %v1490 = vpop.f32.mrf.mxu0
        %v1491 = vadd.f32 %v1422, %v1490
        %1492 = vmatmul.bf16.gmra.mxu0 %v1135
        %v1493 = vpop.f32.mrf.mxu0
        %v1494 = vadd.f32 %v1425, %v1493
        %v1495 = vpop.f32.mrf.mxu0
        %v1496 = vadd.f32 %v1427, %v1495
        %1497 = vmatmul.bf16.gmra.mxu0 %v1140
        %v1498 = vpop.f32.mrf.mxu0
        %v1499 = vadd.f32 %v1430, %v1498
        %v1500 = vpop.f32.mrf.mxu0
        %v1501 = vadd.f32 %v1432, %v1500
        %1502 = vmatmul.bf16.gmra.mxu0 %v1145
        %v1503 = vpop.f32.mrf.mxu0
        %v1504 = vadd.f32 %v1435, %v1503
        %v1505 = vpop.f32.mrf.mxu0
        %v1506 = vadd.f32 %v1437, %v1505
        %1507 = vmatmul.bf16.gmra.mxu0 %v1150
        %v1508 = vpop.f32.mrf.mxu0
        %v1509 = vadd.f32 %v1440, %v1508
        %v1510 = vpop.f32.mrf.mxu0
        %v1511 = vadd.f32 %v1442, %v1510
        %1512 = vmatmul.bf16.gmra.mxu0 %v1155
        %v1513 = vpop.f32.mrf.mxu0
        %v1514 = vadd.f32 %v1445, %v1513
        %v1515 = vpop.f32.mrf.mxu0
        %v1516 = vadd.f32 %v1447, %v1515
        %1517 = vmatmul.bf16.gmra.mxu0 %v1160
        %v1518 = vpop.f32.mrf.mxu0
        %v1519 = vadd.f32 %v1450, %v1518
        %v1520 = vpop.f32.mrf.mxu0
        %v1521 = vadd.f32 %v1452, %v1520
        %1522 = vmatmul.bf16.gmra.mxu0 %v1165
        %v1523 = vpop.f32.mrf.mxu0
        %v1524 = vadd.f32 %v1455, %v1523
        %v1525 = vpop.f32.mrf.mxu0
        %v1526 = vadd.f32 %v1457, %v1525
        %1527 = vdwg.mxu0
        %1528 = vmatpush.bf16.msra.mxu0 0
        %1529 = vmatpush.bf16.msra.mxu0 0
        %1530 = vmatpush.bf16.msra.mxu0 %v793
        %1531 = vmatpush.bf16.msra.mxu0 %v791
        %1532 = vmatpush.bf16.msra.mxu0 %v789
        %1533 = vmatpush.bf16.msra.mxu0 %v787
        %1534 = vmatpush.bf16.msra.mxu0 %v785
        %1535 = vmatpush.bf16.msra.mxu0 %v783
        %1536 = vmatmul.bf16.gmra.mxu0 %v1217
        %v1537 = vpop.f32.mrf.mxu0
        %v1538 = vadd.f32 %v1469, %v1537
        %v1539 = vpop.f32.mrf.mxu0
        %v1540 = vadd.f32 %v1471, %v1539
        %1541 = vmatmul.bf16.gmra.mxu0 %v1220
        %v1542 = vpop.f32.mrf.mxu0
        %v1543 = vadd.f32 %v1474, %v1542
        %v1544 = vpop.f32.mrf.mxu0
        %v1545 = vadd.f32 %v1476, %v1544
        %1546 = vmatmul.bf16.gmra.mxu0 %v1223
        %v1547 = vpop.f32.mrf.mxu0
        %v1548 = vadd.f32 %v1479, %v1547
        %v1549 = vpop.f32.mrf.mxu0
        %v1550 = vadd.f32 %v1481, %v1549
        %1551 = vmatmul.bf16.gmra.mxu0 %v1226
        %v1552 = vpop.f32.mrf.mxu0
        %v1553 = vadd.f32 %v1484, %v1552
        %v1554 = vpop.f32.mrf.mxu0
        %v1555 = vadd.f32 %v1486, %v1554
        %1556 = vmatmul.bf16.gmra.mxu0 %v1229
        %v1557 = vpop.f32.mrf.mxu0
        %v1558 = vadd.f32 %v1489, %v1557
        %v1559 = vpop.f32.mrf.mxu0
        %v1560 = vadd.f32 %v1491, %v1559
        %1561 = vmatmul.bf16.gmra.mxu0 %v1232
        %v1562 = vpop.f32.mrf.mxu0
        %v1563 = vadd.f32 %v1494, %v1562
        %v1564 = vpop.f32.mrf.mxu0
        %v1565 = vadd.f32 %v1496, %v1564
        %1566 = vmatmul.bf16.gmra.mxu0 %v1235
        %v1567 = vpop.f32.mrf.mxu0
        %v1568 = vadd.f32 %v1499, %v1567
        %v1569 = vpop.f32.mrf.mxu0
        %v1570 = vadd.f32 %v1501, %v1569
        %1571 = vmatmul.bf16.gmra.mxu0 %v1238
        %v1572 = vpop.f32.mrf.mxu0
        %v1573 = vadd.f32 %v1504, %v1572
        %v1574 = vpop.f32.mrf.mxu0
        %v1575 = vadd.f32 %v1506, %v1574
        %1576 = vmatmul.bf16.gmra.mxu0 %v1241
        %v1577 = vpop.f32.mrf.mxu0
        %v1578 = vadd.f32 %v1509, %v1577
        %v1579 = vpop.f32.mrf.mxu0
        %v1580 = vadd.f32 %v1511, %v1579
        %1581 = vmatmul.bf16.gmra.mxu0 %v1244
        %v1582 = vpop.f32.mrf.mxu0
        %v1583 = vadd.f32 %v1514, %v1582
        %v1584 = vpop.f32.mrf.mxu0
        %v1585 = vadd.f32 %v1516, %v1584
        %1586 = vmatmul.bf16.gmra.mxu0 %v1247
        %v1587 = vpop.f32.mrf.mxu0
        %v1588 = vadd.f32 %v1519, %v1587
        %v1589 = vpop.f32.mrf.mxu0
        %v1590 = vadd.f32 %v1521, %v1589
        %1591 = vmatmul.bf16.gmra.mxu0 %v1250
        %v1592 = vpop.f32.mrf.mxu0
        %v1593 = vadd.f32 %v1524, %v1592
        %v1594 = vpop.f32.mrf.mxu0
        %v1595 = vadd.f32 %v1526, %v1594
        %1596 = vdwg.mxu0
        %1597 = vmatpush.bf16.msra.mxu0 %v734
        %1598 = vmatpush.bf16.msra.mxu0 %v732
        %1599 = vmatpush.bf16.msra.mxu0 %v730
        %1600 = vmatpush.bf16.msra.mxu0 %v728
        %1601 = vmatpush.bf16.msra.mxu0 %v726
        %1602 = vmatpush.bf16.msra.mxu0 %v724
        %1603 = vmatpush.bf16.msra.mxu0 %v722
        %1604 = vmatpush.bf16.msra.mxu0 %v720
        %1605 = vmatmul.bf16.gmra.mxu0 %v1107
        %v1606 = vpop.f32.mrf.mxu0
        %v1607 = vadd.f32 0.0, %v1606
        %v1608 = vpop.f32.mrf.mxu0
        %v1609 = vadd.f32 0.0, %v1608
        %1610 = vmatmul.bf16.gmra.mxu0 %v1112
        %v1611 = vpop.f32.mrf.mxu0
        %v1612 = vadd.f32 0.0, %v1611
        %v1613 = vpop.f32.mrf.mxu0
        %v1614 = vadd.f32 0.0, %v1613
        %1615 = vmatmul.bf16.gmra.mxu0 %v1117
        %v1616 = vpop.f32.mrf.mxu0
        %v1617 = vadd.f32 0.0, %v1616
        %v1618 = vpop.f32.mrf.mxu0
        %v1619 = vadd.f32 0.0, %v1618
        %1620 = vmatmul.bf16.gmra.mxu0 %v1122
        %v1621 = vpop.f32.mrf.mxu0
        %v1622 = vadd.f32 0.0, %v1621
        %v1623 = vpop.f32.mrf.mxu0
        %v1624 = vadd.f32 0.0, %v1623
        %1625 = vmatmul.bf16.gmra.mxu0 %v1127
        %v1626 = vpop.f32.mrf.mxu0
        %v1627 = vadd.f32 0.0, %v1626
        %v1628 = vpop.f32.mrf.mxu0
        %v1629 = vadd.f32 0.0, %v1628
        %1630 = vmatmul.bf16.gmra.mxu0 %v1132
        %v1631 = vpop.f32.mrf.mxu0
        %v1632 = vadd.f32 0.0, %v1631
        %v1633 = vpop.f32.mrf.mxu0
        %v1634 = vadd.f32 0.0, %v1633
        %1635 = vmatmul.bf16.gmra.mxu0 %v1137
        %v1636 = vpop.f32.mrf.mxu0
        %v1637 = vadd.f32 0.0, %v1636
        %v1638 = vpop.f32.mrf.mxu0
        %v1639 = vadd.f32 0.0, %v1638
        %1640 = vmatmul.bf16.gmra.mxu0 %v1142
        %v1641 = vpop.f32.mrf.mxu0
        %v1642 = vadd.f32 0.0, %v1641
        %v1643 = vpop.f32.mrf.mxu0
        %v1644 = vadd.f32 0.0, %v1643
        %1645 = vmatmul.bf16.gmra.mxu0 %v1147
        %v1646 = vpop.f32.mrf.mxu0
        %v1647 = vadd.f32 0.0, %v1646
        %v1648 = vpop.f32.mrf.mxu0
        %v1649 = vadd.f32 0.0, %v1648
        %1650 = vmatmul.bf16.gmra.mxu0 %v1152
        %v1651 = vpop.f32.mrf.mxu0
        %v1652 = vadd.f32 0.0, %v1651
        %v1653 = vpop.f32.mrf.mxu0
        %v1654 = vadd.f32 0.0, %v1653
        %1655 = vmatmul.bf16.gmra.mxu0 %v1157
        %v1656 = vpop.f32.mrf.mxu0
        %v1657 = vadd.f32 0.0, %v1656
        %v1658 = vpop.f32.mrf.mxu0
        %v1659 = vadd.f32 0.0, %v1658
        %1660 = vmatmul.bf16.gmra.mxu0 %v1162
        %v1661 = vpop.f32.mrf.mxu0
        %v1662 = vadd.f32 0.0, %v1661
        %v1663 = vpop.f32.mrf.mxu0
        %v1664 = vadd.f32 0.0, %v1663
        %1665 = vdwg.mxu0
        %1666 = vmatpush.bf16.msra.mxu0 %v750
        %1667 = vmatpush.bf16.msra.mxu0 %v748
        %1668 = vmatpush.bf16.msra.mxu0 %v746
        %1669 = vmatpush.bf16.msra.mxu0 %v744
        %1670 = vmatpush.bf16.msra.mxu0 %v742
        %1671 = vmatpush.bf16.msra.mxu0 %v740
        %1672 = vmatpush.bf16.msra.mxu0 %v738
        %1673 = vmatpush.bf16.msra.mxu0 %v736
        %1674 = vmatmul.bf16.gmra.mxu0 %v1108
        %v1675 = vpop.f32.mrf.mxu0
        %v1676 = vadd.f32 %v1607, %v1675
        %v1677 = vpop.f32.mrf.mxu0
        %v1678 = vadd.f32 %v1609, %v1677
        %1679 = vmatmul.bf16.gmra.mxu0 %v1113
        %v1680 = vpop.f32.mrf.mxu0
        %v1681 = vadd.f32 %v1612, %v1680
        %v1682 = vpop.f32.mrf.mxu0
        %v1683 = vadd.f32 %v1614, %v1682
        %1684 = vmatmul.bf16.gmra.mxu0 %v1118
        %v1685 = vpop.f32.mrf.mxu0
        %v1686 = vadd.f32 %v1617, %v1685
        %v1687 = vpop.f32.mrf.mxu0
        %v1688 = vadd.f32 %v1619, %v1687
        %1689 = vmatmul.bf16.gmra.mxu0 %v1123
        %v1690 = vpop.f32.mrf.mxu0
        %v1691 = vadd.f32 %v1622, %v1690
        %v1692 = vpop.f32.mrf.mxu0
        %v1693 = vadd.f32 %v1624, %v1692
        %1694 = vmatmul.bf16.gmra.mxu0 %v1128
        %v1695 = vpop.f32.mrf.mxu0
        %v1696 = vadd.f32 %v1627, %v1695
        %v1697 = vpop.f32.mrf.mxu0
        %v1698 = vadd.f32 %v1629, %v1697
        %1699 = vmatmul.bf16.gmra.mxu0 %v1133
        %v1700 = vpop.f32.mrf.mxu0
        %v1701 = vadd.f32 %v1632, %v1700
        %v1702 = vpop.f32.mrf.mxu0
        %v1703 = vadd.f32 %v1634, %v1702
        %1704 = vmatmul.bf16.gmra.mxu0 %v1138
        %v1705 = vpop.f32.mrf.mxu0
        %v1706 = vadd.f32 %v1637, %v1705
        %v1707 = vpop.f32.mrf.mxu0
        %v1708 = vadd.f32 %v1639, %v1707
        %1709 = vmatmul.bf16.gmra.mxu0 %v1143
        %v1710 = vpop.f32.mrf.mxu0
        %v1711 = vadd.f32 %v1642, %v1710
        %v1712 = vpop.f32.mrf.mxu0
        %v1713 = vadd.f32 %v1644, %v1712
        %1714 = vmatmul.bf16.gmra.mxu0 %v1148
        %v1715 = vpop.f32.mrf.mxu0
        %v1716 = vadd.f32 %v1647, %v1715
        %v1717 = vpop.f32.mrf.mxu0
        %v1718 = vadd.f32 %v1649, %v1717
        %1719 = vmatmul.bf16.gmra.mxu0 %v1153
        %v1720 = vpop.f32.mrf.mxu0
        %v1721 = vadd.f32 %v1652, %v1720
        %v1722 = vpop.f32.mrf.mxu0
        %v1723 = vadd.f32 %v1654, %v1722
        %1724 = vmatmul.bf16.gmra.mxu0 %v1158
        %v1725 = vpop.f32.mrf.mxu0
        %v1726 = vadd.f32 %v1657, %v1725
        %v1727 = vpop.f32.mrf.mxu0
        %v1728 = vadd.f32 %v1659, %v1727
        %1729 = vmatmul.bf16.gmra.mxu0 %v1163
        %v1730 = vpop.f32.mrf.mxu0
        %v1731 = vadd.f32 %v1662, %v1730
        %v1732 = vpop.f32.mrf.mxu0
        %v1733 = vadd.f32 %v1664, %v1732
        %1734 = vdwg.mxu0
        %1735 = vmatpush.bf16.msra.mxu0 %v766
        %1736 = vmatpush.bf16.msra.mxu0 %v764
        %1737 = vmatpush.bf16.msra.mxu0 %v762
        %1738 = vmatpush.bf16.msra.mxu0 %v760
        %1739 = vmatpush.bf16.msra.mxu0 %v758
        %1740 = vmatpush.bf16.msra.mxu0 %v756
        %1741 = vmatpush.bf16.msra.mxu0 %v754
        %1742 = vmatpush.bf16.msra.mxu0 %v752
        %1743 = vmatmul.bf16.gmra.mxu0 %v1109
        %v1744 = vpop.f32.mrf.mxu0
        %v1745 = vadd.f32 %v1676, %v1744
        %v1746 = vpop.f32.mrf.mxu0
        %v1747 = vadd.f32 %v1678, %v1746
        %1748 = vmatmul.bf16.gmra.mxu0 %v1114
        %v1749 = vpop.f32.mrf.mxu0
        %v1750 = vadd.f32 %v1681, %v1749
        %v1751 = vpop.f32.mrf.mxu0
        %v1752 = vadd.f32 %v1683, %v1751
        %1753 = vmatmul.bf16.gmra.mxu0 %v1119
        %v1754 = vpop.f32.mrf.mxu0
        %v1755 = vadd.f32 %v1686, %v1754
        %v1756 = vpop.f32.mrf.mxu0
        %v1757 = vadd.f32 %v1688, %v1756
        %1758 = vmatmul.bf16.gmra.mxu0 %v1124
        %v1759 = vpop.f32.mrf.mxu0
        %v1760 = vadd.f32 %v1691, %v1759
        %v1761 = vpop.f32.mrf.mxu0
        %v1762 = vadd.f32 %v1693, %v1761
        %1763 = vmatmul.bf16.gmra.mxu0 %v1129
        %v1764 = vpop.f32.mrf.mxu0
        %v1765 = vadd.f32 %v1696, %v1764
        %v1766 = vpop.f32.mrf.mxu0
        %v1767 = vadd.f32 %v1698, %v1766
        %1768 = vmatmul.bf16.gmra.mxu0 %v1134
        %v1769 = vpop.f32.mrf.mxu0
        %v1770 = vadd.f32 %v1701, %v1769
        %v1771 = vpop.f32.mrf.mxu0
        %v1772 = vadd.f32 %v1703, %v1771
        %1773 = vmatmul.bf16.gmra.mxu0 %v1139
        %v1774 = vpop.f32.mrf.mxu0
        %v1775 = vadd.f32 %v1706, %v1774
        %v1776 = vpop.f32.mrf.mxu0
        %v1777 = vadd.f32 %v1708, %v1776
        %1778 = vmatmul.bf16.gmra.mxu0 %v1144
        %v1779 = vpop.f32.mrf.mxu0
        %v1780 = vadd.f32 %v1711, %v1779
        %v1781 = vpop.f32.mrf.mxu0
        %v1782 = vadd.f32 %v1713, %v1781
        %1783 = vmatmul.bf16.gmra.mxu0 %v1149
        %v1784 = vpop.f32.mrf.mxu0
        %v1785 = vadd.f32 %v1716, %v1784
        %v1786 = vpop.f32.mrf.mxu0
        %v1787 = vadd.f32 %v1718, %v1786
        %1788 = vmatmul.bf16.gmra.mxu0 %v1154
        %v1789 = vpop.f32.mrf.mxu0
        %v1790 = vadd.f32 %v1721, %v1789
        %v1791 = vpop.f32.mrf.mxu0
        %v1792 = vadd.f32 %v1723, %v1791
        %1793 = vmatmul.bf16.gmra.mxu0 %v1159
        %v1794 = vpop.f32.mrf.mxu0
        %v1795 = vadd.f32 %v1726, %v1794
        %v1796 = vpop.f32.mrf.mxu0
        %v1797 = vadd.f32 %v1728, %v1796
        %1798 = vmatmul.bf16.gmra.mxu0 %v1164
        %v1799 = vpop.f32.mrf.mxu0
        %v1800 = vadd.f32 %v1731, %v1799
        %v1801 = vpop.f32.mrf.mxu0
        %v1802 = vadd.f32 %v1733, %v1801
        %1803 = vdwg.mxu0
        %1804 = vmatpush.bf16.msra.mxu0 %v782
        %1805 = vmatpush.bf16.msra.mxu0 %v780
        %1806 = vmatpush.bf16.msra.mxu0 %v778
        %1807 = vmatpush.bf16.msra.mxu0 %v776
        %1808 = vmatpush.bf16.msra.mxu0 %v774
        %1809 = vmatpush.bf16.msra.mxu0 %v772
        %1810 = vmatpush.bf16.msra.mxu0 %v770
        %1811 = vmatpush.bf16.msra.mxu0 %v768
        %1812 = vmatmul.bf16.gmra.mxu0 %v1110
        %v1813 = vpop.f32.mrf.mxu0
        %v1814 = vadd.f32 %v1745, %v1813
        %v1815 = vpop.f32.mrf.mxu0
        %v1816 = vadd.f32 %v1747, %v1815
        %1817 = vmatmul.bf16.gmra.mxu0 %v1115
        %v1818 = vpop.f32.mrf.mxu0
        %v1819 = vadd.f32 %v1750, %v1818
        %v1820 = vpop.f32.mrf.mxu0
        %v1821 = vadd.f32 %v1752, %v1820
        %1822 = vmatmul.bf16.gmra.mxu0 %v1120
        %v1823 = vpop.f32.mrf.mxu0
        %v1824 = vadd.f32 %v1755, %v1823
        %v1825 = vpop.f32.mrf.mxu0
        %v1826 = vadd.f32 %v1757, %v1825
        %1827 = vmatmul.bf16.gmra.mxu0 %v1125
        %v1828 = vpop.f32.mrf.mxu0
        %v1829 = vadd.f32 %v1760, %v1828
        %v1830 = vpop.f32.mrf.mxu0
        %v1831 = vadd.f32 %v1762, %v1830
        %1832 = vmatmul.bf16.gmra.mxu0 %v1130
        %v1833 = vpop.f32.mrf.mxu0
        %v1834 = vadd.f32 %v1765, %v1833
        %v1835 = vpop.f32.mrf.mxu0
        %v1836 = vadd.f32 %v1767, %v1835
        %1837 = vmatmul.bf16.gmra.mxu0 %v1135
        %v1838 = vpop.f32.mrf.mxu0
        %v1839 = vadd.f32 %v1770, %v1838
        %v1840 = vpop.f32.mrf.mxu0
        %v1841 = vadd.f32 %v1772, %v1840
        %1842 = vmatmul.bf16.gmra.mxu0 %v1140
        %v1843 = vpop.f32.mrf.mxu0
        %v1844 = vadd.f32 %v1775, %v1843
        %v1845 = vpop.f32.mrf.mxu0
        %v1846 = vadd.f32 %v1777, %v1845
        %1847 = vmatmul.bf16.gmra.mxu0 %v1145
        %v1848 = vpop.f32.mrf.mxu0
        %v1849 = vadd.f32 %v1780, %v1848
        %v1850 = vpop.f32.mrf.mxu0
        %v1851 = vadd.f32 %v1782, %v1850
        %1852 = vmatmul.bf16.gmra.mxu0 %v1150
        %v1853 = vpop.f32.mrf.mxu0
        %v1854 = vadd.f32 %v1785, %v1853
        %v1855 = vpop.f32.mrf.mxu0
        %v1856 = vadd.f32 %v1787, %v1855
        %1857 = vmatmul.bf16.gmra.mxu0 %v1155
        %v1858 = vpop.f32.mrf.mxu0
        %v1859 = vadd.f32 %v1790, %v1858
        %v1860 = vpop.f32.mrf.mxu0
        %v1861 = vadd.f32 %v1792, %v1860
        %1862 = vmatmul.bf16.gmra.mxu0 %v1160
        %v1863 = vpop.f32.mrf.mxu0
        %v1864 = vadd.f32 %v1795, %v1863
        %v1865 = vpop.f32.mrf.mxu0
        %v1866 = vadd.f32 %v1797, %v1865
        %1867 = vmatmul.bf16.gmra.mxu0 %v1165
        %v1868 = vpop.f32.mrf.mxu0
        %v1869 = vadd.f32 %v1800, %v1868
        %v1870 = vpop.f32.mrf.mxu0
        %v1871 = vadd.f32 %v1802, %v1870
        %1872 = vdwg.mxu0
        %1873 = vmatpush.bf16.msra.mxu0 0
        %1874 = vmatpush.bf16.msra.mxu0 0
        %1875 = vmatpush.bf16.msra.mxu0 %v794
        %1876 = vmatpush.bf16.msra.mxu0 %v792
        %1877 = vmatpush.bf16.msra.mxu0 %v790
        %1878 = vmatpush.bf16.msra.mxu0 %v788
        %1879 = vmatpush.bf16.msra.mxu0 %v786
        %1880 = vmatpush.bf16.msra.mxu0 %v784
        %1881 = vmatmul.bf16.gmra.mxu0 %v1217
        %v1882 = vpop.f32.mrf.mxu0
        %v1883 = vadd.f32 %v1814, %v1882
        %v1884 = vpop.f32.mrf.mxu0
        %v1885 = vadd.f32 %v1816, %v1884
        %1886 = vmatmul.bf16.gmra.mxu0 %v1220
        %v1887 = vpop.f32.mrf.mxu0
        %v1888 = vadd.f32 %v1819, %v1887
        %v1889 = vpop.f32.mrf.mxu0
        %v1890 = vadd.f32 %v1821, %v1889
        %1891 = vmatmul.bf16.gmra.mxu0 %v1223
        %v1892 = vpop.f32.mrf.mxu0
        %v1893 = vadd.f32 %v1824, %v1892
        %v1894 = vpop.f32.mrf.mxu0
        %v1895 = vadd.f32 %v1826, %v1894
        %1896 = vmatmul.bf16.gmra.mxu0 %v1226
        %v1897 = vpop.f32.mrf.mxu0
        %v1898 = vadd.f32 %v1829, %v1897
        %v1899 = vpop.f32.mrf.mxu0
        %v1900 = vadd.f32 %v1831, %v1899
        %1901 = vmatmul.bf16.gmra.mxu0 %v1229
        %v1902 = vpop.f32.mrf.mxu0
        %v1903 = vadd.f32 %v1834, %v1902
        %v1904 = vpop.f32.mrf.mxu0
        %v1905 = vadd.f32 %v1836, %v1904
        %1906 = vmatmul.bf16.gmra.mxu0 %v1232
        %v1907 = vpop.f32.mrf.mxu0
        %v1908 = vadd.f32 %v1839, %v1907
        %v1909 = vpop.f32.mrf.mxu0
        %v1910 = vadd.f32 %v1841, %v1909
        %1911 = vmatmul.bf16.gmra.mxu0 %v1235
        %v1912 = vpop.f32.mrf.mxu0
        %v1913 = vadd.f32 %v1844, %v1912
        %v1914 = vpop.f32.mrf.mxu0
        %v1915 = vadd.f32 %v1846, %v1914
        %1916 = vmatmul.bf16.gmra.mxu0 %v1238
        %v1917 = vpop.f32.mrf.mxu0
        %v1918 = vadd.f32 %v1849, %v1917
        %v1919 = vpop.f32.mrf.mxu0
        %v1920 = vadd.f32 %v1851, %v1919
        %1921 = vmatmul.bf16.gmra.mxu0 %v1241
        %v1922 = vpop.f32.mrf.mxu0
        %v1923 = vadd.f32 %v1854, %v1922
        %v1924 = vpop.f32.mrf.mxu0
        %v1925 = vadd.f32 %v1856, %v1924
        %1926 = vmatmul.bf16.gmra.mxu0 %v1244
        %v1927 = vpop.f32.mrf.mxu0
        %v1928 = vadd.f32 %v1859, %v1927
        %v1929 = vpop.f32.mrf.mxu0
        %v1930 = vadd.f32 %v1861, %v1929
        %1931 = vmatmul.bf16.gmra.mxu0 %v1247
        %v1932 = vpop.f32.mrf.mxu0
        %v1933 = vadd.f32 %v1864, %v1932
        %v1934 = vpop.f32.mrf.mxu0
        %v1935 = vadd.f32 %v1866, %v1934
        %1936 = vmatmul.bf16.gmra.mxu0 %v1250
        %v1937 = vpop.f32.mrf.mxu0
        %v1938 = vadd.f32 %v1869, %v1937
        %v1939 = vpop.f32.mrf.mxu0
        %v1940 = vadd.f32 %v1871, %v1939
        %1941 = vdwg.mxu0
        %v1942 = vadd.f32 %v795, %v1538
        %v1943 = vadd.f32 %v796, %v1883
        %v1944 = vadd.f32 %v797, %v1540
        %v1945 = vadd.f32 %v798, %v1885
        %v1946 = vadd.f32 %v799, %v1543
        %v1947 = vadd.f32 %v800, %v1888
        %v1948 = vadd.f32 %v801, %v1545
        %v1949 = vadd.f32 %v802, %v1890
        %v1950 = vadd.f32 %v803, %v1548
        %v1951 = vadd.f32 %v804, %v1893
        %v1952 = vadd.f32 %v805, %v1550
        %v1953 = vadd.f32 %v806, %v1895
        %v1954 = vadd.f32 %v807, %v1553
        %v1955 = vadd.f32 %v808, %v1898
        %v1956 = vadd.f32 %v809, %v1555
        %v1957 = vadd.f32 %v810, %v1900
        %v1958 = vadd.f32 %v811, %v1558
        %v1959 = vadd.f32 %v812, %v1903
        %v1960 = vadd.f32 %v813, %v1560
        %v1961 = vadd.f32 %v814, %v1905
        %v1962 = vadd.f32 %v815, %v1563
        %v1963 = vadd.f32 %v816, %v1908
        %v1964 = vadd.f32 %v817, %v1565
        %v1965 = vadd.f32 %v818, %v1910
        %v1966 = vadd.f32 %v819, %v1568
        %v1967 = vadd.f32 %v820, %v1913
        %v1968 = vadd.f32 %v821, %v1570
        %v1969 = vadd.f32 %v822, %v1915
        %v1970 = vadd.f32 %v823, %v1573
        %v1971 = vadd.f32 %v824, %v1918
        %v1972 = vadd.f32 %v825, %v1575
        %v1973 = vadd.f32 %v826, %v1920
        %v1974 = vadd.f32 %v827, %v1578
        %v1975 = vadd.f32 %v828, %v1923
        %v1976 = vadd.f32 %v829, %v1580
        %v1977 = vadd.f32 %v830, %v1925
        %v1978 = vadd.f32 %v831, %v1583
        %v1979 = vadd.f32 %v832, %v1928
        %v1980 = vadd.f32 %v833, %v1585
        %v1981 = vadd.f32 %v834, %v1930
        %v1982 = vadd.f32 %v835, %v1588
        %v1983 = vadd.f32 %v836, %v1933
        %v1984 = vadd.f32 %v837, %v1590
        %v1985 = vadd.f32 %v838, %v1935
        %v1986 = vadd.f32 %v839, %v1593
        %v1987 = vadd.f32 %v840, %v1938
        %v1988 = vadd.f32 %v841, %v1595
        %v1989 = vadd.f32 %v842, %v1940
        %1990 = vst [vmem:[#allocation2] sm:$0xff] %v1942
        %vm1991 = vcmask 556032
        %1992 = vst.msk [vmem:[#allocation2 + $0x8] sm:$0xff] %vm1991, %v1943
        %1993 = vst [vmem:[#allocation2 + $0x10] sm:$0xff] %v1944
        %1994 = vst.msk [vmem:[#allocation2 + $0x18] sm:$0xff] %vm1991, %v1945
        %1995 = vst [vmem:[#allocation2 + $0x20] sm:$0xff] %v1946
        %1996 = vst.msk [vmem:[#allocation2 + $0x28] sm:$0xff] %vm1991, %v1947
        %1997 = vst [vmem:[#allocation2 + $0x30] sm:$0xff] %v1948
        %1998 = vst.msk [vmem:[#allocation2 + $0x38] sm:$0xff] %vm1991, %v1949
        %1999 = vst [vmem:[#allocation2 + $0x40] sm:$0xff] %v1950
        %2000 = vst.msk [vmem:[#allocation2 + $0x48] sm:$0xff] %vm1991, %v1951
        %2001 = vst [vmem:[#allocation2 + $0x50] sm:$0xff] %v1952
        %2002 = vst.msk [vmem:[#allocation2 + $0x58] sm:$0xff] %vm1991, %v1953
        %2003 = vst [vmem:[#allocation2 + $0x60] sm:$0xff] %v1954
        %2004 = vst.msk [vmem:[#allocation2 + $0x68] sm:$0xff] %vm1991, %v1955
        %2005 = vst [vmem:[#allocation2 + $0x70] sm:$0xff] %v1956
        %2006 = vst.msk [vmem:[#allocation2 + $0x78] sm:$0xff] %vm1991, %v1957
        %2007 = vst [vmem:[#allocation2 + $0x80] sm:$0xff] %v1958
        %2008 = vst.msk [vmem:[#allocation2 + $0x88] sm:$0xff] %vm1991, %v1959
        %2009 = vst [vmem:[#allocation2 + $0x90] sm:$0xff] %v1960
        %2010 = vst.msk [vmem:[#allocation2 + $0x98] sm:$0xff] %vm1991, %v1961
        %2011 = vst [vmem:[#allocation2 + $0xa0] sm:$0xff] %v1962
        %2012 = vst.msk [vmem:[#allocation2 + $0xa8] sm:$0xff] %vm1991, %v1963
        %2013 = vst [vmem:[#allocation2 + $0xb0] sm:$0xff] %v1964
        %2014 = vst.msk [vmem:[#allocation2 + $0xb8] sm:$0xff] %vm1991, %v1965
        %2015 = vst [vmem:[#allocation2 + $0xc0] sm:$0xff] %v1966
        %2016 = vst.msk [vmem:[#allocation2 + $0xc8] sm:$0xff] %vm1991, %v1967
        %2017 = vst [vmem:[#allocation2 + $0xd0] sm:$0xff] %v1968
        %2018 = vst.msk [vmem:[#allocation2 + $0xd8] sm:$0xff] %vm1991, %v1969
        %2019 = vst [vmem:[#allocation2 + $0xe0] sm:$0xff] %v1970
        %2020 = vst.msk [vmem:[#allocation2 + $0xe8] sm:$0xff] %vm1991, %v1971
        %2021 = vst [vmem:[#allocation2 + $0xf0] sm:$0xff] %v1972
        %2022 = vst.msk [vmem:[#allocation2 + $0xf8] sm:$0xff] %vm1991, %v1973
        %2023 = vst [vmem:[#allocation2 + $0x100] sm:$0xff] %v1974
        %2024 = vst.msk [vmem:[#allocation2 + $0x108] sm:$0xff] %vm1991, %v1975
        %2025 = vst [vmem:[#allocation2 + $0x110] sm:$0xff] %v1976
        %2026 = vst.msk [vmem:[#allocation2 + $0x118] sm:$0xff] %vm1991, %v1977
        %2027 = vst [vmem:[#allocation2 + $0x120] sm:$0xff] %v1978
        %2028 = vst.msk [vmem:[#allocation2 + $0x128] sm:$0xff] %vm1991, %v1979
        %2029 = vst [vmem:[#allocation2 + $0x130] sm:$0xff] %v1980
        %2030 = vst.msk [vmem:[#allocation2 + $0x138] sm:$0xff] %vm1991, %v1981
        %2031 = vst [vmem:[#allocation2 + $0x140] sm:$0xff] %v1982
        %2032 = vst.msk [vmem:[#allocation2 + $0x148] sm:$0xff] %vm1991, %v1983
        %2033 = vst [vmem:[#allocation2 + $0x150] sm:$0xff] %v1984
        %2034 = vst.msk [vmem:[#allocation2 + $0x158] sm:$0xff] %vm1991, %v1985
        %2035 = vst [vmem:[#allocation2 + $0x160] sm:$0xff] %v1986
        %2036 = vst.msk [vmem:[#allocation2 + $0x168] sm:$0xff] %vm1991, %v1987
        %2037 = vst [vmem:[#allocation2 + $0x170] sm:$0xff] %v1988
        %2038 = vst.msk [vmem:[#allocation2 + $0x178] sm:$0xff] %vm1991, %v1989
        %p2039 = scmp.eq.s32.totalorder %s21, 2
        // Predicated region
        $region41: #{tpu_custom_call.1} parent=35 // pred_check
          %p2040 = pneg %p2039
        $region42: #{tpu_custom_call.1} parent=35 // pred_check_branch
          %2042 = sbr.rel (%p2040) target = $region44
        $region43: #{tpu_custom_call.1} parent=35 // pred_region
          %v2043 = vld [vmem:[#allocation2] sm:$0xff]
          %v2044 = vld [vmem:[#allocation2 + $0x8] sm:$0xff]
          %v2045 = vld [vmem:[#allocation2 + $0x10] sm:$0xff]
          %v2046 = vld [vmem:[#allocation2 + $0x18] sm:$0xff]
          %v2047 = vld [vmem:[#allocation2 + $0x20] sm:$0xff]
          %v2048 = vld [vmem:[#allocation2 + $0x28] sm:$0xff]
          %v2049 = vld [vmem:[#allocation2 + $0x30] sm:$0xff]
          %v2050 = vld [vmem:[#allocation2 + $0x38] sm:$0xff]
          %v2051 = vld [vmem:[#allocation2 + $0x40] sm:$0xff]
          %v2052 = vld [vmem:[#allocation2 + $0x48] sm:$0xff]
          %v2053 = vld [vmem:[#allocation2 + $0x50] sm:$0xff]
          %v2054 = vld [vmem:[#allocation2 + $0x58] sm:$0xff]
          %v2055 = vld [vmem:[#allocation2 + $0x60] sm:$0xff]
          %v2056 = vld [vmem:[#allocation2 + $0x68] sm:$0xff]
          %v2057 = vld [vmem:[#allocation2 + $0x70] sm:$0xff]
          %v2058 = vld [vmem:[#allocation2 + $0x78] sm:$0xff]
          %v2059 = vld [vmem:[#allocation2 + $0x80] sm:$0xff]
          %v2060 = vld [vmem:[#allocation2 + $0x88] sm:$0xff]
          %v2061 = vld [vmem:[#allocation2 + $0x90] sm:$0xff]
          %v2062 = vld [vmem:[#allocation2 + $0x98] sm:$0xff]
          %v2063 = vld [vmem:[#allocation2 + $0xa0] sm:$0xff]
          %v2064 = vld [vmem:[#allocation2 + $0xa8] sm:$0xff]
          %v2065 = vld [vmem:[#allocation2 + $0xb0] sm:$0xff]
          %v2066 = vld [vmem:[#allocation2 + $0xb8] sm:$0xff]
          %v2067 = vld [vmem:[#allocation2 + $0xc0] sm:$0xff]
          %v2068 = vld [vmem:[#allocation2 + $0xc8] sm:$0xff]
          %v2069 = vld [vmem:[#allocation2 + $0xd0] sm:$0xff]
          %v2070 = vld [vmem:[#allocation2 + $0xd8] sm:$0xff]
          %v2071 = vld [vmem:[#allocation2 + $0xe0] sm:$0xff]
          %v2072 = vld [vmem:[#allocation2 + $0xe8] sm:$0xff]
          %v2073 = vld [vmem:[#allocation2 + $0xf0] sm:$0xff]
          %v2074 = vld [vmem:[#allocation2 + $0xf8] sm:$0xff]
          %v2075 = vld [vmem:[#allocation2 + $0x100] sm:$0xff]
          %v2076 = vld [vmem:[#allocation2 + $0x108] sm:$0xff]
          %v2077 = vld [vmem:[#allocation2 + $0x110] sm:$0xff]
          %v2078 = vld [vmem:[#allocation2 + $0x118] sm:$0xff]
          %v2079 = vld [vmem:[#allocation2 + $0x120] sm:$0xff]
          %v2080 = vld [vmem:[#allocation2 + $0x128] sm:$0xff]
          %v2081 = vld [vmem:[#allocation2 + $0x130] sm:$0xff]
          %v2082 = vld [vmem:[#allocation2 + $0x138] sm:$0xff]
          %v2083 = vld [vmem:[#allocation2 + $0x140] sm:$0xff]
          %v2084 = vld [vmem:[#allocation2 + $0x148] sm:$0xff]
          %v2085 = vld [vmem:[#allocation2 + $0x150] sm:$0xff]
          %v2086 = vld [vmem:[#allocation2 + $0x158] sm:$0xff]
          %v2087 = vld [vmem:[#allocation2 + $0x160] sm:$0xff]
          %v2088 = vld [vmem:[#allocation2 + $0x168] sm:$0xff]
          %v2089 = vld [vmem:[#allocation2 + $0x170] sm:$0xff]
          %v2090 = vld [vmem:[#allocation2 + $0x178] sm:$0xff]
          %v2091 = vsel %vm1991, %v2044, 0.0
          %v2092 = vadd.f32 %v2043, %v2091
          %2093 = vadd.xlane.f32.xlu0 %v2092
          %v2094 = vpop.xlane.xlu0 %2093
          %v2095 = vsel %vm1991, %v2046, 0.0
          %v2096 = vadd.f32 %v2045, %v2095
          %2097 = vadd.xlane.f32.xlu0 %v2096
          %v2098 = vpop.xlane.xlu0 %2097
          %v2099 = vsel %vm1991, %v2048, 0.0
          %v2100 = vadd.f32 %v2047, %v2099
          %2101 = vadd.xlane.f32.xlu0 %v2100
          %v2102 = vpop.xlane.xlu0 %2101
          %v2103 = vsel %vm1991, %v2050, 0.0
          %v2104 = vadd.f32 %v2049, %v2103
          %2105 = vadd.xlane.f32.xlu0 %v2104
          %v2106 = vpop.xlane.xlu0 %2105
          %v2107 = vsel %vm1991, %v2052, 0.0
          %v2108 = vadd.f32 %v2051, %v2107
          %2109 = vadd.xlane.f32.xlu0 %v2108
          %v2110 = vpop.xlane.xlu0 %2109
          %v2111 = vsel %vm1991, %v2054, 0.0
          %v2112 = vadd.f32 %v2053, %v2111
          %2113 = vadd.xlane.f32.xlu0 %v2112
          %v2114 = vpop.xlane.xlu0 %2113
          %v2115 = vsel %vm1991, %v2056, 0.0
          %v2116 = vadd.f32 %v2055, %v2115
          %2117 = vadd.xlane.f32.xlu0 %v2116
          %v2118 = vpop.xlane.xlu0 %2117
          %v2119 = vsel %vm1991, %v2058, 0.0
          %v2120 = vadd.f32 %v2057, %v2119
          %2121 = vadd.xlane.f32.xlu0 %v2120
          %v2122 = vpop.xlane.xlu0 %2121
          %v2123 = vsel %vm1991, %v2060, 0.0
          %v2124 = vadd.f32 %v2059, %v2123
          %2125 = vadd.xlane.f32.xlu0 %v2124
          %v2126 = vpop.xlane.xlu0 %2125
          %v2127 = vsel %vm1991, %v2062, 0.0
          %v2128 = vadd.f32 %v2061, %v2127
          %2129 = vadd.xlane.f32.xlu0 %v2128
          %v2130 = vpop.xlane.xlu0 %2129
          %v2131 = vsel %vm1991, %v2064, 0.0
          %v2132 = vadd.f32 %v2063, %v2131
          %2133 = vadd.xlane.f32.xlu0 %v2132
          %v2134 = vpop.xlane.xlu0 %2133
          %v2135 = vsel %vm1991, %v2066, 0.0
          %v2136 = vadd.f32 %v2065, %v2135
          %2137 = vadd.xlane.f32.xlu0 %v2136
          %v2138 = vpop.xlane.xlu0 %2137
          %v2139 = vsel %vm1991, %v2068, 0.0
          %v2140 = vadd.f32 %v2067, %v2139
          %2141 = vadd.xlane.f32.xlu0 %v2140
          %v2142 = vpop.xlane.xlu0 %2141
          %v2143 = vsel %vm1991, %v2070, 0.0
          %v2144 = vadd.f32 %v2069, %v2143
          %2145 = vadd.xlane.f32.xlu0 %v2144
          %v2146 = vpop.xlane.xlu0 %2145
          %v2147 = vsel %vm1991, %v2072, 0.0
          %v2148 = vadd.f32 %v2071, %v2147
          %2149 = vadd.xlane.f32.xlu0 %v2148
          %v2150 = vpop.xlane.xlu0 %2149
          %v2151 = vsel %vm1991, %v2074, 0.0
          %v2152 = vadd.f32 %v2073, %v2151
          %2153 = vadd.xlane.f32.xlu0 %v2152
          %v2154 = vpop.xlane.xlu0 %2153
          %v2155 = vsel %vm1991, %v2076, 0.0
          %v2156 = vadd.f32 %v2075, %v2155
          %2157 = vadd.xlane.f32.xlu0 %v2156
          %v2158 = vpop.xlane.xlu0 %2157
          %v2159 = vsel %vm1991, %v2078, 0.0
          %v2160 = vadd.f32 %v2077, %v2159
          %2161 = vadd.xlane.f32.xlu0 %v2160
          %v2162 = vpop.xlane.xlu0 %2161
          %v2163 = vsel %vm1991, %v2080, 0.0
          %v2164 = vadd.f32 %v2079, %v2163
          %2165 = vadd.xlane.f32.xlu0 %v2164
          %v2166 = vpop.xlane.xlu0 %2165
          %v2167 = vsel %vm1991, %v2082, 0.0
          %v2168 = vadd.f32 %v2081, %v2167
          %2169 = vadd.xlane.f32.xlu0 %v2168
          %v2170 = vpop.xlane.xlu0 %2169
          %v2171 = vsel %vm1991, %v2084, 0.0
          %v2172 = vadd.f32 %v2083, %v2171
          %2173 = vadd.xlane.f32.xlu0 %v2172
          %v2174 = vpop.xlane.xlu0 %2173
          %v2175 = vsel %vm1991, %v2086, 0.0
          %v2176 = vadd.f32 %v2085, %v2175
          %2177 = vadd.xlane.f32.xlu0 %v2176
          %v2178 = vpop.xlane.xlu0 %2177
          %v2179 = vsel %vm1991, %v2088, 0.0
          %v2180 = vadd.f32 %v2087, %v2179
          %2181 = vadd.xlane.f32.xlu0 %v2180
          %v2182 = vpop.xlane.xlu0 %2181
          %v2183 = vsel %vm1991, %v2090, 0.0
          %v2184 = vadd.f32 %v2089, %v2183
          %2185 = vadd.xlane.f32.xlu0 %v2184
          %v2186 = vpop.xlane.xlu0 %2185
          %v2187 = vmul.f32 %v2043, %v2043
          %v2188 = vmul.f32 %v2044, %v2044
          %v2189 = vmul.f32 %v2045, %v2045
          %v2190 = vmul.f32 %v2046, %v2046
          %v2191 = vmul.f32 %v2047, %v2047
          %v2192 = vmul.f32 %v2048, %v2048
          %v2193 = vmul.f32 %v2049, %v2049
          %v2194 = vmul.f32 %v2050, %v2050
          %v2195 = vmul.f32 %v2051, %v2051
          %v2196 = vmul.f32 %v2052, %v2052
          %v2197 = vmul.f32 %v2053, %v2053
          %v2198 = vmul.f32 %v2054, %v2054
          %v2199 = vmul.f32 %v2055, %v2055
          %v2200 = vmul.f32 %v2056, %v2056
          %v2201 = vmul.f32 %v2057, %v2057
          %v2202 = vmul.f32 %v2058, %v2058
          %v2203 = vmul.f32 %v2059, %v2059
          %v2204 = vmul.f32 %v2060, %v2060
          %v2205 = vmul.f32 %v2061, %v2061
          %v2206 = vmul.f32 %v2062, %v2062
          %v2207 = vmul.f32 %v2063, %v2063
          %v2208 = vmul.f32 %v2064, %v2064
          %v2209 = vmul.f32 %v2065, %v2065
          %v2210 = vmul.f32 %v2066, %v2066
          %v2211 = vmul.f32 %v2067, %v2067
          %v2212 = vmul.f32 %v2068, %v2068
          %v2213 = vmul.f32 %v2069, %v2069
          %v2214 = vmul.f32 %v2070, %v2070
          %v2215 = vmul.f32 %v2071, %v2071
          %v2216 = vmul.f32 %v2072, %v2072
          %v2217 = vmul.f32 %v2073, %v2073
          %v2218 = vmul.f32 %v2074, %v2074
          %v2219 = vmul.f32 %v2075, %v2075
          %v2220 = vmul.f32 %v2076, %v2076
          %v2221 = vmul.f32 %v2077, %v2077
          %v2222 = vmul.f32 %v2078, %v2078
          %v2223 = vmul.f32 %v2079, %v2079
          %v2224 = vmul.f32 %v2080, %v2080
          %v2225 = vmul.f32 %v2081, %v2081
          %v2226 = vmul.f32 %v2082, %v2082
          %v2227 = vmul.f32 %v2083, %v2083
          %v2228 = vmul.f32 %v2084, %v2084
          %v2229 = vmul.f32 %v2085, %v2085
          %v2230 = vmul.f32 %v2086, %v2086
          %v2231 = vmul.f32 %v2087, %v2087
          %v2232 = vmul.f32 %v2088, %v2088
          %v2233 = vmul.f32 %v2089, %v2089
          %v2234 = vmul.f32 %v2090, %v2090
          %v2235 = vsel %vm1991, %v2188, 0.0
          %v2236 = vadd.f32 %v2187, %v2235
          %2237 = vadd.xlane.f32.xlu0 %v2236
          %v2238 = vpop.xlane.xlu0 %2237
          %v2239 = vsel %vm1991, %v2190, 0.0
          %v2240 = vadd.f32 %v2189, %v2239
          %2241 = vadd.xlane.f32.xlu0 %v2240
          %v2242 = vpop.xlane.xlu0 %2241
          %v2243 = vsel %vm1991, %v2192, 0.0
          %v2244 = vadd.f32 %v2191, %v2243
          %2245 = vadd.xlane.f32.xlu0 %v2244
          %v2246 = vpop.xlane.xlu0 %2245
          %v2247 = vsel %vm1991, %v2194, 0.0
          %v2248 = vadd.f32 %v2193, %v2247
          %2249 = vadd.xlane.f32.xlu0 %v2248
          %v2250 = vpop.xlane.xlu0 %2249
          %v2251 = vsel %vm1991, %v2196, 0.0
          %v2252 = vadd.f32 %v2195, %v2251
          %2253 = vadd.xlane.f32.xlu0 %v2252
          %v2254 = vpop.xlane.xlu0 %2253
          %v2255 = vsel %vm1991, %v2198, 0.0
          %v2256 = vadd.f32 %v2197, %v2255
          %2257 = vadd.xlane.f32.xlu0 %v2256
          %v2258 = vpop.xlane.xlu0 %2257
          %v2259 = vsel %vm1991, %v2200, 0.0
          %v2260 = vadd.f32 %v2199, %v2259
          %2261 = vadd.xlane.f32.xlu0 %v2260
          %v2262 = vpop.xlane.xlu0 %2261
          %v2263 = vsel %vm1991, %v2202, 0.0
          %v2264 = vadd.f32 %v2201, %v2263
          %2265 = vadd.xlane.f32.xlu0 %v2264
          %v2266 = vpop.xlane.xlu0 %2265
          %v2267 = vsel %vm1991, %v2204, 0.0
          %v2268 = vadd.f32 %v2203, %v2267
          %2269 = vadd.xlane.f32.xlu0 %v2268
          %v2270 = vpop.xlane.xlu0 %2269
          %v2271 = vsel %vm1991, %v2206, 0.0
          %v2272 = vadd.f32 %v2205, %v2271
          %2273 = vadd.xlane.f32.xlu0 %v2272
          %v2274 = vpop.xlane.xlu0 %2273
          %v2275 = vsel %vm1991, %v2208, 0.0
          %v2276 = vadd.f32 %v2207, %v2275
          %2277 = vadd.xlane.f32.xlu0 %v2276
          %v2278 = vpop.xlane.xlu0 %2277
          %v2279 = vsel %vm1991, %v2210, 0.0
          %v2280 = vadd.f32 %v2209, %v2279
          %2281 = vadd.xlane.f32.xlu0 %v2280
          %v2282 = vpop.xlane.xlu0 %2281
          %v2283 = vsel %vm1991, %v2212, 0.0
          %v2284 = vadd.f32 %v2211, %v2283
          %2285 = vadd.xlane.f32.xlu0 %v2284
          %v2286 = vpop.xlane.xlu0 %2285
          %v2287 = vsel %vm1991, %v2214, 0.0
          %v2288 = vadd.f32 %v2213, %v2287
          %2289 = vadd.xlane.f32.xlu0 %v2288
          %v2290 = vpop.xlane.xlu0 %2289
          %v2291 = vsel %vm1991, %v2216, 0.0
          %v2292 = vadd.f32 %v2215, %v2291
          %2293 = vadd.xlane.f32.xlu0 %v2292
          %v2294 = vpop.xlane.xlu0 %2293
          %v2295 = vsel %vm1991, %v2218, 0.0
          %v2296 = vadd.f32 %v2217, %v2295
          %2297 = vadd.xlane.f32.xlu0 %v2296
          %v2298 = vpop.xlane.xlu0 %2297
          %v2299 = vsel %vm1991, %v2220, 0.0
          %v2300 = vadd.f32 %v2219, %v2299
          %2301 = vadd.xlane.f32.xlu0 %v2300
          %v2302 = vpop.xlane.xlu0 %2301
          %v2303 = vsel %vm1991, %v2222, 0.0
          %v2304 = vadd.f32 %v2221, %v2303
          %2305 = vadd.xlane.f32.xlu0 %v2304
          %v2306 = vpop.xlane.xlu0 %2305
          %v2307 = vsel %vm1991, %v2224, 0.0
          %v2308 = vadd.f32 %v2223, %v2307
          %2309 = vadd.xlane.f32.xlu0 %v2308
          %v2310 = vpop.xlane.xlu0 %2309
          %v2311 = vsel %vm1991, %v2226, 0.0
          %v2312 = vadd.f32 %v2225, %v2311
          %2313 = vadd.xlane.f32.xlu0 %v2312
          %v2314 = vpop.xlane.xlu0 %2313
          %v2315 = vsel %vm1991, %v2228, 0.0
          %v2316 = vadd.f32 %v2227, %v2315
          %2317 = vadd.xlane.f32.xlu0 %v2316
          %v2318 = vpop.xlane.xlu0 %2317
          %v2319 = vsel %vm1991, %v2230, 0.0
          %v2320 = vadd.f32 %v2229, %v2319
          %2321 = vadd.xlane.f32.xlu0 %v2320
          %v2322 = vpop.xlane.xlu0 %2321
          %v2323 = vsel %vm1991, %v2232, 0.0
          %v2324 = vadd.f32 %v2231, %v2323
          %2325 = vadd.xlane.f32.xlu0 %v2324
          %v2326 = vpop.xlane.xlu0 %2325
          %v2327 = vsel %vm1991, %v2234, 0.0
          %v2328 = vadd.f32 %v2233, %v2327
          %2329 = vadd.xlane.f32.xlu0 %v2328
          %v2330 = vpop.xlane.xlu0 %2329
          %v2331 = vrcp.pop 196.0
          %v2332 = vmul.f32 196.0, %v2331
          %v2333 = vsub.f32 1.0, %v2332
          %v2334 = vmul.f32 %v2331, %v2333
          %v2335 = vadd.f32 %v2331, %v2334
          %vm2336 = vweird.f32 %v2331
          %v2337 = vsel %vm2336, %v2331, %v2335
          %v2338 = vmul.f32 %v2094, %v2337
          %v2339 = vmul.f32 %v2098, %v2337
          %v2340 = vmul.f32 %v2102, %v2337
          %v2341 = vmul.f32 %v2106, %v2337
          %v2342 = vmul.f32 %v2110, %v2337
          %v2343 = vmul.f32 %v2114, %v2337
          %v2344 = vmul.f32 %v2118, %v2337
          %v2345 = vmul.f32 %v2122, %v2337
          %v2346 = vmul.f32 %v2126, %v2337
          %v2347 = vmul.f32 %v2130, %v2337
          %v2348 = vmul.f32 %v2134, %v2337
          %v2349 = vmul.f32 %v2138, %v2337
          %v2350 = vmul.f32 %v2142, %v2337
          %v2351 = vmul.f32 %v2146, %v2337
          %v2352 = vmul.f32 %v2150, %v2337
          %v2353 = vmul.f32 %v2154, %v2337
          %v2354 = vmul.f32 %v2158, %v2337
          %v2355 = vmul.f32 %v2162, %v2337
          %v2356 = vmul.f32 %v2166, %v2337
          %v2357 = vmul.f32 %v2170, %v2337
          %v2358 = vmul.f32 %v2174, %v2337
          %v2359 = vmul.f32 %v2178, %v2337
          %v2360 = vmul.f32 %v2182, %v2337
          %v2361 = vmul.f32 %v2186, %v2337
          %v2362 = vmul.f32 %v2238, %v2337
          %v2363 = vmul.f32 %v2242, %v2337
          %v2364 = vmul.f32 %v2246, %v2337
          %v2365 = vmul.f32 %v2250, %v2337
          %v2366 = vmul.f32 %v2254, %v2337
          %v2367 = vmul.f32 %v2258, %v2337
          %v2368 = vmul.f32 %v2262, %v2337
          %v2369 = vmul.f32 %v2266, %v2337
          %v2370 = vmul.f32 %v2270, %v2337
          %v2371 = vmul.f32 %v2274, %v2337
          %v2372 = vmul.f32 %v2278, %v2337
          %v2373 = vmul.f32 %v2282, %v2337
          %v2374 = vmul.f32 %v2286, %v2337
          %v2375 = vmul.f32 %v2290, %v2337
          %v2376 = vmul.f32 %v2294, %v2337
          %v2377 = vmul.f32 %v2298, %v2337
          %v2378 = vmul.f32 %v2302, %v2337
          %v2379 = vmul.f32 %v2306, %v2337
          %v2380 = vmul.f32 %v2310, %v2337
          %v2381 = vmul.f32 %v2314, %v2337
          %v2382 = vmul.f32 %v2318, %v2337
          %v2383 = vmul.f32 %v2322, %v2337
          %v2384 = vmul.f32 %v2326, %v2337
          %v2385 = vmul.f32 %v2330, %v2337
          %v2386 = vmul.f32 %v2338, %v2338
          %v2387 = vmul.f32 %v2339, %v2339
          %v2388 = vmul.f32 %v2340, %v2340
          %v2389 = vmul.f32 %v2341, %v2341
          %v2390 = vmul.f32 %v2342, %v2342
          %v2391 = vmul.f32 %v2343, %v2343
          %v2392 = vmul.f32 %v2344, %v2344
          %v2393 = vmul.f32 %v2345, %v2345
          %v2394 = vmul.f32 %v2346, %v2346
          %v2395 = vmul.f32 %v2347, %v2347
          %v2396 = vmul.f32 %v2348, %v2348
          %v2397 = vmul.f32 %v2349, %v2349
          %v2398 = vmul.f32 %v2350, %v2350
          %v2399 = vmul.f32 %v2351, %v2351
          %v2400 = vmul.f32 %v2352, %v2352
          %v2401 = vmul.f32 %v2353, %v2353
          %v2402 = vmul.f32 %v2354, %v2354
          %v2403 = vmul.f32 %v2355, %v2355
          %v2404 = vmul.f32 %v2356, %v2356
          %v2405 = vmul.f32 %v2357, %v2357
          %v2406 = vmul.f32 %v2358, %v2358
          %v2407 = vmul.f32 %v2359, %v2359
          %v2408 = vmul.f32 %v2360, %v2360
          %v2409 = vmul.f32 %v2361, %v2361
          %v2410 = vsub.f32 %v2362, %v2386
          %v2411 = vsub.f32 %v2363, %v2387
          %v2412 = vsub.f32 %v2364, %v2388
          %v2413 = vsub.f32 %v2365, %v2389
          %v2414 = vsub.f32 %v2366, %v2390
          %v2415 = vsub.f32 %v2367, %v2391
          %v2416 = vsub.f32 %v2368, %v2392
          %v2417 = vsub.f32 %v2369, %v2393
          %v2418 = vsub.f32 %v2370, %v2394
          %v2419 = vsub.f32 %v2371, %v2395
          %v2420 = vsub.f32 %v2372, %v2396
          %v2421 = vsub.f32 %v2373, %v2397
          %v2422 = vsub.f32 %v2374, %v2398
          %v2423 = vsub.f32 %v2375, %v2399
          %v2424 = vsub.f32 %v2376, %v2400
          %v2425 = vsub.f32 %v2377, %v2401
          %v2426 = vsub.f32 %v2378, %v2402
          %v2427 = vsub.f32 %v2379, %v2403
          %v2428 = vsub.f32 %v2380, %v2404
          %v2429 = vsub.f32 %v2381, %v2405
          %v2430 = vsub.f32 %v2382, %v2406
          %v2431 = vsub.f32 %v2383, %v2407
          %v2432 = vsub.f32 %v2384, %v2408
          %v2433 = vsub.f32 %v2385, %v2409
          %v2434 = vld [vmem:[%s276] sm:$0xff]
          %v2435 = vld [vmem:[%s276 + $0x8] sm:$0xff]
          %v2436 = vld [vmem:[%s276 + $0x10] sm:$0xff]
          %v2437 = vld [vmem:[%s276 + $0x18] sm:$0xff]
          %v2438 = vld [vmem:[%s276 + $0x20] sm:$0xff]
          %v2439 = vld [vmem:[%s276 + $0x28] sm:$0xff]
          %v2440 = vld [vmem:[%s276 + $0x30] sm:$0xff]
          %v2441 = vld [vmem:[%s276 + $0x38] sm:$0xff]
          %v2442 = vld [vmem:[%s276 + $0x40] sm:$0xff]
          %v2443 = vld [vmem:[%s276 + $0x48] sm:$0xff]
          %v2444 = vld [vmem:[%s276 + $0x50] sm:$0xff]
          %v2445 = vld [vmem:[%s276 + $0x58] sm:$0xff]
          %v2446 = vld [vmem:[%s276 + $0x60] sm:$0xff]
          %v2447 = vld [vmem:[%s276 + $0x68] sm:$0xff]
          %v2448 = vld [vmem:[%s276 + $0x70] sm:$0xff]
          %v2449 = vld [vmem:[%s276 + $0x78] sm:$0xff]
          %v2450 = vld [vmem:[%s276 + $0x80] sm:$0xff]
          %v2451 = vld [vmem:[%s276 + $0x88] sm:$0xff]
          %v2452 = vld [vmem:[%s276 + $0x90] sm:$0xff]
          %v2453 = vld [vmem:[%s276 + $0x98] sm:$0xff]
          %v2454 = vld [vmem:[%s276 + $0xa0] sm:$0xff]
          %v2455 = vld [vmem:[%s276 + $0xa8] sm:$0xff]
          %v2456 = vld [vmem:[%s276 + $0xb0] sm:$0xff]
          %v2457 = vld [vmem:[%s276 + $0xb8] sm:$0xff]
          %v2458 = vadd.f32 %v2410, 1e-05
          %v2459 = vadd.f32 %v2411, 1e-05
          %v2460 = vadd.f32 %v2412, 1e-05
          %v2461 = vadd.f32 %v2413, 1e-05
          %v2462 = vadd.f32 %v2414, 1e-05
          %v2463 = vadd.f32 %v2415, 1e-05
          %v2464 = vadd.f32 %v2416, 1e-05
          %v2465 = vadd.f32 %v2417, 1e-05
          %v2466 = vadd.f32 %v2418, 1e-05
          %v2467 = vadd.f32 %v2419, 1e-05
          %v2468 = vadd.f32 %v2420, 1e-05
          %v2469 = vadd.f32 %v2421, 1e-05
          %v2470 = vadd.f32 %v2422, 1e-05
          %v2471 = vadd.f32 %v2423, 1e-05
          %v2472 = vadd.f32 %v2424, 1e-05
          %v2473 = vadd.f32 %v2425, 1e-05
          %v2474 = vadd.f32 %v2426, 1e-05
          %v2475 = vadd.f32 %v2427, 1e-05
          %v2476 = vadd.f32 %v2428, 1e-05
          %v2477 = vadd.f32 %v2429, 1e-05
          %v2478 = vadd.f32 %v2430, 1e-05
          %v2479 = vadd.f32 %v2431, 1e-05
          %v2480 = vadd.f32 %v2432, 1e-05
          %v2481 = vadd.f32 %v2433, 1e-05
          %v2482 = vrsqrt.pop %v2458
          %v2483 = vmul.f32 %v2482, %v2458
          %v2484 = vmul.f32 %v2483, %v2482
          %v2485 = vmul.f32 0.5, %v2484
          %v2486 = vsub.f32 1.5, %v2485
          %v2487 = vmul.f32 %v2482, %v2486
          %vm2488 = vweird.f32 %v2458
          %vm2489 = vweird.f32 %v2482
          %vm2490 = vmor %vm2488, %vm2489
          %v2491 = vsel %vm2490, %v2482, %v2487
          %v2492 = vrsqrt.pop %v2459
          %v2493 = vmul.f32 %v2492, %v2459
          %v2494 = vmul.f32 %v2493, %v2492
          %v2495 = vmul.f32 0.5, %v2494
          %v2496 = vsub.f32 1.5, %v2495
          %v2497 = vmul.f32 %v2492, %v2496
          %vm2498 = vweird.f32 %v2459
          %vm2499 = vweird.f32 %v2492
          %vm2500 = vmor %vm2498, %vm2499
          %v2501 = vsel %vm2500, %v2492, %v2497
          %v2502 = vrsqrt.pop %v2460
          %v2503 = vmul.f32 %v2502, %v2460
          %v2504 = vmul.f32 %v2503, %v2502
          %v2505 = vmul.f32 0.5, %v2504
          %v2506 = vsub.f32 1.5, %v2505
          %v2507 = vmul.f32 %v2502, %v2506
          %vm2508 = vweird.f32 %v2460
          %vm2509 = vweird.f32 %v2502
          %vm2510 = vmor %vm2508, %vm2509
          %v2511 = vsel %vm2510, %v2502, %v2507
          %v2512 = vrsqrt.pop %v2461
          %v2513 = vmul.f32 %v2512, %v2461
          %v2514 = vmul.f32 %v2513, %v2512
          %v2515 = vmul.f32 0.5, %v2514
          %v2516 = vsub.f32 1.5, %v2515
          %v2517 = vmul.f32 %v2512, %v2516
          %vm2518 = vweird.f32 %v2461
          %vm2519 = vweird.f32 %v2512
          %vm2520 = vmor %vm2518, %vm2519
          %v2521 = vsel %vm2520, %v2512, %v2517
          %v2522 = vrsqrt.pop %v2462
          %v2523 = vmul.f32 %v2522, %v2462
          %v2524 = vmul.f32 %v2523, %v2522
          %v2525 = vmul.f32 0.5, %v2524
          %v2526 = vsub.f32 1.5, %v2525
          %v2527 = vmul.f32 %v2522, %v2526
          %vm2528 = vweird.f32 %v2462
          %vm2529 = vweird.f32 %v2522
          %vm2530 = vmor %vm2528, %vm2529
          %v2531 = vsel %vm2530, %v2522, %v2527
          %v2532 = vrsqrt.pop %v2463
          %v2533 = vmul.f32 %v2532, %v2463
          %v2534 = vmul.f32 %v2533, %v2532
          %v2535 = vmul.f32 0.5, %v2534
          %v2536 = vsub.f32 1.5, %v2535
          %v2537 = vmul.f32 %v2532, %v2536
          %vm2538 = vweird.f32 %v2463
          %vm2539 = vweird.f32 %v2532
          %vm2540 = vmor %vm2538, %vm2539
          %v2541 = vsel %vm2540, %v2532, %v2537
          %v2542 = vrsqrt.pop %v2464
          %v2543 = vmul.f32 %v2542, %v2464
          %v2544 = vmul.f32 %v2543, %v2542
          %v2545 = vmul.f32 0.5, %v2544
          %v2546 = vsub.f32 1.5, %v2545
          %v2547 = vmul.f32 %v2542, %v2546
          %vm2548 = vweird.f32 %v2464
          %vm2549 = vweird.f32 %v2542
          %vm2550 = vmor %vm2548, %vm2549
          %v2551 = vsel %vm2550, %v2542, %v2547
          %v2552 = vrsqrt.pop %v2465
          %v2553 = vmul.f32 %v2552, %v2465
          %v2554 = vmul.f32 %v2553, %v2552
          %v2555 = vmul.f32 0.5, %v2554
          %v2556 = vsub.f32 1.5, %v2555
          %v2557 = vmul.f32 %v2552, %v2556
          %vm2558 = vweird.f32 %v2465
          %vm2559 = vweird.f32 %v2552
          %vm2560 = vmor %vm2558, %vm2559
          %v2561 = vsel %vm2560, %v2552, %v2557
          %v2562 = vrsqrt.pop %v2466
          %v2563 = vmul.f32 %v2562, %v2466
          %v2564 = vmul.f32 %v2563, %v2562
          %v2565 = vmul.f32 0.5, %v2564
          %v2566 = vsub.f32 1.5, %v2565
          %v2567 = vmul.f32 %v2562, %v2566
          %vm2568 = vweird.f32 %v2466
          %vm2569 = vweird.f32 %v2562
          %vm2570 = vmor %vm2568, %vm2569
          %v2571 = vsel %vm2570, %v2562, %v2567
          %v2572 = vrsqrt.pop %v2467
          %v2573 = vmul.f32 %v2572, %v2467
          %v2574 = vmul.f32 %v2573, %v2572
          %v2575 = vmul.f32 0.5, %v2574
          %v2576 = vsub.f32 1.5, %v2575
          %v2577 = vmul.f32 %v2572, %v2576
          %vm2578 = vweird.f32 %v2467
          %vm2579 = vweird.f32 %v2572
          %vm2580 = vmor %vm2578, %vm2579
          %v2581 = vsel %vm2580, %v2572, %v2577
          %v2582 = vrsqrt.pop %v2468
          %v2583 = vmul.f32 %v2582, %v2468
          %v2584 = vmul.f32 %v2583, %v2582
          %v2585 = vmul.f32 0.5, %v2584
          %v2586 = vsub.f32 1.5, %v2585
          %v2587 = vmul.f32 %v2582, %v2586
          %vm2588 = vweird.f32 %v2468
          %vm2589 = vweird.f32 %v2582
          %vm2590 = vmor %vm2588, %vm2589
          %v2591 = vsel %vm2590, %v2582, %v2587
          %v2592 = vrsqrt.pop %v2469
          %v2593 = vmul.f32 %v2592, %v2469
          %v2594 = vmul.f32 %v2593, %v2592
          %v2595 = vmul.f32 0.5, %v2594
          %v2596 = vsub.f32 1.5, %v2595
          %v2597 = vmul.f32 %v2592, %v2596
          %vm2598 = vweird.f32 %v2469
          %vm2599 = vweird.f32 %v2592
          %vm2600 = vmor %vm2598, %vm2599
          %v2601 = vsel %vm2600, %v2592, %v2597
          %v2602 = vrsqrt.pop %v2470
          %v2603 = vmul.f32 %v2602, %v2470
          %v2604 = vmul.f32 %v2603, %v2602
          %v2605 = vmul.f32 0.5, %v2604
          %v2606 = vsub.f32 1.5, %v2605
          %v2607 = vmul.f32 %v2602, %v2606
          %vm2608 = vweird.f32 %v2470
          %vm2609 = vweird.f32 %v2602
          %vm2610 = vmor %vm2608, %vm2609
          %v2611 = vsel %vm2610, %v2602, %v2607
          %v2612 = vrsqrt.pop %v2471
          %v2613 = vmul.f32 %v2612, %v2471
          %v2614 = vmul.f32 %v2613, %v2612
          %v2615 = vmul.f32 0.5, %v2614
          %v2616 = vsub.f32 1.5, %v2615
          %v2617 = vmul.f32 %v2612, %v2616
          %vm2618 = vweird.f32 %v2471
          %vm2619 = vweird.f32 %v2612
          %vm2620 = vmor %vm2618, %vm2619
          %v2621 = vsel %vm2620, %v2612, %v2617
          %v2622 = vrsqrt.pop %v2472
          %v2623 = vmul.f32 %v2622, %v2472
          %v2624 = vmul.f32 %v2623, %v2622
          %v2625 = vmul.f32 0.5, %v2624
          %v2626 = vsub.f32 1.5, %v2625
          %v2627 = vmul.f32 %v2622, %v2626
          %vm2628 = vweird.f32 %v2472
          %vm2629 = vweird.f32 %v2622
          %vm2630 = vmor %vm2628, %vm2629
          %v2631 = vsel %vm2630, %v2622, %v2627
          %v2632 = vrsqrt.pop %v2473
          %v2633 = vmul.f32 %v2632, %v2473
          %v2634 = vmul.f32 %v2633, %v2632
          %v2635 = vmul.f32 0.5, %v2634
          %v2636 = vsub.f32 1.5, %v2635
          %v2637 = vmul.f32 %v2632, %v2636
          %vm2638 = vweird.f32 %v2473
          %vm2639 = vweird.f32 %v2632
          %vm2640 = vmor %vm2638, %vm2639
          %v2641 = vsel %vm2640, %v2632, %v2637
          %v2642 = vrsqrt.pop %v2474
          %v2643 = vmul.f32 %v2642, %v2474
          %v2644 = vmul.f32 %v2643, %v2642
          %v2645 = vmul.f32 0.5, %v2644
          %v2646 = vsub.f32 1.5, %v2645
          %v2647 = vmul.f32 %v2642, %v2646
          %vm2648 = vweird.f32 %v2474
          %vm2649 = vweird.f32 %v2642
          %vm2650 = vmor %vm2648, %vm2649
          %v2651 = vsel %vm2650, %v2642, %v2647
          %v2652 = vrsqrt.pop %v2475
          %v2653 = vmul.f32 %v2652, %v2475
          %v2654 = vmul.f32 %v2653, %v2652
          %v2655 = vmul.f32 0.5, %v2654
          %v2656 = vsub.f32 1.5, %v2655
          %v2657 = vmul.f32 %v2652, %v2656
          %vm2658 = vweird.f32 %v2475
          %vm2659 = vweird.f32 %v2652
          %vm2660 = vmor %vm2658, %vm2659
          %v2661 = vsel %vm2660, %v2652, %v2657
          %v2662 = vrsqrt.pop %v2476
          %v2663 = vmul.f32 %v2662, %v2476
          %v2664 = vmul.f32 %v2663, %v2662
          %v2665 = vmul.f32 0.5, %v2664
          %v2666 = vsub.f32 1.5, %v2665
          %v2667 = vmul.f32 %v2662, %v2666
          %vm2668 = vweird.f32 %v2476
          %vm2669 = vweird.f32 %v2662
          %vm2670 = vmor %vm2668, %vm2669
          %v2671 = vsel %vm2670, %v2662, %v2667
          %v2672 = vrsqrt.pop %v2477
          %v2673 = vmul.f32 %v2672, %v2477
          %v2674 = vmul.f32 %v2673, %v2672
          %v2675 = vmul.f32 0.5, %v2674
          %v2676 = vsub.f32 1.5, %v2675
          %v2677 = vmul.f32 %v2672, %v2676
          %vm2678 = vweird.f32 %v2477
          %vm2679 = vweird.f32 %v2672
          %vm2680 = vmor %vm2678, %vm2679
          %v2681 = vsel %vm2680, %v2672, %v2677
          %v2682 = vrsqrt.pop %v2478
          %v2683 = vmul.f32 %v2682, %v2478
          %v2684 = vmul.f32 %v2683, %v2682
          %v2685 = vmul.f32 0.5, %v2684
          %v2686 = vsub.f32 1.5, %v2685
          %v2687 = vmul.f32 %v2682, %v2686
          %vm2688 = vweird.f32 %v2478
          %vm2689 = vweird.f32 %v2682
          %vm2690 = vmor %vm2688, %vm2689
          %v2691 = vsel %vm2690, %v2682, %v2687
          %v2692 = vrsqrt.pop %v2479
          %v2693 = vmul.f32 %v2692, %v2479
          %v2694 = vmul.f32 %v2693, %v2692
          %v2695 = vmul.f32 0.5, %v2694
          %v2696 = vsub.f32 1.5, %v2695
          %v2697 = vmul.f32 %v2692, %v2696
          %vm2698 = vweird.f32 %v2479
          %vm2699 = vweird.f32 %v2692
          %vm2700 = vmor %vm2698, %vm2699
          %v2701 = vsel %vm2700, %v2692, %v2697
          %v2702 = vrsqrt.pop %v2480
          %v2703 = vmul.f32 %v2702, %v2480
          %v2704 = vmul.f32 %v2703, %v2702
          %v2705 = vmul.f32 0.5, %v2704
          %v2706 = vsub.f32 1.5, %v2705
          %v2707 = vmul.f32 %v2702, %v2706
          %vm2708 = vweird.f32 %v2480
          %vm2709 = vweird.f32 %v2702
          %vm2710 = vmor %vm2708, %vm2709
          %v2711 = vsel %vm2710, %v2702, %v2707
          %v2712 = vrsqrt.pop %v2481
          %v2713 = vmul.f32 %v2712, %v2481
          %v2714 = vmul.f32 %v2713, %v2712
          %v2715 = vmul.f32 0.5, %v2714
          %v2716 = vsub.f32 1.5, %v2715
          %v2717 = vmul.f32 %v2712, %v2716
          %vm2718 = vweird.f32 %v2481
          %vm2719 = vweird.f32 %v2712
          %vm2720 = vmor %vm2718, %vm2719
          %v2721 = vsel %vm2720, %v2712, %v2717
          %v2722 = vmul.f32 %v2434, %v2491
          %v2723 = vmul.f32 %v2435, %v2501
          %v2724 = vmul.f32 %v2436, %v2511
          %v2725 = vmul.f32 %v2437, %v2521
          %v2726 = vmul.f32 %v2438, %v2531
          %v2727 = vmul.f32 %v2439, %v2541
          %v2728 = vmul.f32 %v2440, %v2551
          %v2729 = vmul.f32 %v2441, %v2561
          %v2730 = vmul.f32 %v2442, %v2571
          %v2731 = vmul.f32 %v2443, %v2581
          %v2732 = vmul.f32 %v2444, %v2591
          %v2733 = vmul.f32 %v2445, %v2601
          %v2734 = vmul.f32 %v2446, %v2611
          %v2735 = vmul.f32 %v2447, %v2621
          %v2736 = vmul.f32 %v2448, %v2631
          %v2737 = vmul.f32 %v2449, %v2641
          %v2738 = vmul.f32 %v2450, %v2651
          %v2739 = vmul.f32 %v2451, %v2661
          %v2740 = vmul.f32 %v2452, %v2671
          %v2741 = vmul.f32 %v2453, %v2681
          %v2742 = vmul.f32 %v2454, %v2691
          %v2743 = vmul.f32 %v2455, %v2701
          %v2744 = vmul.f32 %v2456, %v2711
          %v2745 = vmul.f32 %v2457, %v2721
          %v2746 = vld [vmem:[%s282] sm:$0xff]
          %v2747 = vld [vmem:[%s282 + $0x8] sm:$0xff]
          %v2748 = vld [vmem:[%s282 + $0x10] sm:$0xff]
          %v2749 = vld [vmem:[%s282 + $0x18] sm:$0xff]
          %v2750 = vld [vmem:[%s282 + $0x20] sm:$0xff]
          %v2751 = vld [vmem:[%s282 + $0x28] sm:$0xff]
          %v2752 = vld [vmem:[%s282 + $0x30] sm:$0xff]
          %v2753 = vld [vmem:[%s282 + $0x38] sm:$0xff]
          %v2754 = vld [vmem:[%s282 + $0x40] sm:$0xff]
          %v2755 = vld [vmem:[%s282 + $0x48] sm:$0xff]
          %v2756 = vld [vmem:[%s282 + $0x50] sm:$0xff]
          %v2757 = vld [vmem:[%s282 + $0x58] sm:$0xff]
          %v2758 = vld [vmem:[%s282 + $0x60] sm:$0xff]
          %v2759 = vld [vmem:[%s282 + $0x68] sm:$0xff]
          %v2760 = vld [vmem:[%s282 + $0x70] sm:$0xff]
          %v2761 = vld [vmem:[%s282 + $0x78] sm:$0xff]
          %v2762 = vld [vmem:[%s282 + $0x80] sm:$0xff]
          %v2763 = vld [vmem:[%s282 + $0x88] sm:$0xff]
          %v2764 = vld [vmem:[%s282 + $0x90] sm:$0xff]
          %v2765 = vld [vmem:[%s282 + $0x98] sm:$0xff]
          %v2766 = vld [vmem:[%s282 + $0xa0] sm:$0xff]
          %v2767 = vld [vmem:[%s282 + $0xa8] sm:$0xff]
          %v2768 = vld [vmem:[%s282 + $0xb0] sm:$0xff]
          %v2769 = vld [vmem:[%s282 + $0xb8] sm:$0xff]
          %v2770 = vmul.f32 %v2338, %v2722
          %v2771 = vmul.f32 %v2339, %v2723
          %v2772 = vmul.f32 %v2340, %v2724
          %v2773 = vmul.f32 %v2341, %v2725
          %v2774 = vmul.f32 %v2342, %v2726
          %v2775 = vmul.f32 %v2343, %v2727
          %v2776 = vmul.f32 %v2344, %v2728
          %v2777 = vmul.f32 %v2345, %v2729
          %v2778 = vmul.f32 %v2346, %v2730
          %v2779 = vmul.f32 %v2347, %v2731
          %v2780 = vmul.f32 %v2348, %v2732
          %v2781 = vmul.f32 %v2349, %v2733
          %v2782 = vmul.f32 %v2350, %v2734
          %v2783 = vmul.f32 %v2351, %v2735
          %v2784 = vmul.f32 %v2352, %v2736
          %v2785 = vmul.f32 %v2353, %v2737
          %v2786 = vmul.f32 %v2354, %v2738
          %v2787 = vmul.f32 %v2355, %v2739
          %v2788 = vmul.f32 %v2356, %v2740
          %v2789 = vmul.f32 %v2357, %v2741
          %v2790 = vmul.f32 %v2358, %v2742
          %v2791 = vmul.f32 %v2359, %v2743
          %v2792 = vmul.f32 %v2360, %v2744
          %v2793 = vmul.f32 %v2361, %v2745
          %v2794 = vsub.f32 %v2746, %v2770
          %v2795 = vsub.f32 %v2747, %v2771
          %v2796 = vsub.f32 %v2748, %v2772
          %v2797 = vsub.f32 %v2749, %v2773
          %v2798 = vsub.f32 %v2750, %v2774
          %v2799 = vsub.f32 %v2751, %v2775
          %v2800 = vsub.f32 %v2752, %v2776
          %v2801 = vsub.f32 %v2753, %v2777
          %v2802 = vsub.f32 %v2754, %v2778
          %v2803 = vsub.f32 %v2755, %v2779
          %v2804 = vsub.f32 %v2756, %v2780
          %v2805 = vsub.f32 %v2757, %v2781
          %v2806 = vsub.f32 %v2758, %v2782
          %v2807 = vsub.f32 %v2759, %v2783
          %v2808 = vsub.f32 %v2760, %v2784
          %v2809 = vsub.f32 %v2761, %v2785
          %v2810 = vsub.f32 %v2762, %v2786
          %v2811 = vsub.f32 %v2763, %v2787
          %v2812 = vsub.f32 %v2764, %v2788
          %v2813 = vsub.f32 %v2765, %v2789
          %v2814 = vsub.f32 %v2766, %v2790
          %v2815 = vsub.f32 %v2767, %v2791
          %v2816 = vsub.f32 %v2768, %v2792
          %v2817 = vsub.f32 %v2769, %v2793
          %2819 = vset.pattern.permute.xlu0 0
          %2820 = vperm.xlu0 %2819, %v2722
          %v2821 = vpop.permute.xlu0 %2820
          %2824 = vset.pattern.permute.xlu0 0
          %2825 = vperm.xlu0 %2824, %v2723
          %v2826 = vpop.permute.xlu0 %2825
          %2829 = vset.pattern.permute.xlu0 0
          %2830 = vperm.xlu0 %2829, %v2724
          %v2831 = vpop.permute.xlu0 %2830
          %2834 = vset.pattern.permute.xlu0 0
          %2835 = vperm.xlu0 %2834, %v2725
          %v2836 = vpop.permute.xlu0 %2835
          %2839 = vset.pattern.permute.xlu0 0
          %2840 = vperm.xlu0 %2839, %v2726
          %v2841 = vpop.permute.xlu0 %2840
          %2844 = vset.pattern.permute.xlu0 0
          %2845 = vperm.xlu0 %2844, %v2727
          %v2846 = vpop.permute.xlu0 %2845
          %2849 = vset.pattern.permute.xlu0 0
          %2850 = vperm.xlu0 %2849, %v2728
          %v2851 = vpop.permute.xlu0 %2850
          %2854 = vset.pattern.permute.xlu0 0
          %2855 = vperm.xlu0 %2854, %v2729
          %v2856 = vpop.permute.xlu0 %2855
          %2859 = vset.pattern.permute.xlu0 0
          %2860 = vperm.xlu0 %2859, %v2730
          %v2861 = vpop.permute.xlu0 %2860
          %2864 = vset.pattern.permute.xlu0 0
          %2865 = vperm.xlu0 %2864, %v2731
          %v2866 = vpop.permute.xlu0 %2865
          %2869 = vset.pattern.permute.xlu0 0
          %2870 = vperm.xlu0 %2869, %v2732
          %v2871 = vpop.permute.xlu0 %2870
          %2874 = vset.pattern.permute.xlu0 0
          %2875 = vperm.xlu0 %2874, %v2733
          %v2876 = vpop.permute.xlu0 %2875
          %2879 = vset.pattern.permute.xlu0 0
          %2880 = vperm.xlu0 %2879, %v2734
          %v2881 = vpop.permute.xlu0 %2880
          %2884 = vset.pattern.permute.xlu0 0
          %2885 = vperm.xlu0 %2884, %v2735
          %v2886 = vpop.permute.xlu0 %2885
          %2889 = vset.pattern.permute.xlu0 0
          %2890 = vperm.xlu0 %2889, %v2736
          %v2891 = vpop.permute.xlu0 %2890
          %2894 = vset.pattern.permute.xlu0 0
          %2895 = vperm.xlu0 %2894, %v2737
          %v2896 = vpop.permute.xlu0 %2895
          %2899 = vset.pattern.permute.xlu0 0
          %2900 = vperm.xlu0 %2899, %v2738
          %v2901 = vpop.permute.xlu0 %2900
          %2904 = vset.pattern.permute.xlu0 0
          %2905 = vperm.xlu0 %2904, %v2739
          %v2906 = vpop.permute.xlu0 %2905
          %2909 = vset.pattern.permute.xlu0 0
          %2910 = vperm.xlu0 %2909, %v2740
          %v2911 = vpop.permute.xlu0 %2910
          %2914 = vset.pattern.permute.xlu0 0
          %2915 = vperm.xlu0 %2914, %v2741
          %v2916 = vpop.permute.xlu0 %2915
          %2919 = vset.pattern.permute.xlu0 0
          %2920 = vperm.xlu0 %2919, %v2742
          %v2921 = vpop.permute.xlu0 %2920
          %2924 = vset.pattern.permute.xlu0 0
          %2925 = vperm.xlu0 %2924, %v2743
          %v2926 = vpop.permute.xlu0 %2925
          %2929 = vset.pattern.permute.xlu0 0
          %2930 = vperm.xlu0 %2929, %v2744
          %v2931 = vpop.permute.xlu0 %2930
          %2934 = vset.pattern.permute.xlu0 0
          %2935 = vperm.xlu0 %2934, %v2745
          %v2936 = vpop.permute.xlu0 %2935
          %v2938 = vmul.f32 %v2043, %v2821
          %v2939 = vmul.f32 %v2044, %v2821
          %v2940 = vmul.f32 %v2045, %v2826
          %v2941 = vmul.f32 %v2046, %v2826
          %v2942 = vmul.f32 %v2047, %v2831
          %v2943 = vmul.f32 %v2048, %v2831
          %v2944 = vmul.f32 %v2049, %v2836
          %v2945 = vmul.f32 %v2050, %v2836
          %v2946 = vmul.f32 %v2051, %v2841
          %v2947 = vmul.f32 %v2052, %v2841
          %v2948 = vmul.f32 %v2053, %v2846
          %v2949 = vmul.f32 %v2054, %v2846
          %v2950 = vmul.f32 %v2055, %v2851
          %v2951 = vmul.f32 %v2056, %v2851
          %v2952 = vmul.f32 %v2057, %v2856
          %v2953 = vmul.f32 %v2058, %v2856
          %v2954 = vmul.f32 %v2059, %v2861
          %v2955 = vmul.f32 %v2060, %v2861
          %v2956 = vmul.f32 %v2061, %v2866
          %v2957 = vmul.f32 %v2062, %v2866
          %v2958 = vmul.f32 %v2063, %v2871
          %v2959 = vmul.f32 %v2064, %v2871
          %v2960 = vmul.f32 %v2065, %v2876
          %v2961 = vmul.f32 %v2066, %v2876
          %v2962 = vmul.f32 %v2067, %v2881
          %v2963 = vmul.f32 %v2068, %v2881
          %v2964 = vmul.f32 %v2069, %v2886
          %v2965 = vmul.f32 %v2070, %v2886
          %v2966 = vmul.f32 %v2071, %v2891
          %v2967 = vmul.f32 %v2072, %v2891
          %v2968 = vmul.f32 %v2073, %v2896
          %v2969 = vmul.f32 %v2074, %v2896
          %v2970 = vmul.f32 %v2075, %v2901
          %v2971 = vmul.f32 %v2076, %v2901
          %v2972 = vmul.f32 %v2077, %v2906
          %v2973 = vmul.f32 %v2078, %v2906
          %v2974 = vmul.f32 %v2079, %v2911
          %v2975 = vmul.f32 %v2080, %v2911
          %v2976 = vmul.f32 %v2081, %v2916
          %v2977 = vmul.f32 %v2082, %v2916
          %v2978 = vmul.f32 %v2083, %v2921
          %v2979 = vmul.f32 %v2084, %v2921
          %v2980 = vmul.f32 %v2085, %v2926
          %v2981 = vmul.f32 %v2086, %v2926
          %v2982 = vmul.f32 %v2087, %v2931
          %v2983 = vmul.f32 %v2088, %v2931
          %v2984 = vmul.f32 %v2089, %v2936
          %v2985 = vmul.f32 %v2090, %v2936
          %2987 = vset.pattern.permute.xlu0 0
          %2988 = vperm.xlu0 %2987, %v2794
          %v2989 = vpop.permute.xlu0 %2988
          %2992 = vset.pattern.permute.xlu0 0
          %2993 = vperm.xlu0 %2992, %v2795
          %v2994 = vpop.permute.xlu0 %2993
          %2997 = vset.pattern.permute.xlu0 0
          %2998 = vperm.xlu0 %2997, %v2796
          %v2999 = vpop.permute.xlu0 %2998
          %3002 = vset.pattern.permute.xlu0 0
          %3003 = vperm.xlu0 %3002, %v2797
          %v3004 = vpop.permute.xlu0 %3003
          %3007 = vset.pattern.permute.xlu0 0
          %3008 = vperm.xlu0 %3007, %v2798
          %v3009 = vpop.permute.xlu0 %3008
          %3012 = vset.pattern.permute.xlu0 0
          %3013 = vperm.xlu0 %3012, %v2799
          %v3014 = vpop.permute.xlu0 %3013
          %3017 = vset.pattern.permute.xlu0 0
          %3018 = vperm.xlu0 %3017, %v2800
          %v3019 = vpop.permute.xlu0 %3018
          %3022 = vset.pattern.permute.xlu0 0
          %3023 = vperm.xlu0 %3022, %v2801
          %v3024 = vpop.permute.xlu0 %3023
          %3027 = vset.pattern.permute.xlu0 0
          %3028 = vperm.xlu0 %3027, %v2802
          %v3029 = vpop.permute.xlu0 %3028
          %3032 = vset.pattern.permute.xlu0 0
          %3033 = vperm.xlu0 %3032, %v2803
          %v3034 = vpop.permute.xlu0 %3033
          %3037 = vset.pattern.permute.xlu0 0
          %3038 = vperm.xlu0 %3037, %v2804
          %v3039 = vpop.permute.xlu0 %3038
          %3042 = vset.pattern.permute.xlu0 0
          %3043 = vperm.xlu0 %3042, %v2805
          %v3044 = vpop.permute.xlu0 %3043
          %3047 = vset.pattern.permute.xlu0 0
          %3048 = vperm.xlu0 %3047, %v2806
          %v3049 = vpop.permute.xlu0 %3048
          %3052 = vset.pattern.permute.xlu0 0
          %3053 = vperm.xlu0 %3052, %v2807
          %v3054 = vpop.permute.xlu0 %3053
          %3057 = vset.pattern.permute.xlu0 0
          %3058 = vperm.xlu0 %3057, %v2808
          %v3059 = vpop.permute.xlu0 %3058
          %3062 = vset.pattern.permute.xlu0 0
          %3063 = vperm.xlu0 %3062, %v2809
          %v3064 = vpop.permute.xlu0 %3063
          %3067 = vset.pattern.permute.xlu0 0
          %3068 = vperm.xlu0 %3067, %v2810
          %v3069 = vpop.permute.xlu0 %3068
          %3072 = vset.pattern.permute.xlu0 0
          %3073 = vperm.xlu0 %3072, %v2811
          %v3074 = vpop.permute.xlu0 %3073
          %3077 = vset.pattern.permute.xlu0 0
          %3078 = vperm.xlu0 %3077, %v2812
          %v3079 = vpop.permute.xlu0 %3078
          %3082 = vset.pattern.permute.xlu0 0
          %3083 = vperm.xlu0 %3082, %v2813
          %v3084 = vpop.permute.xlu0 %3083
          %3087 = vset.pattern.permute.xlu0 0
          %3088 = vperm.xlu0 %3087, %v2814
          %v3089 = vpop.permute.xlu0 %3088
          %3092 = vset.pattern.permute.xlu0 0
          %3093 = vperm.xlu0 %3092, %v2815
          %v3094 = vpop.permute.xlu0 %3093
          %3097 = vset.pattern.permute.xlu0 0
          %3098 = vperm.xlu0 %3097, %v2816
          %v3099 = vpop.permute.xlu0 %3098
          %3102 = vset.pattern.permute.xlu0 0
          %3103 = vperm.xlu0 %3102, %v2817
          %v3104 = vpop.permute.xlu0 %3103
          %v3106 = vadd.f32 %v2938, %v2989
          %v3107 = vadd.f32 %v2939, %v2989
          %v3108 = vadd.f32 %v2940, %v2994
          %v3109 = vadd.f32 %v2941, %v2994
          %v3110 = vadd.f32 %v2942, %v2999
          %v3111 = vadd.f32 %v2943, %v2999
          %v3112 = vadd.f32 %v2944, %v3004
          %v3113 = vadd.f32 %v2945, %v3004
          %v3114 = vadd.f32 %v2946, %v3009
          %v3115 = vadd.f32 %v2947, %v3009
          %v3116 = vadd.f32 %v2948, %v3014
          %v3117 = vadd.f32 %v2949, %v3014
          %v3118 = vadd.f32 %v2950, %v3019
          %v3119 = vadd.f32 %v2951, %v3019
          %v3120 = vadd.f32 %v2952, %v3024
          %v3121 = vadd.f32 %v2953, %v3024
          %v3122 = vadd.f32 %v2954, %v3029
          %v3123 = vadd.f32 %v2955, %v3029
          %v3124 = vadd.f32 %v2956, %v3034
          %v3125 = vadd.f32 %v2957, %v3034
          %v3126 = vadd.f32 %v2958, %v3039
          %v3127 = vadd.f32 %v2959, %v3039
          %v3128 = vadd.f32 %v2960, %v3044
          %v3129 = vadd.f32 %v2961, %v3044
          %v3130 = vadd.f32 %v2962, %v3049
          %v3131 = vadd.f32 %v2963, %v3049
          %v3132 = vadd.f32 %v2964, %v3054
          %v3133 = vadd.f32 %v2965, %v3054
          %v3134 = vadd.f32 %v2966, %v3059
          %v3135 = vadd.f32 %v2967, %v3059
          %v3136 = vadd.f32 %v2968, %v3064
          %v3137 = vadd.f32 %v2969, %v3064
          %v3138 = vadd.f32 %v2970, %v3069
          %v3139 = vadd.f32 %v2971, %v3069
          %v3140 = vadd.f32 %v2972, %v3074
          %v3141 = vadd.f32 %v2973, %v3074
          %v3142 = vadd.f32 %v2974, %v3079
          %v3143 = vadd.f32 %v2975, %v3079
          %v3144 = vadd.f32 %v2976, %v3084
          %v3145 = vadd.f32 %v2977, %v3084
          %v3146 = vadd.f32 %v2978, %v3089
          %v3147 = vadd.f32 %v2979, %v3089
          %v3148 = vadd.f32 %v2980, %v3094
          %v3149 = vadd.f32 %v2981, %v3094
          %v3150 = vadd.f32 %v2982, %v3099
          %v3151 = vadd.f32 %v2983, %v3099
          %v3152 = vadd.f32 %v2984, %v3104
          %v3153 = vadd.f32 %v2985, %v3104
          %v3154 = vmax.f32 %v3106, 0.0
          %v3155 = vmax.f32 %v3107, 0.0
          %v3156 = vmax.f32 %v3108, 0.0
          %v3157 = vmax.f32 %v3109, 0.0
          %v3158 = vmax.f32 %v3110, 0.0
          %v3159 = vmax.f32 %v3111, 0.0
          %v3160 = vmax.f32 %v3112, 0.0
          %v3161 = vmax.f32 %v3113, 0.0
          %v3162 = vmax.f32 %v3114, 0.0
          %v3163 = vmax.f32 %v3115, 0.0
          %v3164 = vmax.f32 %v3116, 0.0
          %v3165 = vmax.f32 %v3117, 0.0
          %v3166 = vmax.f32 %v3118, 0.0
          %v3167 = vmax.f32 %v3119, 0.0
          %v3168 = vmax.f32 %v3120, 0.0
          %v3169 = vmax.f32 %v3121, 0.0
          %v3170 = vmax.f32 %v3122, 0.0
          %v3171 = vmax.f32 %v3123, 0.0
          %v3172 = vmax.f32 %v3124, 0.0
          %v3173 = vmax.f32 %v3125, 0.0
          %v3174 = vmax.f32 %v3126, 0.0
          %v3175 = vmax.f32 %v3127, 0.0
          %v3176 = vmax.f32 %v3128, 0.0
          %v3177 = vmax.f32 %v3129, 0.0
          %v3178 = vmax.f32 %v3130, 0.0
          %v3179 = vmax.f32 %v3131, 0.0
          %v3180 = vmax.f32 %v3132, 0.0
          %v3181 = vmax.f32 %v3133, 0.0
          %v3182 = vmax.f32 %v3134, 0.0
          %v3183 = vmax.f32 %v3135, 0.0
          %v3184 = vmax.f32 %v3136, 0.0
          %v3185 = vmax.f32 %v3137, 0.0
          %v3186 = vmax.f32 %v3138, 0.0
          %v3187 = vmax.f32 %v3139, 0.0
          %v3188 = vmax.f32 %v3140, 0.0
          %v3189 = vmax.f32 %v3141, 0.0
          %v3190 = vmax.f32 %v3142, 0.0
          %v3191 = vmax.f32 %v3143, 0.0
          %v3192 = vmax.f32 %v3144, 0.0
          %v3193 = vmax.f32 %v3145, 0.0
          %v3194 = vmax.f32 %v3146, 0.0
          %v3195 = vmax.f32 %v3147, 0.0
          %v3196 = vmax.f32 %v3148, 0.0
          %v3197 = vmax.f32 %v3149, 0.0
          %v3198 = vmax.f32 %v3150, 0.0
          %v3199 = vmax.f32 %v3151, 0.0
          %v3200 = vmax.f32 %v3152, 0.0
          %v3201 = vmax.f32 %v3153, 0.0
          %3202 = vst [vmem:[#allocation3] sm:$0xff] %v3154
          %3203 = vst.msk [vmem:[#allocation3 + $0x8] sm:$0xff] %vm1991, %v3155
          %3204 = vst [vmem:[#allocation3 + $0x10] sm:$0xff] %v3156
          %3205 = vst.msk [vmem:[#allocation3 + $0x18] sm:$0xff] %vm1991, %v3157
          %3206 = vst [vmem:[#allocation3 + $0x20] sm:$0xff] %v3158
          %3207 = vst.msk [vmem:[#allocation3 + $0x28] sm:$0xff] %vm1991, %v3159
          %3208 = vst [vmem:[#allocation3 + $0x30] sm:$0xff] %v3160
          %3209 = vst.msk [vmem:[#allocation3 + $0x38] sm:$0xff] %vm1991, %v3161
          %3210 = vst [vmem:[#allocation3 + $0x40] sm:$0xff] %v3162
          %3211 = vst.msk [vmem:[#allocation3 + $0x48] sm:$0xff] %vm1991, %v3163
          %3212 = vst [vmem:[#allocation3 + $0x50] sm:$0xff] %v3164
          %3213 = vst.msk [vmem:[#allocation3 + $0x58] sm:$0xff] %vm1991, %v3165
          %3214 = vst [vmem:[#allocation3 + $0x60] sm:$0xff] %v3166
          %3215 = vst.msk [vmem:[#allocation3 + $0x68] sm:$0xff] %vm1991, %v3167
          %3216 = vst [vmem:[#allocation3 + $0x70] sm:$0xff] %v3168
          %3217 = vst.msk [vmem:[#allocation3 + $0x78] sm:$0xff] %vm1991, %v3169
          %3218 = vst [vmem:[#allocation3 + $0x80] sm:$0xff] %v3170
          %3219 = vst.msk [vmem:[#allocation3 + $0x88] sm:$0xff] %vm1991, %v3171
          %3220 = vst [vmem:[#allocation3 + $0x90] sm:$0xff] %v3172
          %3221 = vst.msk [vmem:[#allocation3 + $0x98] sm:$0xff] %vm1991, %v3173
          %3222 = vst [vmem:[#allocation3 + $0xa0] sm:$0xff] %v3174
          %3223 = vst.msk [vmem:[#allocation3 + $0xa8] sm:$0xff] %vm1991, %v3175
          %3224 = vst [vmem:[#allocation3 + $0xb0] sm:$0xff] %v3176
          %3225 = vst.msk [vmem:[#allocation3 + $0xb8] sm:$0xff] %vm1991, %v3177
          %3226 = vst [vmem:[#allocation3 + $0xc0] sm:$0xff] %v3178
          %3227 = vst.msk [vmem:[#allocation3 + $0xc8] sm:$0xff] %vm1991, %v3179
          %3228 = vst [vmem:[#allocation3 + $0xd0] sm:$0xff] %v3180
          %3229 = vst.msk [vmem:[#allocation3 + $0xd8] sm:$0xff] %vm1991, %v3181
          %3230 = vst [vmem:[#allocation3 + $0xe0] sm:$0xff] %v3182
          %3231 = vst.msk [vmem:[#allocation3 + $0xe8] sm:$0xff] %vm1991, %v3183
          %3232 = vst [vmem:[#allocation3 + $0xf0] sm:$0xff] %v3184
          %3233 = vst.msk [vmem:[#allocation3 + $0xf8] sm:$0xff] %vm1991, %v3185
          %3234 = vst [vmem:[#allocation3 + $0x100] sm:$0xff] %v3186
          %3235 = vst.msk [vmem:[#allocation3 + $0x108] sm:$0xff] %vm1991, %v3187
          %3236 = vst [vmem:[#allocation3 + $0x110] sm:$0xff] %v3188
          %3237 = vst.msk [vmem:[#allocation3 + $0x118] sm:$0xff] %vm1991, %v3189
          %3238 = vst [vmem:[#allocation3 + $0x120] sm:$0xff] %v3190
          %3239 = vst.msk [vmem:[#allocation3 + $0x128] sm:$0xff] %vm1991, %v3191
          %3240 = vst [vmem:[#allocation3 + $0x130] sm:$0xff] %v3192
          %3241 = vst.msk [vmem:[#allocation3 + $0x138] sm:$0xff] %vm1991, %v3193
          %3242 = vst [vmem:[#allocation3 + $0x140] sm:$0xff] %v3194
          %3243 = vst.msk [vmem:[#allocation3 + $0x148] sm:$0xff] %vm1991, %v3195
          %3244 = vst [vmem:[#allocation3 + $0x150] sm:$0xff] %v3196
          %3245 = vst.msk [vmem:[#allocation3 + $0x158] sm:$0xff] %vm1991, %v3197
          %3246 = vst [vmem:[#allocation3 + $0x160] sm:$0xff] %v3198
          %3247 = vst.msk [vmem:[#allocation3 + $0x168] sm:$0xff] %vm1991, %v3199
          %3248 = vst [vmem:[#allocation3 + $0x170] sm:$0xff] %v3200
          %3249 = vst.msk [vmem:[#allocation3 + $0x178] sm:$0xff] %vm1991, %v3201
        $region44: #{tpu_custom_call.1} parent=35 // pred_fallthru
          _
        // Predicated region
        $region45: #{tpu_custom_call.1} parent=35 // pred_check
          %p3250 = pneg %p152
        $region46: #{tpu_custom_call.1} parent=35 // pred_check_branch
          %3252 = sbr.rel (%p3250) target = $region48
        $region47: #{tpu_custom_call.1} parent=35 // pred_region
          %s3253 = smul.u32 24, %s20
          %3255 = vsyncadd [#allocation4], 0
          %s3256 = smul.addr %s3253, 2
          %s3257 = smul.addr %s3256, 8
          %s3258 = scalar_lea.hbm %s4, %s3257
          %s3259 = sshll.u32 [#allocation3], 4
          %s3260 = int_to_ptr.vmem [resolvable:$true] %s3259
          %s3261 = sshll.u32 %s3258, 4
          %s3262 = int_to_ptr.hbm [resolvable:$true] %s3261
          %3267 = dma.vmem_to_hbm [thread:$0]  %s3260, 6144, %s3262, [#allocation4], 256, 256, 16
        $region48: #{tpu_custom_call.1} parent=35 // pred_fallthru
          _
        // Predicated region
        $region49: #{tpu_custom_call.1} parent=35 // pred_check
          %p3268 = pneg %p152
        $region50: #{tpu_custom_call.1} parent=35 // pred_check_branch
          %3270 = sbr.rel (%p3268) target = $region52
        $region51: #{tpu_custom_call.1} parent=35 // pred_region
          %3272 = dma.done [#allocation4], 6144
        $region52: #{tpu_custom_call.1} parent=35 // pred_fallthru
          _
      $region36: #{tpu_custom_call.1} parent=5 // pred_fallthru
        _
      %p3273 = scmp.le.s32.totalorder 2, %s11
      // Predicated region
      $region53: #{tpu_custom_call.1} parent=5 // pred_check
        %p3274 = pneg %p3273
      $region54: #{tpu_custom_call.1} parent=5 // pred_check_branch
        %3276 = sbr.rel (%p3274) target = $region56
      $region55: #{tpu_custom_call.1} parent=5 // pred_region
        %s3277 = ssub.s32 %s11, 2
      $region56: #{tpu_custom_call.1} parent=5 // pred_fallthru
        _
    $region6: #{tpu_custom_call.1} parent=1 // loop_footer
      %s15 = sadd.s32 1, %s11
    $region7: #{tpu_custom_call.1} parent=1 // loop_footer_branch
      %10 = sbr.rel target = $region3
    $region8: #{tpu_custom_call.1} parent=1 // loop_exit
      _
    %3278 = vsyncpa [#allocation4], 1
    %s3279 = scalar_lea.sflag [#allocation4], 1
    %3280 = vsyncpa %s3279, 1

</llo_original>
